<compile_context>
chip_gen: v7x
topology: tpu7x:2x2x1
jax: 0.10.0
libtpu: 0.0.40
codegen_flags: <defaults>
</compile_context>

<pallas_src>
import math
import functools

import jax
import jax.numpy as jnp
from jax.experimental import pallas as pl
from jax.experimental.pallas import tpu as pltpu  # noqa: F401  (TPU backend)

# ----------------------------- small synthetic config -----------------------
B = 2            # batch
N_VARS = 4       # enc_in (variables)
SEQ_LEN = 32     # T
PRED_LEN = 8
PATCH_LEN = 8
STRIDE = 4
PATCH_NUMS = (SEQ_LEN - PATCH_LEN) // STRIDE + 2          # = 8
D_MODEL = 32
N_HEADS = 4
D_KEYS = D_MODEL // N_HEADS                               # = 8
HE = D_KEYS * N_HEADS                                     # = 32
D_WORD = 256     # stands for the hard-coded 768 (LLM word-embedding dim)
D_HIDDEN = 256   # stands for the hard-coded 768 (LLM hidden dim / forced d_ff)
D_FF = D_HIDDEN
D_LLM = 256      # stands for configs.llm_dim (4096 for LLaMA)
VOCAB = 512      # stands for the LLM vocab size
NUM_TOKENS = 128 # self.num_tokens = 1000 in the reference
HEAD_NF = D_FF * PATCH_NUMS
EPS = 1e-5


# ----------------------------- fused Pallas kernel ---------------------------
def _fused_timellm_kernel(x_ref, wp_ref, wq_ref, bq_ref, kt_ref, v_ref,
                          wod_ref, bod_ref, wh_ref, bh_ref, o_ref,
                          *, n_heads, scale, p_per_series, n_series):
    """One grid step; rows of x_ref are ordered patch-major / series-minor.

    x_ref  : (P*BN, 3*patch_len)  bf16   im2col patches
    wp_ref : (3*patch_len, d_model) bf16 TokenEmbedding circular conv weights
    wq_ref : (H, d_model, E) bf16, bq_ref: (H, 1, E) f32     query projection
    kt_ref : (H, E, S) bf16, v_ref: (H, S, E) bf16           precomputed K^T, V
    wod_ref: (H, E, d_hidden) bf16, bod_ref: (1, d_hidden) f32
             out_projection folded with down_project (split per head)
    wh_ref : (P, d_hidden, pred_len) bf16, bh_ref: (1, pred_len) f32  FlattenHead
    o_ref  : (BN, pred_len) f32
    """
    x = x_ref[...]

    # PatchEmbedding.TokenEmbedding: circular Conv1d(kernel=3) as im2col matmul (no bias).
    enc = jnp.dot(x, wp_ref[...], preferred_element_type=jnp.float32)      # (M, d_model) f32
    enc_bf = enc.astype(jnp.bfloat16)

    m = x.shape[0]
    d_hidden = wod_ref.shape[-1]

    # ReprogrammingLayer + (out_projection o down_project), accumulated per head
    # so no head-concatenate / lane shuffles are needed.
    proj = jnp.zeros((m, d_hidden), jnp.float32)
    for h in range(n_heads):
        q_h = jnp.dot(enc_bf, wq_ref[h],
                      preferred_element_type=jnp.float32) + bq_ref[h]      # (M, E) f32
        scores = jnp.dot(q_h.astype(jnp.bfloat16), kt_ref[h],
                         preferred_element_type=jnp.float32) * scale       # (M, S) f32
        mx = jnp.max(scores, axis=-1, keepdims=True)
        pexp = jnp.exp(scores - mx)
        a = pexp * pl.reciprocal(jnp.sum(pexp, axis=-1, keepdims=True),
                                 approx=True)                              # softmax over S
        # TODO(synk): attention dropout is identity in eval mode.
        attn_h = jnp.dot(a.astype(jnp.bfloat16), v_ref[h],
                         preferred_element_type=jnp.float32)               # (M, E) f32
        proj = proj + jnp.dot(attn_h.astype(jnp.bfloat16), wod_ref[h],
                              preferred_element_type=jnp.float32)          # (M, d_hidden)
    proj = proj + bod_ref[...]        # == down_project(out_projection(attn)) == enc_out_projected

    # TODO(synk): frozen pretrained GPT2/LLaMA forward replaced by identity; with the
    # identity stand-in the concat([prompt_embeddings, patches]) followed by the
    # [..., -patch_nums:] slice selects exactly these patch tokens, so FlattenHead is
    # applied directly here (layout fold: rows are patch-major, series-minor).
    head = jnp.zeros((n_series, o_ref.shape[-1]), jnp.float32)
    for p in range(p_per_series):
        blk = proj[p * n_series:(p + 1) * n_series, :]                     # (BN, d_hidden)
        head = head + jnp.dot(blk.astype(jnp.bfloat16), wh_ref[p],
                              preferred_element_type=jnp.float32)
    o_ref[...] = (head + bh_ref[...]).astype(o_ref.dtype)


def _vmem_spec(arr):
    ndim = arr.ndim
    return pl.BlockSpec(arr.shape, lambda *_: (0,) * ndim)


def _fused_call(derived, x_pm, n_series):
    kernel = functools.partial(
        _fused_timellm_kernel,
        n_heads=N_HEADS,
        scale=1.0 / math.sqrt(D_KEYS),
        p_per_series=PATCH_NUMS,
        n_series=n_series,
    )
    args = (x_pm, derived["w_patch"], derived["w_q3"], derived["b_q3"],
            derived["kT3"], derived["v3"], derived["w_od3"], derived["b_od"],
            derived["w_head3"], derived["b_head"])
    return pl.pallas_call(
        kernel,
        out_shape=jax.ShapeDtypeStruct((n_series, PRED_LEN), jnp.float32),
        grid=(1,),
        in_specs=[_vmem_spec(a) for a in args],
        out_specs=pl.BlockSpec((n_series, PRED_LEN), lambda i: (0, 0)),
    )(*args)


# ----------------------------- glue (plain JAX) -------------------------------
def _normalize(x):
    # Normalize(affine=False) "norm": per-(batch, variable) stats over time (ddof=0).
    means = jnp.mean(x, axis=1, keepdims=True)
    stdev = jnp.sqrt(jnp.var(x, axis=1, keepdims=True) + EPS)
    return (x - means) / stdev, means, stdev


def _build_im2col(x_bnt):
    # ReplicationPad1d((0, stride)) + unfold + circular conv(kernel=3) im2col.
    b, n, t = x_bnt.shape
    pad = jnp.repeat(x_bnt[:, :, -1:], STRIDE, axis=-1)
    xp = jnp.concatenate([x_bnt, pad], axis=-1)                   # (B, N, T+stride)
    num_patches = (t - PATCH_LEN) // STRIDE + 2                   # = PATCH_NUMS
    idx = jnp.arange(num_patches)[:, None] * STRIDE + jnp.arange(PATCH_LEN)[None, :]
    patches = xp[:, :, idx]                                       # (B, N, P, patch_len)
    patches = patches.reshape(b * n, num_patches, PATCH_LEN)
    left = jnp.roll(patches, 1, axis=1)
    right = jnp.roll(patches, -1, axis=1)
    return jnp.concatenate([left, patches, right], axis=-1)       # (B*N, P, 3*patch_len)


def forecast(derived, x_enc):
    b, t, n = x_enc.shape
    x_norm, means, stdev = _normalize(x_enc)

    # TODO(synk): min/max/median/FFT-lag statistics, tokenizer and prompt-embedding
    # lookup only feed the text prompt of the frozen LLM; with the identity-LLM
    # stand-in the prompt tokens are discarded by the final [-patch_nums:] slice,
    # so the prompt path is elided entirely.

    x = jnp.transpose(x_norm, (0, 2, 1))                          # (B, N, T)
    im2col = _build_im2col(x)                                     # (B*N, P, 3*patch_len)
    # patch-major / series-minor row ordering so the in-kernel FlattenHead uses only
    # contiguous, 8-aligned sublane slices (no in-kernel reshape/transpose).
    im2col_pm = jnp.transpose(im2col, (1, 0, 2)).reshape(-1, 3 * PATCH_LEN)
    im2col_pm = im2col_pm.astype(jnp.bfloat16)                    # reference runs bf16 LLM path

    head = _fused_call(derived, im2col_pm, b * n)                 # (B*N, pred_len) f32

    dec_out = jnp.transpose(head.reshape(b, n, PRED_LEN), (0, 2, 1))   # (B, pred_len, N)
    return dec_out * stdev + means                                # Normalize "denorm"


def forward(derived, x_enc, x_mark_enc=None, x_dec=None, x_mark_dec=None, mask=None):
    dec_out = forecast(derived, x_enc)
    return dec_out[:, -PRED_LEN:, :]


# ----------------------------- one-time weight preparation --------------------
def prepare_derived(params):
    """One-time preprocessing of the (inference-frozen) weights; algebraic folds
    are exact up to float rounding.  Done once at load time, not per forward."""
    f32, bf16 = jnp.float32, jnp.bfloat16
    we = params["word_embeddings"]
    w_map, b_map = params["w_map"], params["b_map"]
    w_k, b_k = params["w_k"], params["b_k"]
    w_v, b_v = params["w_v"], params["b_v"]

    # mapping-layer reorder:  K = key_proj(mapping(WE^T).T)
    #   = w_map^T @ (WE @ w_k) + b_map[:,None] * sum_d w_k[d,:] + b_k   (same for V)
    k = (w_map.T @ (we @ w_k)
         + b_map[:, None] * jnp.sum(w_k, axis=0)[None, :] + b_k[None, :])   # (S, HE)
    v = (w_map.T @ (we @ w_v)
         + b_map[:, None] * jnp.sum(w_v, axis=0)[None, :] + b_v[None, :])   # (S, HE)

    # fold out_projection (HE -> d_llm) with down_project (d_llm -> d_hidden)
    w_od = params["w_out"] @ params["w_down"]                               # (HE, D_HIDDEN)
    b_od = params["b_out"] @ params["w_down"] + params["b_down"]            # (D_HIDDEN,)

    H, E, S = N_HEADS, D_KEYS, NUM_TOKENS
    return {
        "w_patch": params["w_patch"].astype(bf16),
        "w_q3": params["w_q"].reshape(D_MODEL, H, E).transpose(1, 0, 2).astype(bf16),
        "b_q3": params["b_q"].reshape(H, 1, E).astype(f32),
        "kT3": k.reshape(S, H, E).transpose(1, 2, 0).astype(bf16),          # (H, E, S)
        "v3": v.reshape(S, H, E).transpose(1, 0, 2).astype(bf16),           # (H, S, E)
        "w_od3": w_od.reshape(H, E, D_HIDDEN).astype(bf16),
        "b_od": b_od.reshape(1, D_HIDDEN).astype(f32),
        # FlattenHead flattens (d_ff, patch_nums) as f*P + p; permute to (p, f, :).
        "w_head3": params["w_head"].reshape(D_FF, PATCH_NUMS, PRED_LEN)
                                   .transpose(1, 0, 2).astype(bf16),
        "b_head": params["b_head"].reshape(1, PRED_LEN).astype(f32),
    }


# ----------------------------- pure-JAX reference (unfused math) --------------
def forward_reference(params, x_enc):
    b, t, n = x_enc.shape
    x_norm, means, stdev = _normalize(x_enc)
    x = jnp.transpose(x_norm, (0, 2, 1))
    im2col = _build_im2col(x)                                     # (B*N, P, 3PL)
    enc = im2col @ params["w_patch"]                              # (B*N, P, d_model)
    src = params["word_embeddings"].T @ params["w_map"] + params["b_map"]
    source = src.T                                                # (S, D_WORD)
    q = enc @ params["w_q"] + params["b_q"]
    k = source @ params["w_k"] + params["b_k"]
    v = source @ params["w_v"] + params["b_v"]
    bn, p_, _ = q.shape
    qh = q.reshape(bn, p_, N_HEADS, D_KEYS)
    kh = k.reshape(-1, N_HEADS, D_KEYS)
    vh = v.reshape(-1, N_HEADS, D_KEYS)
    scores = jnp.einsum("blhe,she->bhls", qh, kh) / math.sqrt(D_KEYS)
    a = jax.nn.softmax(scores, axis=-1)
    attn = jnp.einsum("bhls,she->blhe", a, vh).reshape(bn, p_, HE)
    enc_out = attn @ params["w_out"] + params["b_out"]
    enc_proj = enc_out @ params["w_down"] + params["b_down"]      # (B*N, P, d_hidden)
    # identity LLM: concat(prompt, patches)[..., -patch_nums:] == enc_proj
    dec = jnp.transpose(enc_proj.reshape(b, n, p_, D_FF), (0, 1, 3, 2))
    flat = dec.reshape(b, n, D_FF * p_)
    head = flat @ params["w_head"] + params["b_head"]             # (B, N, pred_len)
    out = jnp.transpose(head, (0, 2, 1)) * stdev + means
    return out[:, -PRED_LEN:, :]


# ----------------------------- deterministic params --------------------------
def init_params(key):
    ks = jax.random.split(key, 16)

    def w(k, shape, scale=0.1):
        return (scale * jax.random.normal(k, shape)).astype(jnp.float32)

    return {
        # TokenEmbedding circular conv (kernel=3) folded into (3*patch_len, d_model)
        "w_patch": w(ks[0], (3 * PATCH_LEN, D_MODEL)),
        # frozen LLM word embeddings + mapping layer
        "word_embeddings": w(ks[1], (VOCAB, D_WORD)),
        "w_map": w(ks[2], (VOCAB, NUM_TOKENS)), "b_map": w(ks[3], (NUM_TOKENS,)),
        # ReprogrammingLayer
        "w_q": w(ks[4], (D_MODEL, HE)), "b_q": w(ks[5], (HE,)),
        "w_k": w(ks[6], (D_WORD, HE)), "b_k": w(ks[7], (HE,)),
        "w_v": w(ks[8], (D_WORD, HE)), "b_v": w(ks[9], (HE,)),
        "w_out": w(ks[10], (HE, D_LLM)), "b_out": w(ks[11], (D_LLM,)),
        # down_project (d_llm -> LLM hidden)
        "w_down": w(ks[12], (D_LLM, D_HIDDEN)), "b_down": w(ks[13], (D_HIDDEN,)),
        # FlattenHead
        "w_head": w(ks[14], (HEAD_NF, PRED_LEN)), "b_head": w(ks[15], (PRED_LEN,)),
    }


if __name__ == "__main__":
    key = jax.random.PRNGKey(0)
    k_x, k_p = jax.random.split(key)
    params = init_params(k_p)
    derived = prepare_derived(params)       # one-time frozen-weight folds

    x_enc = jax.random.normal(k_x, (B, SEQ_LEN, N_VARS), dtype=jnp.float32)
    x_mark_enc = jnp.zeros((B, SEQ_LEN, 4), jnp.float32)   # unused by forecast path
    x_dec = jnp.zeros((B, PRED_LEN, N_VARS), jnp.float32)  # unused
    x_mark_dec = jnp.zeros((B, PRED_LEN, 4), jnp.float32)  # unused

    out = jax.jit(forward)(derived, x_enc, x_mark_enc, x_dec, x_mark_dec)
    out = jax.block_until_ready(out)
    assert out.shape == (B, PRED_LEN, N_VARS), out.shape
    assert bool(jnp.all(jnp.isfinite(out)))

    # validate the fused bf16 kernel against the unfused f32 math
    ref = jax.block_until_ready(forward_reference(params, x_enc))
    err = float(jnp.max(jnp.abs(out - ref)))
    tol = 0.1 + 0.05 * float(jnp.max(jnp.abs(ref)))
    assert err < tol, (err, tol)

    print("KERNEL_OK")
</pallas_src>

<mosaic_0001>
module attributes {stable_mosaic.version = 11 : i64} {
  func.func @_fused_timellm_kernel(%arg0: i32, %arg1: memref<64x24xbf16, #tpu.memory_space<vmem>>, %arg2: memref<24x32xbf16, #tpu.memory_space<vmem>>, %arg3: memref<4x32x8xbf16, #tpu.memory_space<vmem>>, %arg4: memref<4x1x8xf32, #tpu.memory_space<vmem>>, %arg5: memref<4x8x128xbf16, #tpu.memory_space<vmem>>, %arg6: memref<4x128x8xbf16, #tpu.memory_space<vmem>>, %arg7: memref<4x8x256xbf16, #tpu.memory_space<vmem>>, %arg8: memref<1x256xf32, #tpu.memory_space<vmem>>, %arg9: memref<8x256x8xbf16, #tpu.memory_space<vmem>>, %arg10: memref<1x8xf32, #tpu.memory_space<vmem>>, %arg11: memref<8x8xf32, #tpu.memory_space<vmem>>) attributes {dimension_semantics = [#tpu.dimension_semantics<arbitrary>], iteration_bounds = array<i64: 1>, scalar_prefetch = 0 : i64, scratch_operands = 0 : i64, tpu.core_type = #tpu.core_type<tc>, window_params = [{pipeline_mode = #tpu.pipeline_mode<synchronous>, transform_indices = @transform_0, window_bounds = array<i64: 64, 24>}, {pipeline_mode = #tpu.pipeline_mode<synchronous>, transform_indices = @transform_1, window_bounds = array<i64: 24, 32>}, {pipeline_mode = #tpu.pipeline_mode<synchronous>, transform_indices = @transform_2, window_bounds = array<i64: 4, 32, 8>}, {pipeline_mode = #tpu.pipeline_mode<synchronous>, transform_indices = @transform_3, window_bounds = array<i64: 4, 1, 8>}, {pipeline_mode = #tpu.pipeline_mode<synchronous>, transform_indices = @transform_4, window_bounds = array<i64: 4, 8, 128>}, {pipeline_mode = #tpu.pipeline_mode<synchronous>, transform_indices = @transform_5, window_bounds = array<i64: 4, 128, 8>}, {pipeline_mode = #tpu.pipeline_mode<synchronous>, transform_indices = @transform_6, window_bounds = array<i64: 4, 8, 256>}, {pipeline_mode = #tpu.pipeline_mode<synchronous>, transform_indices = @transform_7, window_bounds = array<i64: 1, 256>}, {pipeline_mode = #tpu.pipeline_mode<synchronous>, transform_indices = @transform_8, window_bounds = array<i64: 8, 256, 8>}, {pipeline_mode = #tpu.pipeline_mode<synchronous>, transform_indices = @transform_9, window_bounds = array<i64: 1, 8>}, {pipeline_mode = #tpu.pipeline_mode<synchronous>, transform_indices = @transform_10, window_bounds = array<i64: 8, 8>}]} {
    %c0 = arith.constant 0 : index
    %c0_0 = arith.constant 0 : index
    %0 = vector.load %arg1[%c0, %c0_0] : memref<64x24xbf16, #tpu.memory_space<vmem>>, vector<64x24xbf16>
    %c0_1 = arith.constant 0 : index
    %c0_2 = arith.constant 0 : index
    %1 = vector.load %arg2[%c0_1, %c0_2] : memref<24x32xbf16, #tpu.memory_space<vmem>>, vector<24x32xbf16>
    %cst = arith.constant dense<0.000000e+00> : vector<64x32xf32>
    %2 = tpu.matmul %0, %1, %cst {dimension_numbers = #tpu.dot_dimension_numbers<[1], [0], [0], [1], [0, 0, 1, 1], [], []>} : vector<64x24xbf16>, vector<24x32xbf16>, vector<64x32xf32> -> vector<64x32xf32>
    %3 = arith.truncf %2 : vector<64x32xf32> to vector<64x32xbf16>
    %cst_3 = arith.constant 0.000000e+00 : f32
    %4 = vector.broadcast %cst_3 : f32 to vector<64x256xf32>
    %c0_4 = arith.constant 0 : index
    %c0_5 = arith.constant 0 : index
    %c0_6 = arith.constant 0 : index
    %5 = vector.load %arg3[%c0_4, %c0_5, %c0_6] : memref<4x32x8xbf16, #tpu.memory_space<vmem>>, vector<1x32x8xbf16>
    %6 = vector.shape_cast %5 : vector<1x32x8xbf16> to vector<32x8xbf16>
    %cst_7 = arith.constant dense<0.000000e+00> : vector<64x8xf32>
    %7 = tpu.matmul %3, %6, %cst_7 {dimension_numbers = #tpu.dot_dimension_numbers<[1], [0], [0], [1], [0, 0, 1, 1], [], []>} : vector<64x32xbf16>, vector<32x8xbf16>, vector<64x8xf32> -> vector<64x8xf32>
    %c0_8 = arith.constant 0 : index
    %c0_9 = arith.constant 0 : index
    %c0_10 = arith.constant 0 : index
    %8 = vector.load %arg4[%c0_8, %c0_9, %c0_10] : memref<4x1x8xf32, #tpu.memory_space<vmem>>, vector<1x1x8xf32>
    %9 = vector.shape_cast %8 : vector<1x1x8xf32> to vector<1x8xf32>
    %10 = vector.broadcast %9 : vector<1x8xf32> to vector<64x8xf32>
    %11 = arith.addf %7, %10 : vector<64x8xf32>
    %12 = arith.truncf %11 : vector<64x8xf32> to vector<64x8xbf16>
    %c0_11 = arith.constant 0 : index
    %c0_12 = arith.constant 0 : index
    %c0_13 = arith.constant 0 : index
    %13 = vector.load %arg5[%c0_11, %c0_12, %c0_13] : memref<4x8x128xbf16, #tpu.memory_space<vmem>>, vector<1x8x128xbf16>
    %14 = vector.shape_cast %13 : vector<1x8x128xbf16> to vector<8x128xbf16>
    %cst_14 = arith.constant dense<0.000000e+00> : vector<64x128xf32>
    %15 = tpu.matmul %12, %14, %cst_14 {dimension_numbers = #tpu.dot_dimension_numbers<[1], [0], [0], [1], [0, 0, 1, 1], [], []>} : vector<64x8xbf16>, vector<8x128xbf16>, vector<64x128xf32> -> vector<64x128xf32>
    %cst_15 = arith.constant 0.353553385 : f32
    %16 = vector.broadcast %cst_15 : f32 to vector<64x128xf32>
    %17 = arith.mulf %15, %16 : vector<64x128xf32>
    %cst_16 = arith.constant dense<0xFF800000> : vector<64xf32>
    %18 = vector.multi_reduction <maximumf>, %17, %cst_16 [1] : vector<64x128xf32> to vector<64xf32>
    %19 = vector.shape_cast %18 : vector<64xf32> to vector<64x1xf32>
    %20 = vector.broadcast %19 : vector<64x1xf32> to vector<64x128xf32>
    %21 = arith.subf %17, %20 : vector<64x128xf32>
    %22 = math.exp %21 : vector<64x128xf32>
    %cst_17 = arith.constant dense<0.000000e+00> : vector<64xf32>
    %23 = vector.multi_reduction <add>, %22, %cst_17 [1] : vector<64x128xf32> to vector<64xf32>
    %24 = vector.shape_cast %23 : vector<64xf32> to vector<64x1xf32>
    %25 = tpu.reciprocal %24 {approx = true} : vector<64x1xf32> -> vector<64x1xf32>
    %26 = vector.broadcast %25 : vector<64x1xf32> to vector<64x128xf32>
    %27 = arith.mulf %22, %26 : vector<64x128xf32>
    %28 = arith.truncf %27 : vector<64x128xf32> to vector<64x128xbf16>
    %c0_18 = arith.constant 0 : index
    %c0_19 = arith.constant 0 : index
    %c0_20 = arith.constant 0 : index
    %29 = vector.load %arg6[%c0_18, %c0_19, %c0_20] : memref<4x128x8xbf16, #tpu.memory_space<vmem>>, vector<1x128x8xbf16>
    %30 = vector.shape_cast %29 : vector<1x128x8xbf16> to vector<128x8xbf16>
    %cst_21 = arith.constant dense<0.000000e+00> : vector<64x8xf32>
    %31 = tpu.matmul %28, %30, %cst_21 {dimension_numbers = #tpu.dot_dimension_numbers<[1], [0], [0], [1], [0, 0, 1, 1], [], []>} : vector<64x128xbf16>, vector<128x8xbf16>, vector<64x8xf32> -> vector<64x8xf32>
    %32 = arith.truncf %31 : vector<64x8xf32> to vector<64x8xbf16>
    %c0_22 = arith.constant 0 : index
    %c0_23 = arith.constant 0 : index
    %c0_24 = arith.constant 0 : index
    %33 = vector.load %arg7[%c0_22, %c0_23, %c0_24] : memref<4x8x256xbf16, #tpu.memory_space<vmem>>, vector<1x8x256xbf16>
    %34 = vector.shape_cast %33 : vector<1x8x256xbf16> to vector<8x256xbf16>
    %cst_25 = arith.constant dense<0.000000e+00> : vector<64x256xf32>
    %35 = tpu.matmul %32, %34, %cst_25 {dimension_numbers = #tpu.dot_dimension_numbers<[1], [0], [0], [1], [0, 0, 1, 1], [], []>} : vector<64x8xbf16>, vector<8x256xbf16>, vector<64x256xf32> -> vector<64x256xf32>
    %36 = arith.addf %4, %35 : vector<64x256xf32>
    %c1 = arith.constant 1 : index
    %c0_26 = arith.constant 0 : index
    %c0_27 = arith.constant 0 : index
    %37 = vector.load %arg3[%c1, %c0_26, %c0_27] : memref<4x32x8xbf16, #tpu.memory_space<vmem>>, vector<1x32x8xbf16>
    %38 = vector.shape_cast %37 : vector<1x32x8xbf16> to vector<32x8xbf16>
    %cst_28 = arith.constant dense<0.000000e+00> : vector<64x8xf32>
    %39 = tpu.matmul %3, %38, %cst_28 {dimension_numbers = #tpu.dot_dimension_numbers<[1], [0], [0], [1], [0, 0, 1, 1], [], []>} : vector<64x32xbf16>, vector<32x8xbf16>, vector<64x8xf32> -> vector<64x8xf32>
    %c1_29 = arith.constant 1 : index
    %c0_30 = arith.constant 0 : index
    %c0_31 = arith.constant 0 : index
    %40 = vector.load %arg4[%c1_29, %c0_30, %c0_31] : memref<4x1x8xf32, #tpu.memory_space<vmem>>, vector<1x1x8xf32>
    %41 = vector.shape_cast %40 : vector<1x1x8xf32> to vector<1x8xf32>
    %42 = vector.broadcast %41 : vector<1x8xf32> to vector<64x8xf32>
    %43 = arith.addf %39, %42 : vector<64x8xf32>
    %44 = arith.truncf %43 : vector<64x8xf32> to vector<64x8xbf16>
    %c1_32 = arith.constant 1 : index
    %c0_33 = arith.constant 0 : index
    %c0_34 = arith.constant 0 : index
    %45 = vector.load %arg5[%c1_32, %c0_33, %c0_34] : memref<4x8x128xbf16, #tpu.memory_space<vmem>>, vector<1x8x128xbf16>
    %46 = vector.shape_cast %45 : vector<1x8x128xbf16> to vector<8x128xbf16>
    %cst_35 = arith.constant dense<0.000000e+00> : vector<64x128xf32>
    %47 = tpu.matmul %44, %46, %cst_35 {dimension_numbers = #tpu.dot_dimension_numbers<[1], [0], [0], [1], [0, 0, 1, 1], [], []>} : vector<64x8xbf16>, vector<8x128xbf16>, vector<64x128xf32> -> vector<64x128xf32>
    %cst_36 = arith.constant 0.353553385 : f32
    %48 = vector.broadcast %cst_36 : f32 to vector<64x128xf32>
    %49 = arith.mulf %47, %48 : vector<64x128xf32>
    %cst_37 = arith.constant dense<0xFF800000> : vector<64xf32>
    %50 = vector.multi_reduction <maximumf>, %49, %cst_37 [1] : vector<64x128xf32> to vector<64xf32>
    %51 = vector.shape_cast %50 : vector<64xf32> to vector<64x1xf32>
    %52 = vector.broadcast %51 : vector<64x1xf32> to vector<64x128xf32>
    %53 = arith.subf %49, %52 : vector<64x128xf32>
    %54 = math.exp %53 : vector<64x128xf32>
    %cst_38 = arith.constant dense<0.000000e+00> : vector<64xf32>
    %55 = vector.multi_reduction <add>, %54, %cst_38 [1] : vector<64x128xf32> to vector<64xf32>
    %56 = vector.shape_cast %55 : vector<64xf32> to vector<64x1xf32>
    %57 = tpu.reciprocal %56 {approx = true} : vector<64x1xf32> -> vector<64x1xf32>
    %58 = vector.broadcast %57 : vector<64x1xf32> to vector<64x128xf32>
    %59 = arith.mulf %54, %58 : vector<64x128xf32>
    %60 = arith.truncf %59 : vector<64x128xf32> to vector<64x128xbf16>
    %c1_39 = arith.constant 1 : index
    %c0_40 = arith.constant 0 : index
    %c0_41 = arith.constant 0 : index
    %61 = vector.load %arg6[%c1_39, %c0_40, %c0_41] : memref<4x128x8xbf16, #tpu.memory_space<vmem>>, vector<1x128x8xbf16>
    %62 = vector.shape_cast %61 : vector<1x128x8xbf16> to vector<128x8xbf16>
    %cst_42 = arith.constant dense<0.000000e+00> : vector<64x8xf32>
    %63 = tpu.matmul %60, %62, %cst_42 {dimension_numbers = #tpu.dot_dimension_numbers<[1], [0], [0], [1], [0, 0, 1, 1], [], []>} : vector<64x128xbf16>, vector<128x8xbf16>, vector<64x8xf32> -> vector<64x8xf32>
    %64 = arith.truncf %63 : vector<64x8xf32> to vector<64x8xbf16>
    %c1_43 = arith.constant 1 : index
    %c0_44 = arith.constant 0 : index
    %c0_45 = arith.constant 0 : index
    %65 = vector.load %arg7[%c1_43, %c0_44, %c0_45] : memref<4x8x256xbf16, #tpu.memory_space<vmem>>, vector<1x8x256xbf16>
    %66 = vector.shape_cast %65 : vector<1x8x256xbf16> to vector<8x256xbf16>
    %cst_46 = arith.constant dense<0.000000e+00> : vector<64x256xf32>
    %67 = tpu.matmul %64, %66, %cst_46 {dimension_numbers = #tpu.dot_dimension_numbers<[1], [0], [0], [1], [0, 0, 1, 1], [], []>} : vector<64x8xbf16>, vector<8x256xbf16>, vector<64x256xf32> -> vector<64x256xf32>
    %68 = arith.addf %36, %67 : vector<64x256xf32>
    %c2 = arith.constant 2 : index
    %c0_47 = arith.constant 0 : index
    %c0_48 = arith.constant 0 : index
    %69 = vector.load %arg3[%c2, %c0_47, %c0_48] : memref<4x32x8xbf16, #tpu.memory_space<vmem>>, vector<1x32x8xbf16>
    %70 = vector.shape_cast %69 : vector<1x32x8xbf16> to vector<32x8xbf16>
    %cst_49 = arith.constant dense<0.000000e+00> : vector<64x8xf32>
    %71 = tpu.matmul %3, %70, %cst_49 {dimension_numbers = #tpu.dot_dimension_numbers<[1], [0], [0], [1], [0, 0, 1, 1], [], []>} : vector<64x32xbf16>, vector<32x8xbf16>, vector<64x8xf32> -> vector<64x8xf32>
    %c2_50 = arith.constant 2 : index
    %c0_51 = arith.constant 0 : index
    %c0_52 = arith.constant 0 : index
    %72 = vector.load %arg4[%c2_50, %c0_51, %c0_52] : memref<4x1x8xf32, #tpu.memory_space<vmem>>, vector<1x1x8xf32>
    %73 = vector.shape_cast %72 : vector<1x1x8xf32> to vector<1x8xf32>
    %74 = vector.broadcast %73 : vector<1x8xf32> to vector<64x8xf32>
    %75 = arith.addf %71, %74 : vector<64x8xf32>
    %76 = arith.truncf %75 : vector<64x8xf32> to vector<64x8xbf16>
    %c2_53 = arith.constant 2 : index
    %c0_54 = arith.constant 0 : index
    %c0_55 = arith.constant 0 : index
    %77 = vector.load %arg5[%c2_53, %c0_54, %c0_55] : memref<4x8x128xbf16, #tpu.memory_space<vmem>>, vector<1x8x128xbf16>
    %78 = vector.shape_cast %77 : vector<1x8x128xbf16> to vector<8x128xbf16>
    %cst_56 = arith.constant dense<0.000000e+00> : vector<64x128xf32>
    %79 = tpu.matmul %76, %78, %cst_56 {dimension_numbers = #tpu.dot_dimension_numbers<[1], [0], [0], [1], [0, 0, 1, 1], [], []>} : vector<64x8xbf16>, vector<8x128xbf16>, vector<64x128xf32> -> vector<64x128xf32>
    %cst_57 = arith.constant 0.353553385 : f32
    %80 = vector.broadcast %cst_57 : f32 to vector<64x128xf32>
    %81 = arith.mulf %79, %80 : vector<64x128xf32>
    %cst_58 = arith.constant dense<0xFF800000> : vector<64xf32>
    %82 = vector.multi_reduction <maximumf>, %81, %cst_58 [1] : vector<64x128xf32> to vector<64xf32>
    %83 = vector.shape_cast %82 : vector<64xf32> to vector<64x1xf32>
    %84 = vector.broadcast %83 : vector<64x1xf32> to vector<64x128xf32>
    %85 = arith.subf %81, %84 : vector<64x128xf32>
    %86 = math.exp %85 : vector<64x128xf32>
    %cst_59 = arith.constant dense<0.000000e+00> : vector<64xf32>
    %87 = vector.multi_reduction <add>, %86, %cst_59 [1] : vector<64x128xf32> to vector<64xf32>
    %88 = vector.shape_cast %87 : vector<64xf32> to vector<64x1xf32>
    %89 = tpu.reciprocal %88 {approx = true} : vector<64x1xf32> -> vector<64x1xf32>
    %90 = vector.broadcast %89 : vector<64x1xf32> to vector<64x128xf32>
    %91 = arith.mulf %86, %90 : vector<64x128xf32>
    %92 = arith.truncf %91 : vector<64x128xf32> to vector<64x128xbf16>
    %c2_60 = arith.constant 2 : index
    %c0_61 = arith.constant 0 : index
    %c0_62 = arith.constant 0 : index
    %93 = vector.load %arg6[%c2_60, %c0_61, %c0_62] : memref<4x128x8xbf16, #tpu.memory_space<vmem>>, vector<1x128x8xbf16>
    %94 = vector.shape_cast %93 : vector<1x128x8xbf16> to vector<128x8xbf16>
    %cst_63 = arith.constant dense<0.000000e+00> : vector<64x8xf32>
    %95 = tpu.matmul %92, %94, %cst_63 {dimension_numbers = #tpu.dot_dimension_numbers<[1], [0], [0], [1], [0, 0, 1, 1], [], []>} : vector<64x128xbf16>, vector<128x8xbf16>, vector<64x8xf32> -> vector<64x8xf32>
    %96 = arith.truncf %95 : vector<64x8xf32> to vector<64x8xbf16>
    %c2_64 = arith.constant 2 : index
    %c0_65 = arith.constant 0 : index
    %c0_66 = arith.constant 0 : index
    %97 = vector.load %arg7[%c2_64, %c0_65, %c0_66] : memref<4x8x256xbf16, #tpu.memory_space<vmem>>, vector<1x8x256xbf16>
    %98 = vector.shape_cast %97 : vector<1x8x256xbf16> to vector<8x256xbf16>
    %cst_67 = arith.constant dense<0.000000e+00> : vector<64x256xf32>
    %99 = tpu.matmul %96, %98, %cst_67 {dimension_numbers = #tpu.dot_dimension_numbers<[1], [0], [0], [1], [0, 0, 1, 1], [], []>} : vector<64x8xbf16>, vector<8x256xbf16>, vector<64x256xf32> -> vector<64x256xf32>
    %100 = arith.addf %68, %99 : vector<64x256xf32>
    %c3 = arith.constant 3 : index
    %c0_68 = arith.constant 0 : index
    %c0_69 = arith.constant 0 : index
    %101 = vector.load %arg3[%c3, %c0_68, %c0_69] : memref<4x32x8xbf16, #tpu.memory_space<vmem>>, vector<1x32x8xbf16>
    %102 = vector.shape_cast %101 : vector<1x32x8xbf16> to vector<32x8xbf16>
    %cst_70 = arith.constant dense<0.000000e+00> : vector<64x8xf32>
    %103 = tpu.matmul %3, %102, %cst_70 {dimension_numbers = #tpu.dot_dimension_numbers<[1], [0], [0], [1], [0, 0, 1, 1], [], []>} : vector<64x32xbf16>, vector<32x8xbf16>, vector<64x8xf32> -> vector<64x8xf32>
    %c3_71 = arith.constant 3 : index
    %c0_72 = arith.constant 0 : index
    %c0_73 = arith.constant 0 : index
    %104 = vector.load %arg4[%c3_71, %c0_72, %c0_73] : memref<4x1x8xf32, #tpu.memory_space<vmem>>, vector<1x1x8xf32>
    %105 = vector.shape_cast %104 : vector<1x1x8xf32> to vector<1x8xf32>
    %106 = vector.broadcast %105 : vector<1x8xf32> to vector<64x8xf32>
    %107 = arith.addf %103, %106 : vector<64x8xf32>
    %108 = arith.truncf %107 : vector<64x8xf32> to vector<64x8xbf16>
    %c3_74 = arith.constant 3 : index
    %c0_75 = arith.constant 0 : index
    %c0_76 = arith.constant 0 : index
    %109 = vector.load %arg5[%c3_74, %c0_75, %c0_76] : memref<4x8x128xbf16, #tpu.memory_space<vmem>>, vector<1x8x128xbf16>
    %110 = vector.shape_cast %109 : vector<1x8x128xbf16> to vector<8x128xbf16>
    %cst_77 = arith.constant dense<0.000000e+00> : vector<64x128xf32>
    %111 = tpu.matmul %108, %110, %cst_77 {dimension_numbers = #tpu.dot_dimension_numbers<[1], [0], [0], [1], [0, 0, 1, 1], [], []>} : vector<64x8xbf16>, vector<8x128xbf16>, vector<64x128xf32> -> vector<64x128xf32>
    %cst_78 = arith.constant 0.353553385 : f32
    %112 = vector.broadcast %cst_78 : f32 to vector<64x128xf32>
    %113 = arith.mulf %111, %112 : vector<64x128xf32>
    %cst_79 = arith.constant dense<0xFF800000> : vector<64xf32>
    %114 = vector.multi_reduction <maximumf>, %113, %cst_79 [1] : vector<64x128xf32> to vector<64xf32>
    %115 = vector.shape_cast %114 : vector<64xf32> to vector<64x1xf32>
    %116 = vector.broadcast %115 : vector<64x1xf32> to vector<64x128xf32>
    %117 = arith.subf %113, %116 : vector<64x128xf32>
    %118 = math.exp %117 : vector<64x128xf32>
    %cst_80 = arith.constant dense<0.000000e+00> : vector<64xf32>
    %119 = vector.multi_reduction <add>, %118, %cst_80 [1] : vector<64x128xf32> to vector<64xf32>
    %120 = vector.shape_cast %119 : vector<64xf32> to vector<64x1xf32>
    %121 = tpu.reciprocal %120 {approx = true} : vector<64x1xf32> -> vector<64x1xf32>
    %122 = vector.broadcast %121 : vector<64x1xf32> to vector<64x128xf32>
    %123 = arith.mulf %118, %122 : vector<64x128xf32>
    %124 = arith.truncf %123 : vector<64x128xf32> to vector<64x128xbf16>
    %c3_81 = arith.constant 3 : index
    %c0_82 = arith.constant 0 : index
    %c0_83 = arith.constant 0 : index
    %125 = vector.load %arg6[%c3_81, %c0_82, %c0_83] : memref<4x128x8xbf16, #tpu.memory_space<vmem>>, vector<1x128x8xbf16>
    %126 = vector.shape_cast %125 : vector<1x128x8xbf16> to vector<128x8xbf16>
    %cst_84 = arith.constant dense<0.000000e+00> : vector<64x8xf32>
    %127 = tpu.matmul %124, %126, %cst_84 {dimension_numbers = #tpu.dot_dimension_numbers<[1], [0], [0], [1], [0, 0, 1, 1], [], []>} : vector<64x128xbf16>, vector<128x8xbf16>, vector<64x8xf32> -> vector<64x8xf32>
    %128 = arith.truncf %127 : vector<64x8xf32> to vector<64x8xbf16>
    %c3_85 = arith.constant 3 : index
    %c0_86 = arith.constant 0 : index
    %c0_87 = arith.constant 0 : index
    %129 = vector.load %arg7[%c3_85, %c0_86, %c0_87] : memref<4x8x256xbf16, #tpu.memory_space<vmem>>, vector<1x8x256xbf16>
    %130 = vector.shape_cast %129 : vector<1x8x256xbf16> to vector<8x256xbf16>
    %cst_88 = arith.constant dense<0.000000e+00> : vector<64x256xf32>
    %131 = tpu.matmul %128, %130, %cst_88 {dimension_numbers = #tpu.dot_dimension_numbers<[1], [0], [0], [1], [0, 0, 1, 1], [], []>} : vector<64x8xbf16>, vector<8x256xbf16>, vector<64x256xf32> -> vector<64x256xf32>
    %132 = arith.addf %100, %131 : vector<64x256xf32>
    %c0_89 = arith.constant 0 : index
    %c0_90 = arith.constant 0 : index
    %133 = vector.load %arg8[%c0_89, %c0_90] : memref<1x256xf32, #tpu.memory_space<vmem>>, vector<1x256xf32>
    %134 = vector.broadcast %133 : vector<1x256xf32> to vector<64x256xf32>
    %135 = arith.addf %132, %134 : vector<64x256xf32>
    %cst_91 = arith.constant 0.000000e+00 : f32
    %136 = vector.broadcast %cst_91 : f32 to vector<8x8xf32>
    %137 = vector.extract_strided_slice %135 {offsets = [0, 0], sizes = [8, 256], strides = [1, 1]} : vector<64x256xf32> to vector<8x256xf32>
    %138 = arith.truncf %137 : vector<8x256xf32> to vector<8x256xbf16>
    %c0_92 = arith.constant 0 : index
    %c0_93 = arith.constant 0 : index
    %c0_94 = arith.constant 0 : index
    %139 = vector.load %arg9[%c0_92, %c0_93, %c0_94] : memref<8x256x8xbf16, #tpu.memory_space<vmem>>, vector<1x256x8xbf16>
    %140 = vector.shape_cast %139 : vector<1x256x8xbf16> to vector<256x8xbf16>
    %cst_95 = arith.constant dense<0.000000e+00> : vector<8x8xf32>
    %141 = tpu.matmul %138, %140, %cst_95 {dimension_numbers = #tpu.dot_dimension_numbers<[1], [0], [0], [1], [0, 0, 1, 1], [], []>} : vector<8x256xbf16>, vector<256x8xbf16>, vector<8x8xf32> -> vector<8x8xf32>
    %142 = arith.addf %136, %141 : vector<8x8xf32>
    %143 = vector.extract_strided_slice %135 {offsets = [8, 0], sizes = [8, 256], strides = [1, 1]} : vector<64x256xf32> to vector<8x256xf32>
    %144 = arith.truncf %143 : vector<8x256xf32> to vector<8x256xbf16>
    %c1_96 = arith.constant 1 : index
    %c0_97 = arith.constant 0 : index
    %c0_98 = arith.constant 0 : index
    %145 = vector.load %arg9[%c1_96, %c0_97, %c0_98] : memref<8x256x8xbf16, #tpu.memory_space<vmem>>, vector<1x256x8xbf16>
    %146 = vector.shape_cast %145 : vector<1x256x8xbf16> to vector<256x8xbf16>
    %cst_99 = arith.constant dense<0.000000e+00> : vector<8x8xf32>
    %147 = tpu.matmul %144, %146, %cst_99 {dimension_numbers = #tpu.dot_dimension_numbers<[1], [0], [0], [1], [0, 0, 1, 1], [], []>} : vector<8x256xbf16>, vector<256x8xbf16>, vector<8x8xf32> -> vector<8x8xf32>
    %148 = arith.addf %142, %147 : vector<8x8xf32>
    %149 = vector.extract_strided_slice %135 {offsets = [16, 0], sizes = [8, 256], strides = [1, 1]} : vector<64x256xf32> to vector<8x256xf32>
    %150 = arith.truncf %149 : vector<8x256xf32> to vector<8x256xbf16>
    %c2_100 = arith.constant 2 : index
    %c0_101 = arith.constant 0 : index
    %c0_102 = arith.constant 0 : index
    %151 = vector.load %arg9[%c2_100, %c0_101, %c0_102] : memref<8x256x8xbf16, #tpu.memory_space<vmem>>, vector<1x256x8xbf16>
    %152 = vector.shape_cast %151 : vector<1x256x8xbf16> to vector<256x8xbf16>
    %cst_103 = arith.constant dense<0.000000e+00> : vector<8x8xf32>
    %153 = tpu.matmul %150, %152, %cst_103 {dimension_numbers = #tpu.dot_dimension_numbers<[1], [0], [0], [1], [0, 0, 1, 1], [], []>} : vector<8x256xbf16>, vector<256x8xbf16>, vector<8x8xf32> -> vector<8x8xf32>
    %154 = arith.addf %148, %153 : vector<8x8xf32>
    %155 = vector.extract_strided_slice %135 {offsets = [24, 0], sizes = [8, 256], strides = [1, 1]} : vector<64x256xf32> to vector<8x256xf32>
    %156 = arith.truncf %155 : vector<8x256xf32> to vector<8x256xbf16>
    %c3_104 = arith.constant 3 : index
    %c0_105 = arith.constant 0 : index
    %c0_106 = arith.constant 0 : index
    %157 = vector.load %arg9[%c3_104, %c0_105, %c0_106] : memref<8x256x8xbf16, #tpu.memory_space<vmem>>, vector<1x256x8xbf16>
    %158 = vector.shape_cast %157 : vector<1x256x8xbf16> to vector<256x8xbf16>
    %cst_107 = arith.constant dense<0.000000e+00> : vector<8x8xf32>
    %159 = tpu.matmul %156, %158, %cst_107 {dimension_numbers = #tpu.dot_dimension_numbers<[1], [0], [0], [1], [0, 0, 1, 1], [], []>} : vector<8x256xbf16>, vector<256x8xbf16>, vector<8x8xf32> -> vector<8x8xf32>
    %160 = arith.addf %154, %159 : vector<8x8xf32>
    %161 = vector.extract_strided_slice %135 {offsets = [32, 0], sizes = [8, 256], strides = [1, 1]} : vector<64x256xf32> to vector<8x256xf32>
    %162 = arith.truncf %161 : vector<8x256xf32> to vector<8x256xbf16>
    %c4 = arith.constant 4 : index
    %c0_108 = arith.constant 0 : index
    %c0_109 = arith.constant 0 : index
    %163 = vector.load %arg9[%c4, %c0_108, %c0_109] : memref<8x256x8xbf16, #tpu.memory_space<vmem>>, vector<1x256x8xbf16>
    %164 = vector.shape_cast %163 : vector<1x256x8xbf16> to vector<256x8xbf16>
    %cst_110 = arith.constant dense<0.000000e+00> : vector<8x8xf32>
    %165 = tpu.matmul %162, %164, %cst_110 {dimension_numbers = #tpu.dot_dimension_numbers<[1], [0], [0], [1], [0, 0, 1, 1], [], []>} : vector<8x256xbf16>, vector<256x8xbf16>, vector<8x8xf32> -> vector<8x8xf32>
    %166 = arith.addf %160, %165 : vector<8x8xf32>
    %167 = vector.extract_strided_slice %135 {offsets = [40, 0], sizes = [8, 256], strides = [1, 1]} : vector<64x256xf32> to vector<8x256xf32>
    %168 = arith.truncf %167 : vector<8x256xf32> to vector<8x256xbf16>
    %c5 = arith.constant 5 : index
    %c0_111 = arith.constant 0 : index
    %c0_112 = arith.constant 0 : index
    %169 = vector.load %arg9[%c5, %c0_111, %c0_112] : memref<8x256x8xbf16, #tpu.memory_space<vmem>>, vector<1x256x8xbf16>
    %170 = vector.shape_cast %169 : vector<1x256x8xbf16> to vector<256x8xbf16>
    %cst_113 = arith.constant dense<0.000000e+00> : vector<8x8xf32>
    %171 = tpu.matmul %168, %170, %cst_113 {dimension_numbers = #tpu.dot_dimension_numbers<[1], [0], [0], [1], [0, 0, 1, 1], [], []>} : vector<8x256xbf16>, vector<256x8xbf16>, vector<8x8xf32> -> vector<8x8xf32>
    %172 = arith.addf %166, %171 : vector<8x8xf32>
    %173 = vector.extract_strided_slice %135 {offsets = [48, 0], sizes = [8, 256], strides = [1, 1]} : vector<64x256xf32> to vector<8x256xf32>
    %174 = arith.truncf %173 : vector<8x256xf32> to vector<8x256xbf16>
    %c6 = arith.constant 6 : index
    %c0_114 = arith.constant 0 : index
    %c0_115 = arith.constant 0 : index
    %175 = vector.load %arg9[%c6, %c0_114, %c0_115] : memref<8x256x8xbf16, #tpu.memory_space<vmem>>, vector<1x256x8xbf16>
    %176 = vector.shape_cast %175 : vector<1x256x8xbf16> to vector<256x8xbf16>
    %cst_116 = arith.constant dense<0.000000e+00> : vector<8x8xf32>
    %177 = tpu.matmul %174, %176, %cst_116 {dimension_numbers = #tpu.dot_dimension_numbers<[1], [0], [0], [1], [0, 0, 1, 1], [], []>} : vector<8x256xbf16>, vector<256x8xbf16>, vector<8x8xf32> -> vector<8x8xf32>
    %178 = arith.addf %172, %177 : vector<8x8xf32>
    %179 = vector.extract_strided_slice %135 {offsets = [56, 0], sizes = [8, 256], strides = [1, 1]} : vector<64x256xf32> to vector<8x256xf32>
    %180 = arith.truncf %179 : vector<8x256xf32> to vector<8x256xbf16>
    %c7 = arith.constant 7 : index
    %c0_117 = arith.constant 0 : index
    %c0_118 = arith.constant 0 : index
    %181 = vector.load %arg9[%c7, %c0_117, %c0_118] : memref<8x256x8xbf16, #tpu.memory_space<vmem>>, vector<1x256x8xbf16>
    %182 = vector.shape_cast %181 : vector<1x256x8xbf16> to vector<256x8xbf16>
    %cst_119 = arith.constant dense<0.000000e+00> : vector<8x8xf32>
    %183 = tpu.matmul %180, %182, %cst_119 {dimension_numbers = #tpu.dot_dimension_numbers<[1], [0], [0], [1], [0, 0, 1, 1], [], []>} : vector<8x256xbf16>, vector<256x8xbf16>, vector<8x8xf32> -> vector<8x8xf32>
    %184 = arith.addf %178, %183 : vector<8x8xf32>
    %c0_120 = arith.constant 0 : index
    %c0_121 = arith.constant 0 : index
    %185 = vector.load %arg10[%c0_120, %c0_121] : memref<1x8xf32, #tpu.memory_space<vmem>>, vector<1x8xf32>
    %186 = vector.broadcast %185 : vector<1x8xf32> to vector<8x8xf32>
    %187 = arith.addf %184, %186 : vector<8x8xf32>
    %c0_122 = arith.constant 0 : index
    %c0_123 = arith.constant 0 : index
    %188 = vector.load %arg11[%c0_122, %c0_123] : memref<8x8xf32, #tpu.memory_space<vmem>>, vector<8x8xf32>
    tpu.vector_store %arg11[%c0_122, %c0_123], %187 {strides = array<i32>} : memref<8x8xf32, #tpu.memory_space<vmem>>, vector<8x8xf32>,
    return
  }
  func.func @transform_0(%arg0: i32) -> (i32, i32) {
    %c0_i32 = arith.constant 0 : i32
    %c0_i32_0 = arith.constant 0 : i32
    %c0_i32_1 = arith.constant 0 : i32
    return %c0_i32, %c0_i32_0 : i32, i32
  }
  func.func @transform_1(%arg0: i32) -> (i32, i32) {
    %c0_i32 = arith.constant 0 : i32
    %c0_i32_0 = arith.constant 0 : i32
    %c0_i32_1 = arith.constant 0 : i32
    return %c0_i32, %c0_i32_0 : i32, i32
  }
  func.func @transform_2(%arg0: i32) -> (i32, i32, i32) {
    %c0_i32 = arith.constant 0 : i32
    %c0_i32_0 = arith.constant 0 : i32
    %c0_i32_1 = arith.constant 0 : i32
    %c0_i32_2 = arith.constant 0 : i32
    return %c0_i32, %c0_i32_0, %c0_i32_1 : i32, i32, i32
  }
  func.func @transform_3(%arg0: i32) -> (i32, i32, i32) {
    %c0_i32 = arith.constant 0 : i32
    %c0_i32_0 = arith.constant 0 : i32
    %c0_i32_1 = arith.constant 0 : i32
    %c0_i32_2 = arith.constant 0 : i32
    return %c0_i32, %c0_i32_0, %c0_i32_1 : i32, i32, i32
  }
  func.func @transform_4(%arg0: i32) -> (i32, i32, i32) {
    %c0_i32 = arith.constant 0 : i32
    %c0_i32_0 = arith.constant 0 : i32
    %c0_i32_1 = arith.constant 0 : i32
    %c0_i32_2 = arith.constant 0 : i32
    return %c0_i32, %c0_i32_0, %c0_i32_1 : i32, i32, i32
  }
  func.func @transform_5(%arg0: i32) -> (i32, i32, i32) {
    %c0_i32 = arith.constant 0 : i32
    %c0_i32_0 = arith.constant 0 : i32
    %c0_i32_1 = arith.constant 0 : i32
    %c0_i32_2 = arith.constant 0 : i32
    return %c0_i32, %c0_i32_0, %c0_i32_1 : i32, i32, i32
  }
  func.func @transform_6(%arg0: i32) -> (i32, i32, i32) {
    %c0_i32 = arith.constant 0 : i32
    %c0_i32_0 = arith.constant 0 : i32
    %c0_i32_1 = arith.constant 0 : i32
    %c0_i32_2 = arith.constant 0 : i32
    return %c0_i32, %c0_i32_0, %c0_i32_1 : i32, i32, i32
  }
  func.func @transform_7(%arg0: i32) -> (i32, i32) {
    %c0_i32 = arith.constant 0 : i32
    %c0_i32_0 = arith.constant 0 : i32
    %c0_i32_1 = arith.constant 0 : i32
    return %c0_i32, %c0_i32_0 : i32, i32
  }
  func.func @transform_8(%arg0: i32) -> (i32, i32, i32) {
    %c0_i32 = arith.constant 0 : i32
    %c0_i32_0 = arith.constant 0 : i32
    %c0_i32_1 = arith.constant 0 : i32
    %c0_i32_2 = arith.constant 0 : i32
    return %c0_i32, %c0_i32_0, %c0_i32_1 : i32, i32, i32
  }
  func.func @transform_9(%arg0: i32) -> (i32, i32) {
    %c0_i32 = arith.constant 0 : i32
    %c0_i32_0 = arith.constant 0 : i32
    %c0_i32_1 = arith.constant 0 : i32
    return %c0_i32, %c0_i32_0 : i32, i32
  }
  func.func @transform_10(%arg0: i32) -> (i32, i32) {
    %c0_i32 = arith.constant 0 : i32
    %c0_i32_0 = arith.constant 0 : i32
    %c0_i32_1 = arith.constant 0 : i32
    return %c0_i32, %c0_i32_0 : i32, i32
  }
}

</mosaic_0001>

<llo_original>
// kernel: forward.1
$region0: #{forward.1}
  #allocation0 [shape = 'u32[]', space=smem, size = 0x4, offset = 0x4, fixed_abs, tag = 'smem constant byte address 0x4 - core index']
  #allocation1 [shape = 'u32[144,128]{1,0:T(1,128)}', space=vmem, size = 0x12000, scoped, tag = 'internal scratch']
  %s0 = inlined_call_operand.vmem [shape: bf16[64,24], index: 0, kind: input, shape index: {}]
  %s1 = inlined_call_operand.vmem [shape: bf16[24,32], index: 1, kind: input, shape index: {}]
  %s2 = inlined_call_operand.vmem [shape: bf16[4,32,8], index: 2, kind: input, shape index: {}]
  %s3 = inlined_call_operand.vmem [shape: f32[4,1,8], index: 3, kind: input, shape index: {}]
  %s4 = inlined_call_operand.vmem [shape: bf16[4,8,128], index: 4, kind: input, shape index: {}]
  %s5 = inlined_call_operand.vmem [shape: bf16[4,128,8], index: 5, kind: input, shape index: {}]
  %s6 = inlined_call_operand.vmem [shape: bf16[4,8,256], index: 6, kind: input, shape index: {}]
  %s7 = inlined_call_operand.vmem [shape: f32[1,256], index: 7, kind: input, shape index: {}]
  %s8 = inlined_call_operand.vmem [shape: bf16[8,256,8], index: 8, kind: input, shape index: {}]
  %s9 = inlined_call_operand.vmem [shape: f32[1,8], index: 9, kind: input, shape index: {}]
  %s10 = inlined_call_operand.vmem [shape: f32[8,8], index: 10, kind: output, shape index: {}]
  %s11 = sld [smem:[#allocation0]]
  $region50: #{forward.1} parent=0
    _
  %s13 = ssub.s32 1, %s11
  %s14 = scalar_select 0, %s13, %s11
  // Predicated region
  $region2: #{forward.1} parent=0 // pred_check
    _
  $region3: #{forward.1} parent=0 // pred_check_branch
    %16 = sbr.rel (0) target = $region5
  $region4: #{forward.1} parent=0 // pred_region
    _
  $region5: #{forward.1} parent=0 // pred_fallthru
    _
  // Predicated region
  $region6: #{forward.1} parent=0 // pred_check
    _
  $region7: #{forward.1} parent=0 // pred_check_branch
    %18 = sbr.rel (0) target = $region9
  $region8: #{forward.1} parent=0 // pred_region
    _
  $region9: #{forward.1} parent=0 // pred_fallthru
    _
  // Predicated region
  $region10: #{forward.1} parent=0 // pred_check
    _
  $region11: #{forward.1} parent=0 // pred_check_branch
    %20 = sbr.rel (0) target = $region13
  $region12: #{forward.1} parent=0 // pred_region
    _
  $region13: #{forward.1} parent=0 // pred_fallthru
    _
  // Predicated region
  $region14: #{forward.1} parent=0 // pred_check
    _
  $region15: #{forward.1} parent=0 // pred_check_branch
    %22 = sbr.rel (0) target = $region17
  $region16: #{forward.1} parent=0 // pred_region
    _
  $region17: #{forward.1} parent=0 // pred_fallthru
    _
  // Predicated region
  $region18: #{forward.1} parent=0 // pred_check
    _
  $region19: #{forward.1} parent=0 // pred_check_branch
    %24 = sbr.rel (0) target = $region21
  $region20: #{forward.1} parent=0 // pred_region
    _
  $region21: #{forward.1} parent=0 // pred_fallthru
    _
  // Predicated region
  $region22: #{forward.1} parent=0 // pred_check
    _
  $region23: #{forward.1} parent=0 // pred_check_branch
    %26 = sbr.rel (0) target = $region25
  $region24: #{forward.1} parent=0 // pred_region
    _
  $region25: #{forward.1} parent=0 // pred_fallthru
    _
  // Predicated region
  $region26: #{forward.1} parent=0 // pred_check
    _
  $region27: #{forward.1} parent=0 // pred_check_branch
    %28 = sbr.rel (0) target = $region29
  $region28: #{forward.1} parent=0 // pred_region
    _
  $region29: #{forward.1} parent=0 // pred_fallthru
    _
  // Predicated region
  $region30: #{forward.1} parent=0 // pred_check
    _
  $region31: #{forward.1} parent=0 // pred_check_branch
    %30 = sbr.rel (0) target = $region33
  $region32: #{forward.1} parent=0 // pred_region
    _
  $region33: #{forward.1} parent=0 // pred_fallthru
    _
  // Predicated region
  $region34: #{forward.1} parent=0 // pred_check
    _
  $region35: #{forward.1} parent=0 // pred_check_branch
    %32 = sbr.rel (0) target = $region37
  $region36: #{forward.1} parent=0 // pred_region
    _
  $region37: #{forward.1} parent=0 // pred_fallthru
    _
  // Predicated region
  $region38: #{forward.1} parent=0 // pred_check
    _
  $region39: #{forward.1} parent=0 // pred_check_branch
    %34 = sbr.rel (0) target = $region41
  $region40: #{forward.1} parent=0 // pred_region
    _
  $region41: #{forward.1} parent=0 // pred_fallthru
    _
  %v36 = vld [vmem:[%s0] sm:$0xf]
  %v37 = vld [vmem:[%s0 + $0x4] sm:$0xf]
  %v38 = vld [vmem:[%s0 + $0x8] sm:$0xf]
  %v39 = vld [vmem:[%s0 + $0xc] sm:$0xf]
  %v40 = vld [vmem:[%s0 + $0x10] sm:$0xf]
  %v41 = vld [vmem:[%s0 + $0x14] sm:$0xf]
  %v42 = vld [vmem:[%s0 + $0x18] sm:$0xf]
  %v43 = vld [vmem:[%s0 + $0x1c] sm:$0xf]
  %v44 = vld [vmem:[%s1] sm:$0xf]
  %v45 = vld [vmem:[%s1 + $0x4] sm:$0xf]
  %v46 = vld [vmem:[%s1 + $0x8] sm:$0xf]
  %v55 = vunpack.c.l.b16 %v36
  %v56 = vunpack.c.l.b16 %v37
  %v57 = vunpack.c.l.b16 %v38
  %v58 = vunpack.c.l.b16 %v39
  %v59 = vunpack.c.l.b16 %v40
  %v60 = vunpack.c.l.b16 %v41
  %v61 = vunpack.c.l.b16 %v42
  %v62 = vunpack.c.l.b16 %v43
  %v63 = vpack.c.b16 %v56, %v55
  %v64 = vpack.c.b16 %v58, %v57
  %v65 = vpack.c.b16 %v60, %v59
  %v66 = vpack.c.b16 %v62, %v61
  %v70 = vunpack.c.l.b16 %v44
  %v71 = vunpack.c.l.b16 %v45
  %v72 = vunpack.c.l.b16 %v46
  %v73 = vpack.c.b16 %v71, %v70
  %v74 = vpack.c.b16 %v72, %v72
  %vm76 = vcmask 195584
  %v78 = vsel %vm76, %v63, 0
  %v81 = vsel %vm76, %v64, 0
  %v84 = vsel %vm76, %v65, 0
  %v87 = vsel %vm76, %v66, 0
  %vm89 = vcmask 1043456
  %v91 = vsel %vm89, %v74, 0
  %93 = vmatprep.subr.bf16.mxu0 0
  %94 = vmatpush1.bf16.msra.mxu0 %v73
  %95 = vmatprep.subr.bf16.mxu0 0
  %96 = vmatpush1.bf16.msra.mxu0 %v91
  %97 = vmatprep.subr.bf16.mxu0 0
  %98 = vmatpush1.bf16.msra.mxu0 0
  %99 = vmatprep.subr.bf16.mxu0 0
  %100 = vmatpush1.bf16.msra.mxu0 0
  %101 = vmatprep.subr.bf16.mxu0 0
  %102 = vmatpush1.bf16.msra.mxu0 0
  %103 = vmatprep.subr.bf16.mxu0 0
  %104 = vmatpush1.bf16.msra.mxu0 0
  %105 = vmatprep.subr.bf16.mxu0 0
  %106 = vmatpush1.bf16.msra.mxu0 0
  %107 = vmatprep.subr.bf16.mxu0 0
  %108 = vmatpush1.bf16.msra.mxu0 0
  %109 = vmatprep.subr.bf16.mxu0 0
  %110 = vmatpush1.bf16.msra.mxu0 0
  %111 = vmatprep.subr.bf16.mxu0 0
  %112 = vmatpush1.bf16.msra.mxu0 0
  %113 = vmatprep.subr.bf16.mxu0 0
  %114 = vmatpush1.bf16.msra.mxu0 0
  %115 = vmatprep.subr.bf16.mxu0 0
  %116 = vmatpush1.bf16.msra.mxu0 0
  %117 = vmatprep.subr.bf16.mxu0 0
  %118 = vmatpush1.bf16.msra.mxu0 0
  %119 = vmatprep.subr.bf16.mxu0 0
  %120 = vmatpush1.bf16.msra.mxu0 0
  %121 = vmatprep.subr.bf16.mxu0 0
  %122 = vmatpush1.bf16.msra.mxu0 0
  %123 = vmatprep.subr.bf16.mxu0 0
  %124 = vmatpush1.bf16.msra.mxu0 0
  %125 = vmatprep.mubr.bf16.mxu0 0
  %126 = vmatmul.mubr.bf16.gmra.mrb[0].mxu0 %v78
  %v127 = vpop.f32.mrb[0].mxu0
  %v128 = vadd.f32 0.0, %v127
  %v129 = vpop.f32.mrb[0].mxu0
  %v130 = vpop.f32.mrb[0].mxu0
  %v131 = vadd.f32 0.0, %v130
  %v132 = vpop.f32.mrb[0].mxu0
  %133 = vmatprep.mubr.bf16.mxu0 0
  %134 = vmatmul.mubr.bf16.gmra.mrb[0].mxu0 %v81
  %v135 = vpop.f32.mrb[0].mxu0
  %v136 = vadd.f32 0.0, %v135
  %v137 = vpop.f32.mrb[0].mxu0
  %v138 = vpop.f32.mrb[0].mxu0
  %v139 = vadd.f32 0.0, %v138
  %v140 = vpop.f32.mrb[0].mxu0
  %141 = vmatprep.mubr.bf16.mxu0 0
  %142 = vmatmul.mubr.bf16.gmra.mrb[0].mxu0 %v84
  %v143 = vpop.f32.mrb[0].mxu0
  %v144 = vadd.f32 0.0, %v143
  %v145 = vpop.f32.mrb[0].mxu0
  %v146 = vpop.f32.mrb[0].mxu0
  %v147 = vadd.f32 0.0, %v146
  %v148 = vpop.f32.mrb[0].mxu0
  %149 = vmatprep.mubr.bf16.mxu0 0
  %150 = vmatmul.mubr.bf16.gmra.mrb[0].mxu0 %v87
  %v151 = vpop.f32.mrb[0].mxu0
  %v152 = vadd.f32 0.0, %v151
  %v153 = vpop.f32.mrb[0].mxu0
  %v154 = vpop.f32.mrb[0].mxu0
  %v155 = vadd.f32 0.0, %v154
  %v156 = vpop.f32.mrb[0].mxu0
  %157 = vdwg.mxu0
  %v158 = vpack.c.bf16 %v131, %v128
  %v159 = vpack.c.bf16 %v139, %v136
  %v160 = vpack.c.bf16 %v147, %v144
  %v161 = vpack.c.bf16 %v155, %v152
  %v162 = vld [vmem:[%s2] sm:$0xf]
  %v163 = vld [vmem:[%s2 + $0x4] sm:$0xf]
  %v164 = vld [vmem:[%s2 + $0x8] sm:$0xf]
  %v165 = vld [vmem:[%s2 + $0xc] sm:$0xf]
  %v166 = vld [vmem:[%s3] sm:$0x1]
  %v168 = vlaneseq
  %v169 = vshrl.u32 %v168, 7
  %v170 = vsub.s32 0, %v169
  %v171 = vrot.slane %v166, %v170
  %v177 = vunpack.c.l.b16 %v162
  %v178 = vunpack.c.l.b16 %v163
  %v179 = vunpack.c.l.b16 %v164
  %v180 = vunpack.c.l.b16 %v165
  %v181 = vpack.c.b16 %v178, %v177
  %v182 = vpack.c.b16 %v180, %v179
  %vm185 = vcmask 261120
  %v187 = vsel %vm185, %v158, 0
  %v190 = vsel %vm185, %v159, 0
  %v193 = vsel %vm185, %v160, 0
  %v196 = vsel %vm185, %v161, 0
  %198 = vmatprep.subr.bf16.mxu0 0
  %199 = vmatpush1.bf16.msra.mxu0 %v181
  %200 = vmatprep.subr.bf16.mxu0 0
  %201 = vmatpush1.bf16.msra.mxu0 %v182
  %202 = vmatprep.subr.bf16.mxu0 0
  %203 = vmatpush1.bf16.msra.mxu0 0
  %204 = vmatprep.subr.bf16.mxu0 0
  %205 = vmatpush1.bf16.msra.mxu0 0
  %206 = vmatprep.subr.bf16.mxu0 0
  %207 = vmatpush1.bf16.msra.mxu0 0
  %208 = vmatprep.subr.bf16.mxu0 0
  %209 = vmatpush1.bf16.msra.mxu0 0
  %210 = vmatprep.subr.bf16.mxu0 0
  %211 = vmatpush1.bf16.msra.mxu0 0
  %212 = vmatprep.subr.bf16.mxu0 0
  %213 = vmatpush1.bf16.msra.mxu0 0
  %214 = vmatprep.subr.bf16.mxu0 0
  %215 = vmatpush1.bf16.msra.mxu0 0
  %216 = vmatprep.subr.bf16.mxu0 0
  %217 = vmatpush1.bf16.msra.mxu0 0
  %218 = vmatprep.subr.bf16.mxu0 0
  %219 = vmatpush1.bf16.msra.mxu0 0
  %220 = vmatprep.subr.bf16.mxu0 0
  %221 = vmatpush1.bf16.msra.mxu0 0
  %222 = vmatprep.subr.bf16.mxu0 0
  %223 = vmatpush1.bf16.msra.mxu0 0
  %224 = vmatprep.subr.bf16.mxu0 0
  %225 = vmatpush1.bf16.msra.mxu0 0
  %226 = vmatprep.subr.bf16.mxu0 0
  %227 = vmatpush1.bf16.msra.mxu0 0
  %228 = vmatprep.subr.bf16.mxu0 0
  %229 = vmatpush1.bf16.msra.mxu0 0
  %230 = vmatprep.mubr.bf16.mxu0 0
  %231 = vmatmul.mubr.bf16.gmra.mrb[0].mxu0 %v187
  %v232 = vpop.f32.mrb[0].mxu0
  %v233 = vadd.f32 %v171, %v232
  %v234 = vpop.f32.mrb[0].mxu0
  %v235 = vpop.f32.mrb[0].mxu0
  %v236 = vadd.f32 %v171, %v235
  %v237 = vpop.f32.mrb[0].mxu0
  %238 = vmatprep.mubr.bf16.mxu0 0
  %239 = vmatmul.mubr.bf16.gmra.mrb[0].mxu0 %v190
  %v240 = vpop.f32.mrb[0].mxu0
  %v241 = vadd.f32 %v171, %v240
  %v242 = vpop.f32.mrb[0].mxu0
  %v243 = vpop.f32.mrb[0].mxu0
  %v244 = vadd.f32 %v171, %v243
  %v245 = vpop.f32.mrb[0].mxu0
  %246 = vmatprep.mubr.bf16.mxu0 0
  %247 = vmatmul.mubr.bf16.gmra.mrb[0].mxu0 %v193
  %v248 = vpop.f32.mrb[0].mxu0
  %v249 = vadd.f32 %v171, %v248
  %v250 = vpop.f32.mrb[0].mxu0
  %v251 = vpop.f32.mrb[0].mxu0
  %v252 = vadd.f32 %v171, %v251
  %v253 = vpop.f32.mrb[0].mxu0
  %254 = vmatprep.mubr.bf16.mxu0 0
  %255 = vmatmul.mubr.bf16.gmra.mrb[0].mxu0 %v196
  %v256 = vpop.f32.mrb[0].mxu0
  %v257 = vadd.f32 %v171, %v256
  %v258 = vpop.f32.mrb[0].mxu0
  %v259 = vpop.f32.mrb[0].mxu0
  %v260 = vadd.f32 %v171, %v259
  %v261 = vpop.f32.mrb[0].mxu0
  %262 = vdwg.mxu0
  %v263 = vpack.c.bf16 %v236, %v233
  %v264 = vpack.c.bf16 %v244, %v241
  %v265 = vpack.c.bf16 %v252, %v249
  %v266 = vpack.c.bf16 %v260, %v257
  %v267 = vld [vmem:[%s4] sm:$0xf]
  %vm268 = vcmask 64512
  %v270 = vsel %vm268, %v263, 0
  %v273 = vsel %vm268, %v264, 0
  %v276 = vsel %vm268, %v265, 0
  %v279 = vsel %vm268, %v266, 0
  %v282 = vsel %vm89, %v267, 0
  %284 = vmatprep.subr.bf16.mxu0 0
  %285 = vmatpush1.bf16.msra.mxu0 %v282
  %286 = vmatprep.subr.bf16.mxu0 0
  %287 = vmatpush1.bf16.msra.mxu0 0
  %288 = vmatprep.subr.bf16.mxu0 0
  %289 = vmatpush1.bf16.msra.mxu0 0
  %290 = vmatprep.subr.bf16.mxu0 0
  %291 = vmatpush1.bf16.msra.mxu0 0
  %292 = vmatprep.subr.bf16.mxu0 0
  %293 = vmatpush1.bf16.msra.mxu0 0
  %294 = vmatprep.subr.bf16.mxu0 0
  %295 = vmatpush1.bf16.msra.mxu0 0
  %296 = vmatprep.subr.bf16.mxu0 0
  %297 = vmatpush1.bf16.msra.mxu0 0
  %298 = vmatprep.subr.bf16.mxu0 0
  %299 = vmatpush1.bf16.msra.mxu0 0
  %300 = vmatprep.subr.bf16.mxu0 0
  %301 = vmatpush1.bf16.msra.mxu0 0
  %302 = vmatprep.subr.bf16.mxu0 0
  %303 = vmatpush1.bf16.msra.mxu0 0
  %304 = vmatprep.subr.bf16.mxu0 0
  %305 = vmatpush1.bf16.msra.mxu0 0
  %306 = vmatprep.subr.bf16.mxu0 0
  %307 = vmatpush1.bf16.msra.mxu0 0
  %308 = vmatprep.subr.bf16.mxu0 0
  %309 = vmatpush1.bf16.msra.mxu0 0
  %310 = vmatprep.subr.bf16.mxu0 0
  %311 = vmatpush1.bf16.msra.mxu0 0
  %312 = vmatprep.subr.bf16.mxu0 0
  %313 = vmatpush1.bf16.msra.mxu0 0
  %314 = vmatprep.subr.bf16.mxu0 0
  %315 = vmatpush1.bf16.msra.mxu0 0
  %316 = vmatprep.mubr.bf16.mxu0 0
  %317 = vmatmul.mubr.bf16.gmra.mrb[0].mxu0 %v270
  %v318 = vpop.f32.mrb[0].mxu0
  %v319 = vadd.f32 0.0, %v318
  %v320 = vpop.f32.mrb[0].mxu0
  %v321 = vpop.f32.mrb[0].mxu0
  %v322 = vadd.f32 0.0, %v321
  %v323 = vpop.f32.mrb[0].mxu0
  %324 = vmatprep.mubr.bf16.mxu0 0
  %325 = vmatmul.mubr.bf16.gmra.mrb[0].mxu0 %v273
  %v326 = vpop.f32.mrb[0].mxu0
  %v327 = vadd.f32 0.0, %v326
  %v328 = vpop.f32.mrb[0].mxu0
  %v329 = vpop.f32.mrb[0].mxu0
  %v330 = vadd.f32 0.0, %v329
  %v331 = vpop.f32.mrb[0].mxu0
  %332 = vmatprep.mubr.bf16.mxu0 0
  %333 = vmatmul.mubr.bf16.gmra.mrb[0].mxu0 %v276
  %v334 = vpop.f32.mrb[0].mxu0
  %v335 = vadd.f32 0.0, %v334
  %v336 = vpop.f32.mrb[0].mxu0
  %v337 = vpop.f32.mrb[0].mxu0
  %v338 = vadd.f32 0.0, %v337
  %v339 = vpop.f32.mrb[0].mxu0
  %340 = vmatprep.mubr.bf16.mxu0 0
  %341 = vmatmul.mubr.bf16.gmra.mrb[0].mxu0 %v279
  %v342 = vpop.f32.mrb[0].mxu0
  %v343 = vadd.f32 0.0, %v342
  %v344 = vpop.f32.mrb[0].mxu0
  %v345 = vpop.f32.mrb[0].mxu0
  %v346 = vadd.f32 0.0, %v345
  %v347 = vpop.f32.mrb[0].mxu0
  %348 = vdwg.mxu0
  %v349 = vmul.f32 %v319, 0.35355338
  %v350 = vmul.f32 %v322, 0.35355338
  %v351 = vmul.f32 %v327, 0.35355338
  %v352 = vmul.f32 %v330, 0.35355338
  %v353 = vmul.f32 %v335, 0.35355338
  %v354 = vmul.f32 %v338, 0.35355338
  %v355 = vmul.f32 %v343, 0.35355338
  %v356 = vmul.f32 %v346, 0.35355338
  %357 = vmax.xlane.f32.xlu0 %v349
  %v358 = vpop.xlane.xlu0 %357
  %359 = vmax.xlane.f32.xlu0 %v350
  %v360 = vpop.xlane.xlu0 %359
  %361 = vmax.xlane.f32.xlu0 %v351
  %v362 = vpop.xlane.xlu0 %361
  %363 = vmax.xlane.f32.xlu0 %v352
  %v364 = vpop.xlane.xlu0 %363
  %365 = vmax.xlane.f32.xlu0 %v353
  %v366 = vpop.xlane.xlu0 %365
  %367 = vmax.xlane.f32.xlu0 %v354
  %v368 = vpop.xlane.xlu0 %367
  %369 = vmax.xlane.f32.xlu0 %v355
  %v370 = vpop.xlane.xlu0 %369
  %371 = vmax.xlane.f32.xlu0 %v356
  %v372 = vpop.xlane.xlu0 %371
  %v373 = vsub.f32 %v349, %v358
  %v374 = vsub.f32 %v350, %v360
  %v375 = vsub.f32 %v351, %v362
  %v376 = vsub.f32 %v352, %v364
  %v377 = vsub.f32 %v353, %v366
  %v378 = vsub.f32 %v354, %v368
  %v379 = vsub.f32 %v355, %v370
  %v380 = vsub.f32 %v356, %v372
  %v381 = vmul.f32 %v373, 1.442695
  %v382 = vpow.pop %v381
  %v383 = vmul.f32 %v374, 1.442695
  %v384 = vpow.pop %v383
  %v385 = vmul.f32 %v375, 1.442695
  %v386 = vpow.pop %v385
  %v387 = vmul.f32 %v376, 1.442695
  %v388 = vpow.pop %v387
  %v389 = vmul.f32 %v377, 1.442695
  %v390 = vpow.pop %v389
  %v391 = vmul.f32 %v378, 1.442695
  %v392 = vpow.pop %v391
  %v393 = vmul.f32 %v379, 1.442695
  %v394 = vpow.pop %v393
  %v395 = vmul.f32 %v380, 1.442695
  %v396 = vpow.pop %v395
  %397 = vadd.xlane.f32.xlu0 %v382
  %v398 = vpop.xlane.xlu0 %397
  %399 = vadd.xlane.f32.xlu0 %v384
  %v400 = vpop.xlane.xlu0 %399
  %401 = vadd.xlane.f32.xlu0 %v386
  %v402 = vpop.xlane.xlu0 %401
  %403 = vadd.xlane.f32.xlu0 %v388
  %v404 = vpop.xlane.xlu0 %403
  %405 = vadd.xlane.f32.xlu0 %v390
  %v406 = vpop.xlane.xlu0 %405
  %407 = vadd.xlane.f32.xlu0 %v392
  %v408 = vpop.xlane.xlu0 %407
  %409 = vadd.xlane.f32.xlu0 %v394
  %v410 = vpop.xlane.xlu0 %409
  %411 = vadd.xlane.f32.xlu0 %v396
  %v412 = vpop.xlane.xlu0 %411
  %v413 = vrcp.pop %v398
  %v414 = vrcp.pop %v400
  %v415 = vrcp.pop %v402
  %v416 = vrcp.pop %v404
  %v417 = vrcp.pop %v406
  %v418 = vrcp.pop %v408
  %v419 = vrcp.pop %v410
  %v420 = vrcp.pop %v412
  %v421 = vmul.f32 %v382, %v413
  %v422 = vmul.f32 %v384, %v414
  %v423 = vmul.f32 %v386, %v415
  %v424 = vmul.f32 %v388, %v416
  %v425 = vmul.f32 %v390, %v417
  %v426 = vmul.f32 %v392, %v418
  %v427 = vmul.f32 %v394, %v419
  %v428 = vmul.f32 %v396, %v420
  %v429 = vpack.c.bf16 %v422, %v421
  %v430 = vpack.c.bf16 %v424, %v423
  %v431 = vpack.c.bf16 %v426, %v425
  %v432 = vpack.c.bf16 %v428, %v427
  %v433 = vld [vmem:[%s5] sm:$0xf]
  %v434 = vld [vmem:[%s5 + $0x4] sm:$0xf]
  %v435 = vld [vmem:[%s5 + $0x8] sm:$0xf]
  %v436 = vld [vmem:[%s5 + $0xc] sm:$0xf]
  %v437 = vld [vmem:[%s5 + $0x10] sm:$0xf]
  %v438 = vld [vmem:[%s5 + $0x14] sm:$0xf]
  %v439 = vld [vmem:[%s5 + $0x18] sm:$0xf]
  %v440 = vld [vmem:[%s5 + $0x1c] sm:$0xf]
  %v441 = vld [vmem:[%s5 + $0x20] sm:$0xf]
  %v442 = vld [vmem:[%s5 + $0x24] sm:$0xf]
  %v443 = vld [vmem:[%s5 + $0x28] sm:$0xf]
  %v444 = vld [vmem:[%s5 + $0x2c] sm:$0xf]
  %v445 = vld [vmem:[%s5 + $0x30] sm:$0xf]
  %v446 = vld [vmem:[%s5 + $0x34] sm:$0xf]
  %v447 = vld [vmem:[%s5 + $0x38] sm:$0xf]
  %v448 = vld [vmem:[%s5 + $0x3c] sm:$0xf]
  %v465 = vunpack.c.l.b16 %v433
  %v466 = vunpack.c.l.b16 %v434
  %v467 = vunpack.c.l.b16 %v435
  %v468 = vunpack.c.l.b16 %v436
  %v469 = vunpack.c.l.b16 %v437
  %v470 = vunpack.c.l.b16 %v438
  %v471 = vunpack.c.l.b16 %v439
  %v472 = vunpack.c.l.b16 %v440
  %v473 = vunpack.c.l.b16 %v441
  %v474 = vunpack.c.l.b16 %v442
  %v475 = vunpack.c.l.b16 %v443
  %v476 = vunpack.c.l.b16 %v444
  %v477 = vunpack.c.l.b16 %v445
  %v478 = vunpack.c.l.b16 %v446
  %v479 = vunpack.c.l.b16 %v447
  %v480 = vunpack.c.l.b16 %v448
  %v481 = vpack.c.b16 %v466, %v465
  %v482 = vpack.c.b16 %v468, %v467
  %v483 = vpack.c.b16 %v470, %v469
  %v484 = vpack.c.b16 %v472, %v471
  %v485 = vpack.c.b16 %v474, %v473
  %v486 = vpack.c.b16 %v476, %v475
  %v487 = vpack.c.b16 %v478, %v477
  %v488 = vpack.c.b16 %v480, %v479
  %497 = vmatprep.subr.bf16.mxu0 0
  %498 = vmatpush1.bf16.msra.mxu0 %v481
  %499 = vmatprep.subr.bf16.mxu0 0
  %500 = vmatpush1.bf16.msra.mxu0 %v482
  %501 = vmatprep.subr.bf16.mxu0 0
  %502 = vmatpush1.bf16.msra.mxu0 %v483
  %503 = vmatprep.subr.bf16.mxu0 0
  %504 = vmatpush1.bf16.msra.mxu0 %v484
  %505 = vmatprep.subr.bf16.mxu0 0
  %506 = vmatpush1.bf16.msra.mxu0 %v485
  %507 = vmatprep.subr.bf16.mxu0 0
  %508 = vmatpush1.bf16.msra.mxu0 %v486
  %509 = vmatprep.subr.bf16.mxu0 0
  %510 = vmatpush1.bf16.msra.mxu0 %v487
  %511 = vmatprep.subr.bf16.mxu0 0
  %512 = vmatpush1.bf16.msra.mxu0 %v488
  %513 = vmatprep.subr.bf16.mxu0 0
  %514 = vmatpush1.bf16.msra.mxu0 0
  %515 = vmatprep.subr.bf16.mxu0 0
  %516 = vmatpush1.bf16.msra.mxu0 0
  %517 = vmatprep.subr.bf16.mxu0 0
  %518 = vmatpush1.bf16.msra.mxu0 0
  %519 = vmatprep.subr.bf16.mxu0 0
  %520 = vmatpush1.bf16.msra.mxu0 0
  %521 = vmatprep.subr.bf16.mxu0 0
  %522 = vmatpush1.bf16.msra.mxu0 0
  %523 = vmatprep.subr.bf16.mxu0 0
  %524 = vmatpush1.bf16.msra.mxu0 0
  %525 = vmatprep.subr.bf16.mxu0 0
  %526 = vmatpush1.bf16.msra.mxu0 0
  %527 = vmatprep.subr.bf16.mxu0 0
  %528 = vmatpush1.bf16.msra.mxu0 0
  %529 = vmatprep.mubr.bf16.mxu0 0
  %530 = vmatmul.mubr.bf16.gmra.mrb[0].mxu0 %v429
  %v531 = vpop.f32.mrb[0].mxu0
  %v532 = vadd.f32 0.0, %v531
  %v533 = vpop.f32.mrb[0].mxu0
  %v534 = vpop.f32.mrb[0].mxu0
  %v535 = vadd.f32 0.0, %v534
  %v536 = vpop.f32.mrb[0].mxu0
  %537 = vmatprep.mubr.bf16.mxu0 0
  %538 = vmatmul.mubr.bf16.gmra.mrb[0].mxu0 %v430
  %v539 = vpop.f32.mrb[0].mxu0
  %v540 = vadd.f32 0.0, %v539
  %v541 = vpop.f32.mrb[0].mxu0
  %v542 = vpop.f32.mrb[0].mxu0
  %v543 = vadd.f32 0.0, %v542
  %v544 = vpop.f32.mrb[0].mxu0
  %545 = vmatprep.mubr.bf16.mxu0 0
  %546 = vmatmul.mubr.bf16.gmra.mrb[0].mxu0 %v431
  %v547 = vpop.f32.mrb[0].mxu0
  %v548 = vadd.f32 0.0, %v547
  %v549 = vpop.f32.mrb[0].mxu0
  %v550 = vpop.f32.mrb[0].mxu0
  %v551 = vadd.f32 0.0, %v550
  %v552 = vpop.f32.mrb[0].mxu0
  %553 = vmatprep.mubr.bf16.mxu0 0
  %554 = vmatmul.mubr.bf16.gmra.mrb[0].mxu0 %v432
  %v555 = vpop.f32.mrb[0].mxu0
  %v556 = vadd.f32 0.0, %v555
  %v557 = vpop.f32.mrb[0].mxu0
  %v558 = vpop.f32.mrb[0].mxu0
  %v559 = vadd.f32 0.0, %v558
  %v560 = vpop.f32.mrb[0].mxu0
  %561 = vdwg.mxu0
  %v562 = vpack.c.bf16 %v535, %v532
  %v563 = vpack.c.bf16 %v543, %v540
  %v564 = vpack.c.bf16 %v551, %v548
  %v565 = vpack.c.bf16 %v559, %v556
  %v566 = vld [vmem:[%s6] sm:$0xff]
  %s567 = scalar_lea.vmem %s2, 16
  %v568 = vld [vmem:[%s567] sm:$0xf]
  %v569 = vld [vmem:[%s567 + $0x4] sm:$0xf]
  %v570 = vld [vmem:[%s567 + $0x8] sm:$0xf]
  %v571 = vld [vmem:[%s567 + $0xc] sm:$0xf]
  %s572 = scalar_lea.vmem %s3, 1
  %v573 = vld [vmem:[%s572] sm:$0x1]
  %v575 = vlaneseq
  %v576 = vshrl.u32 %v575, 7
  %v577 = vsub.s32 0, %v576
  %v578 = vrot.slane %v573, %v577
  %v584 = vunpack.c.l.b16 %v568
  %v585 = vunpack.c.l.b16 %v569
  %v586 = vunpack.c.l.b16 %v570
  %v587 = vunpack.c.l.b16 %v571
  %v588 = vpack.c.b16 %v585, %v584
  %v589 = vpack.c.b16 %v587, %v586
  %592 = vmatprep.subr.bf16.mxu0 0
  %593 = vmatpush1.bf16.msra.mxu0 %v588
  %594 = vmatprep.subr.bf16.mxu0 0
  %595 = vmatpush1.bf16.msra.mxu0 %v589
  %596 = vmatprep.subr.bf16.mxu0 0
  %597 = vmatpush1.bf16.msra.mxu0 0
  %598 = vmatprep.subr.bf16.mxu0 0
  %599 = vmatpush1.bf16.msra.mxu0 0
  %600 = vmatprep.subr.bf16.mxu0 0
  %601 = vmatpush1.bf16.msra.mxu0 0
  %602 = vmatprep.subr.bf16.mxu0 0
  %603 = vmatpush1.bf16.msra.mxu0 0
  %604 = vmatprep.subr.bf16.mxu0 0
  %605 = vmatpush1.bf16.msra.mxu0 0
  %606 = vmatprep.subr.bf16.mxu0 0
  %607 = vmatpush1.bf16.msra.mxu0 0
  %608 = vmatprep.subr.bf16.mxu0 0
  %609 = vmatpush1.bf16.msra.mxu0 0
  %610 = vmatprep.subr.bf16.mxu0 0
  %611 = vmatpush1.bf16.msra.mxu0 0
  %612 = vmatprep.subr.bf16.mxu0 0
  %613 = vmatpush1.bf16.msra.mxu0 0
  %614 = vmatprep.subr.bf16.mxu0 0
  %615 = vmatpush1.bf16.msra.mxu0 0
  %616 = vmatprep.subr.bf16.mxu0 0
  %617 = vmatpush1.bf16.msra.mxu0 0
  %618 = vmatprep.subr.bf16.mxu0 0
  %619 = vmatpush1.bf16.msra.mxu0 0
  %620 = vmatprep.subr.bf16.mxu0 0
  %621 = vmatpush1.bf16.msra.mxu0 0
  %622 = vmatprep.subr.bf16.mxu0 0
  %623 = vmatpush1.bf16.msra.mxu0 0
  %624 = vmatprep.mubr.bf16.mxu0 0
  %625 = vmatmul.mubr.bf16.gmra.mrb[0].mxu0 %v187
  %v626 = vpop.f32.mrb[0].mxu0
  %v627 = vadd.f32 %v578, %v626
  %v628 = vpop.f32.mrb[0].mxu0
  %v629 = vpop.f32.mrb[0].mxu0
  %v630 = vadd.f32 %v578, %v629
  %v631 = vpop.f32.mrb[0].mxu0
  %632 = vmatprep.mubr.bf16.mxu0 0
  %633 = vmatmul.mubr.bf16.gmra.mrb[0].mxu0 %v190
  %v634 = vpop.f32.mrb[0].mxu0
  %v635 = vadd.f32 %v578, %v634
  %v636 = vpop.f32.mrb[0].mxu0
  %v637 = vpop.f32.mrb[0].mxu0
  %v638 = vadd.f32 %v578, %v637
  %v639 = vpop.f32.mrb[0].mxu0
  %640 = vmatprep.mubr.bf16.mxu0 0
  %641 = vmatmul.mubr.bf16.gmra.mrb[0].mxu0 %v193
  %v642 = vpop.f32.mrb[0].mxu0
  %v643 = vadd.f32 %v578, %v642
  %v644 = vpop.f32.mrb[0].mxu0
  %v645 = vpop.f32.mrb[0].mxu0
  %v646 = vadd.f32 %v578, %v645
  %v647 = vpop.f32.mrb[0].mxu0
  %648 = vmatprep.mubr.bf16.mxu0 0
  %649 = vmatmul.mubr.bf16.gmra.mrb[0].mxu0 %v196
  %v650 = vpop.f32.mrb[0].mxu0
  %v651 = vadd.f32 %v578, %v650
  %v652 = vpop.f32.mrb[0].mxu0
  %v653 = vpop.f32.mrb[0].mxu0
  %v654 = vadd.f32 %v578, %v653
  %v655 = vpop.f32.mrb[0].mxu0
  %656 = vdwg.mxu0
  %v657 = vpack.c.bf16 %v630, %v627
  %v658 = vpack.c.bf16 %v638, %v635
  %v659 = vpack.c.bf16 %v646, %v643
  %v660 = vpack.c.bf16 %v654, %v651
  %s661 = scalar_lea.vmem %s4, 4
  %v662 = vld [vmem:[%s661] sm:$0xf]
  %v664 = vsel %vm268, %v657, 0
  %v667 = vsel %vm268, %v658, 0
  %v670 = vsel %vm268, %v659, 0
  %v673 = vsel %vm268, %v660, 0
  %v676 = vsel %vm89, %v662, 0
  %678 = vmatprep.subr.bf16.mxu0 0
  %679 = vmatpush1.bf16.msra.mxu0 %v676
  %680 = vmatprep.subr.bf16.mxu0 0
  %681 = vmatpush1.bf16.msra.mxu0 0
  %682 = vmatprep.subr.bf16.mxu0 0
  %683 = vmatpush1.bf16.msra.mxu0 0
  %684 = vmatprep.subr.bf16.mxu0 0
  %685 = vmatpush1.bf16.msra.mxu0 0
  %686 = vmatprep.subr.bf16.mxu0 0
  %687 = vmatpush1.bf16.msra.mxu0 0
  %688 = vmatprep.subr.bf16.mxu0 0
  %689 = vmatpush1.bf16.msra.mxu0 0
  %690 = vmatprep.subr.bf16.mxu0 0
  %691 = vmatpush1.bf16.msra.mxu0 0
  %692 = vmatprep.subr.bf16.mxu0 0
  %693 = vmatpush1.bf16.msra.mxu0 0
  %694 = vmatprep.subr.bf16.mxu0 0
  %695 = vmatpush1.bf16.msra.mxu0 0
  %696 = vmatprep.subr.bf16.mxu0 0
  %697 = vmatpush1.bf16.msra.mxu0 0
  %698 = vmatprep.subr.bf16.mxu0 0
  %699 = vmatpush1.bf16.msra.mxu0 0
  %700 = vmatprep.subr.bf16.mxu0 0
  %701 = vmatpush1.bf16.msra.mxu0 0
  %702 = vmatprep.subr.bf16.mxu0 0
  %703 = vmatpush1.bf16.msra.mxu0 0
  %704 = vmatprep.subr.bf16.mxu0 0
  %705 = vmatpush1.bf16.msra.mxu0 0
  %706 = vmatprep.subr.bf16.mxu0 0
  %707 = vmatpush1.bf16.msra.mxu0 0
  %708 = vmatprep.subr.bf16.mxu0 0
  %709 = vmatpush1.bf16.msra.mxu0 0
  %710 = vmatprep.mubr.bf16.mxu0 0
  %711 = vmatmul.mubr.bf16.gmra.mrb[0].mxu0 %v664
  %v712 = vpop.f32.mrb[0].mxu0
  %v713 = vadd.f32 0.0, %v712
  %v714 = vpop.f32.mrb[0].mxu0
  %v715 = vpop.f32.mrb[0].mxu0
  %v716 = vadd.f32 0.0, %v715
  %v717 = vpop.f32.mrb[0].mxu0
  %718 = vmatprep.mubr.bf16.mxu0 0
  %719 = vmatmul.mubr.bf16.gmra.mrb[0].mxu0 %v667
  %v720 = vpop.f32.mrb[0].mxu0
  %v721 = vadd.f32 0.0, %v720
  %v722 = vpop.f32.mrb[0].mxu0
  %v723 = vpop.f32.mrb[0].mxu0
  %v724 = vadd.f32 0.0, %v723
  %v725 = vpop.f32.mrb[0].mxu0
  %726 = vmatprep.mubr.bf16.mxu0 0
  %727 = vmatmul.mubr.bf16.gmra.mrb[0].mxu0 %v670
  %v728 = vpop.f32.mrb[0].mxu0
  %v729 = vadd.f32 0.0, %v728
  %v730 = vpop.f32.mrb[0].mxu0
  %v731 = vpop.f32.mrb[0].mxu0
  %v732 = vadd.f32 0.0, %v731
  %v733 = vpop.f32.mrb[0].mxu0
  %734 = vmatprep.mubr.bf16.mxu0 0
  %735 = vmatmul.mubr.bf16.gmra.mrb[0].mxu0 %v673
  %v736 = vpop.f32.mrb[0].mxu0
  %v737 = vadd.f32 0.0, %v736
  %v738 = vpop.f32.mrb[0].mxu0
  %v739 = vpop.f32.mrb[0].mxu0
  %v740 = vadd.f32 0.0, %v739
  %v741 = vpop.f32.mrb[0].mxu0
  %742 = vdwg.mxu0
  %v743 = vmul.f32 %v713, 0.35355338
  %v744 = vmul.f32 %v716, 0.35355338
  %v745 = vmul.f32 %v721, 0.35355338
  %v746 = vmul.f32 %v724, 0.35355338
  %v747 = vmul.f32 %v729, 0.35355338
  %v748 = vmul.f32 %v732, 0.35355338
  %v749 = vmul.f32 %v737, 0.35355338
  %v750 = vmul.f32 %v740, 0.35355338
  %751 = vmax.xlane.f32.xlu0 %v743
  %v752 = vpop.xlane.xlu0 %751
  %753 = vmax.xlane.f32.xlu0 %v744
  %v754 = vpop.xlane.xlu0 %753
  %755 = vmax.xlane.f32.xlu0 %v745
  %v756 = vpop.xlane.xlu0 %755
  %757 = vmax.xlane.f32.xlu0 %v746
  %v758 = vpop.xlane.xlu0 %757
  %759 = vmax.xlane.f32.xlu0 %v747
  %v760 = vpop.xlane.xlu0 %759
  %761 = vmax.xlane.f32.xlu0 %v748
  %v762 = vpop.xlane.xlu0 %761
  %763 = vmax.xlane.f32.xlu0 %v749
  %v764 = vpop.xlane.xlu0 %763
  %765 = vmax.xlane.f32.xlu0 %v750
  %v766 = vpop.xlane.xlu0 %765
  %v767 = vsub.f32 %v743, %v752
  %v768 = vsub.f32 %v744, %v754
  %v769 = vsub.f32 %v745, %v756
  %v770 = vsub.f32 %v746, %v758
  %v771 = vsub.f32 %v747, %v760
  %v772 = vsub.f32 %v748, %v762
  %v773 = vsub.f32 %v749, %v764
  %v774 = vsub.f32 %v750, %v766
  %v775 = vmul.f32 %v767, 1.442695
  %v776 = vpow.pop %v775
  %v777 = vmul.f32 %v768, 1.442695
  %v778 = vpow.pop %v777
  %v779 = vmul.f32 %v769, 1.442695
  %v780 = vpow.pop %v779
  %v781 = vmul.f32 %v770, 1.442695
  %v782 = vpow.pop %v781
  %v783 = vmul.f32 %v771, 1.442695
  %v784 = vpow.pop %v783
  %v785 = vmul.f32 %v772, 1.442695
  %v786 = vpow.pop %v785
  %v787 = vmul.f32 %v773, 1.442695
  %v788 = vpow.pop %v787
  %v789 = vmul.f32 %v774, 1.442695
  %v790 = vpow.pop %v789
  %791 = vadd.xlane.f32.xlu0 %v776
  %v792 = vpop.xlane.xlu0 %791
  %793 = vadd.xlane.f32.xlu0 %v778
  %v794 = vpop.xlane.xlu0 %793
  %795 = vadd.xlane.f32.xlu0 %v780
  %v796 = vpop.xlane.xlu0 %795
  %797 = vadd.xlane.f32.xlu0 %v782
  %v798 = vpop.xlane.xlu0 %797
  %799 = vadd.xlane.f32.xlu0 %v784
  %v800 = vpop.xlane.xlu0 %799
  %801 = vadd.xlane.f32.xlu0 %v786
  %v802 = vpop.xlane.xlu0 %801
  %803 = vadd.xlane.f32.xlu0 %v788
  %v804 = vpop.xlane.xlu0 %803
  %805 = vadd.xlane.f32.xlu0 %v790
  %v806 = vpop.xlane.xlu0 %805
  %v807 = vrcp.pop %v792
  %v808 = vrcp.pop %v794
  %v809 = vrcp.pop %v796
  %v810 = vrcp.pop %v798
  %v811 = vrcp.pop %v800
  %v812 = vrcp.pop %v802
  %v813 = vrcp.pop %v804
  %v814 = vrcp.pop %v806
  %v815 = vmul.f32 %v776, %v807
  %v816 = vmul.f32 %v778, %v808
  %v817 = vmul.f32 %v780, %v809
  %v818 = vmul.f32 %v782, %v810
  %v819 = vmul.f32 %v784, %v811
  %v820 = vmul.f32 %v786, %v812
  %v821 = vmul.f32 %v788, %v813
  %v822 = vmul.f32 %v790, %v814
  %v823 = vpack.c.bf16 %v816, %v815
  %v824 = vpack.c.bf16 %v818, %v817
  %v825 = vpack.c.bf16 %v820, %v819
  %v826 = vpack.c.bf16 %v822, %v821
  %s827 = scalar_lea.vmem %s5, 64
  %v828 = vld [vmem:[%s827] sm:$0xf]
  %v829 = vld [vmem:[%s827 + $0x4] sm:$0xf]
  %v830 = vld [vmem:[%s827 + $0x8] sm:$0xf]
  %v831 = vld [vmem:[%s827 + $0xc] sm:$0xf]
  %v832 = vld [vmem:[%s827 + $0x10] sm:$0xf]
  %v833 = vld [vmem:[%s827 + $0x14] sm:$0xf]
  %v834 = vld [vmem:[%s827 + $0x18] sm:$0xf]
  %v835 = vld [vmem:[%s827 + $0x1c] sm:$0xf]
  %v836 = vld [vmem:[%s827 + $0x20] sm:$0xf]
  %v837 = vld [vmem:[%s827 + $0x24] sm:$0xf]
  %v838 = vld [vmem:[%s827 + $0x28] sm:$0xf]
  %v839 = vld [vmem:[%s827 + $0x2c] sm:$0xf]
  %v840 = vld [vmem:[%s827 + $0x30] sm:$0xf]
  %v841 = vld [vmem:[%s827 + $0x34] sm:$0xf]
  %v842 = vld [vmem:[%s827 + $0x38] sm:$0xf]
  %v843 = vld [vmem:[%s827 + $0x3c] sm:$0xf]
  %v860 = vunpack.c.l.b16 %v828
  %v861 = vunpack.c.l.b16 %v829
  %v862 = vunpack.c.l.b16 %v830
  %v863 = vunpack.c.l.b16 %v831
  %v864 = vunpack.c.l.b16 %v832
  %v865 = vunpack.c.l.b16 %v833
  %v866 = vunpack.c.l.b16 %v834
  %v867 = vunpack.c.l.b16 %v835
  %v868 = vunpack.c.l.b16 %v836
  %v869 = vunpack.c.l.b16 %v837
  %v870 = vunpack.c.l.b16 %v838
  %v871 = vunpack.c.l.b16 %v839
  %v872 = vunpack.c.l.b16 %v840
  %v873 = vunpack.c.l.b16 %v841
  %v874 = vunpack.c.l.b16 %v842
  %v875 = vunpack.c.l.b16 %v843
  %v876 = vpack.c.b16 %v861, %v860
  %v877 = vpack.c.b16 %v863, %v862
  %v878 = vpack.c.b16 %v865, %v864
  %v879 = vpack.c.b16 %v867, %v866
  %v880 = vpack.c.b16 %v869, %v868
  %v881 = vpack.c.b16 %v871, %v870
  %v882 = vpack.c.b16 %v873, %v872
  %v883 = vpack.c.b16 %v875, %v874
  %892 = vmatprep.subr.bf16.mxu0 0
  %893 = vmatpush1.bf16.msra.mxu0 %v876
  %894 = vmatprep.subr.bf16.mxu0 0
  %895 = vmatpush1.bf16.msra.mxu0 %v877
  %896 = vmatprep.subr.bf16.mxu0 0
  %897 = vmatpush1.bf16.msra.mxu0 %v878
  %898 = vmatprep.subr.bf16.mxu0 0
  %899 = vmatpush1.bf16.msra.mxu0 %v879
  %900 = vmatprep.subr.bf16.mxu0 0
  %901 = vmatpush1.bf16.msra.mxu0 %v880
  %902 = vmatprep.subr.bf16.mxu0 0
  %903 = vmatpush1.bf16.msra.mxu0 %v881
  %904 = vmatprep.subr.bf16.mxu0 0
  %905 = vmatpush1.bf16.msra.mxu0 %v882
  %906 = vmatprep.subr.bf16.mxu0 0
  %907 = vmatpush1.bf16.msra.mxu0 %v883
  %908 = vmatprep.subr.bf16.mxu0 0
  %909 = vmatpush1.bf16.msra.mxu0 0
  %910 = vmatprep.subr.bf16.mxu0 0
  %911 = vmatpush1.bf16.msra.mxu0 0
  %912 = vmatprep.subr.bf16.mxu0 0
  %913 = vmatpush1.bf16.msra.mxu0 0
  %914 = vmatprep.subr.bf16.mxu0 0
  %915 = vmatpush1.bf16.msra.mxu0 0
  %916 = vmatprep.subr.bf16.mxu0 0
  %917 = vmatpush1.bf16.msra.mxu0 0
  %918 = vmatprep.subr.bf16.mxu0 0
  %919 = vmatpush1.bf16.msra.mxu0 0
  %920 = vmatprep.subr.bf16.mxu0 0
  %921 = vmatpush1.bf16.msra.mxu0 0
  %922 = vmatprep.subr.bf16.mxu0 0
  %923 = vmatpush1.bf16.msra.mxu0 0
  %924 = vmatprep.mubr.bf16.mxu0 0
  %925 = vmatmul.mubr.bf16.gmra.mrb[0].mxu0 %v823
  %v926 = vpop.f32.mrb[0].mxu0
  %v927 = vadd.f32 0.0, %v926
  %v928 = vpop.f32.mrb[0].mxu0
  %v929 = vpop.f32.mrb[0].mxu0
  %v930 = vadd.f32 0.0, %v929
  %v931 = vpop.f32.mrb[0].mxu0
  %932 = vmatprep.mubr.bf16.mxu0 0
  %933 = vmatmul.mubr.bf16.gmra.mrb[0].mxu0 %v824
  %v934 = vpop.f32.mrb[0].mxu0
  %v935 = vadd.f32 0.0, %v934
  %v936 = vpop.f32.mrb[0].mxu0
  %v937 = vpop.f32.mrb[0].mxu0
  %v938 = vadd.f32 0.0, %v937
  %v939 = vpop.f32.mrb[0].mxu0
  %940 = vmatprep.mubr.bf16.mxu0 0
  %941 = vmatmul.mubr.bf16.gmra.mrb[0].mxu0 %v825
  %v942 = vpop.f32.mrb[0].mxu0
  %v943 = vadd.f32 0.0, %v942
  %v944 = vpop.f32.mrb[0].mxu0
  %v945 = vpop.f32.mrb[0].mxu0
  %v946 = vadd.f32 0.0, %v945
  %v947 = vpop.f32.mrb[0].mxu0
  %948 = vmatprep.mubr.bf16.mxu0 0
  %949 = vmatmul.mubr.bf16.gmra.mrb[0].mxu0 %v826
  %v950 = vpop.f32.mrb[0].mxu0
  %v951 = vadd.f32 0.0, %v950
  %v952 = vpop.f32.mrb[0].mxu0
  %v953 = vpop.f32.mrb[0].mxu0
  %v954 = vadd.f32 0.0, %v953
  %v955 = vpop.f32.mrb[0].mxu0
  %956 = vdwg.mxu0
  %v957 = vpack.c.bf16 %v930, %v927
  %v958 = vpack.c.bf16 %v938, %v935
  %v959 = vpack.c.bf16 %v946, %v943
  %v960 = vpack.c.bf16 %v954, %v951
  %s961 = scalar_lea.vmem %s6, 8
  %v962 = vld [vmem:[%s961] sm:$0xff]
  %v964 = vunpack.c.l.b16 %v962
  %v965 = vunpack.c.h.b16 %v962
  %v966 = vpack.c.b16 %v964, %v964
  %v967 = vpack.c.b16 %v965, %v965
  %v969 = vsel %vm268, %v957, 0
  %v972 = vsel %vm268, %v958, 0
  %v975 = vsel %vm268, %v959, 0
  %v978 = vsel %vm268, %v960, 0
  %v981 = vsel %vm89, %v966, 0
  %v984 = vsel %vm89, %v967, 0
  %986 = vmatprep.subr.bf16.mxu0 %v984
  %987 = vmatpush1.bf16.msra.mxu0 %v981
  %988 = vmatprep.subr.bf16.mxu0 0
  %989 = vmatpush1.bf16.msra.mxu0 0
  %990 = vmatprep.subr.bf16.mxu0 0
  %991 = vmatpush1.bf16.msra.mxu0 0
  %992 = vmatprep.subr.bf16.mxu0 0
  %993 = vmatpush1.bf16.msra.mxu0 0
  %994 = vmatprep.subr.bf16.mxu0 0
  %995 = vmatpush1.bf16.msra.mxu0 0
  %996 = vmatprep.subr.bf16.mxu0 0
  %997 = vmatpush1.bf16.msra.mxu0 0
  %998 = vmatprep.subr.bf16.mxu0 0
  %999 = vmatpush1.bf16.msra.mxu0 0
  %1000 = vmatprep.subr.bf16.mxu0 0
  %1001 = vmatpush1.bf16.msra.mxu0 0
  %1002 = vmatprep.subr.bf16.mxu0 0
  %1003 = vmatpush1.bf16.msra.mxu0 0
  %1004 = vmatprep.subr.bf16.mxu0 0
  %1005 = vmatpush1.bf16.msra.mxu0 0
  %1006 = vmatprep.subr.bf16.mxu0 0
  %1007 = vmatpush1.bf16.msra.mxu0 0
  %1008 = vmatprep.subr.bf16.mxu0 0
  %1009 = vmatpush1.bf16.msra.mxu0 0
  %1010 = vmatprep.subr.bf16.mxu0 0
  %1011 = vmatpush1.bf16.msra.mxu0 0
  %1012 = vmatprep.subr.bf16.mxu0 0
  %1013 = vmatpush1.bf16.msra.mxu0 0
  %1014 = vmatprep.subr.bf16.mxu0 0
  %1015 = vmatpush1.bf16.msra.mxu0 0
  %1016 = vmatprep.subr.bf16.mxu0 0
  %1017 = vmatpush1.bf16.msra.mxu0 0
  %1018 = vmatprep.mubr.bf16.mxu0 0
  %1019 = vmatmul.mubr.bf16.gmra.mrb[0].mxu0 %v969
  %v1020 = vpop.f32.mrb[0].mxu0
  %v1021 = vadd.f32 0.0, %v1020
  %v1022 = vpop.f32.mrb[0].mxu0
  %v1023 = vadd.f32 0.0, %v1022
  %v1024 = vpop.f32.mrb[0].mxu0
  %v1025 = vadd.f32 0.0, %v1024
  %v1026 = vpop.f32.mrb[0].mxu0
  %v1027 = vadd.f32 0.0, %v1026
  %1028 = vmatprep.mubr.bf16.mxu0 0
  %1029 = vmatmul.mubr.bf16.gmra.mrb[0].mxu0 %v972
  %v1030 = vpop.f32.mrb[0].mxu0
  %v1031 = vadd.f32 0.0, %v1030
  %v1032 = vpop.f32.mrb[0].mxu0
  %v1033 = vadd.f32 0.0, %v1032
  %v1034 = vpop.f32.mrb[0].mxu0
  %v1035 = vadd.f32 0.0, %v1034
  %v1036 = vpop.f32.mrb[0].mxu0
  %v1037 = vadd.f32 0.0, %v1036
  %1038 = vmatprep.mubr.bf16.mxu0 0
  %1039 = vmatmul.mubr.bf16.gmra.mrb[0].mxu0 %v975
  %v1040 = vpop.f32.mrb[0].mxu0
  %v1041 = vadd.f32 0.0, %v1040
  %v1042 = vpop.f32.mrb[0].mxu0
  %v1043 = vadd.f32 0.0, %v1042
  %v1044 = vpop.f32.mrb[0].mxu0
  %v1045 = vadd.f32 0.0, %v1044
  %v1046 = vpop.f32.mrb[0].mxu0
  %v1047 = vadd.f32 0.0, %v1046
  %1048 = vmatprep.mubr.bf16.mxu0 0
  %1049 = vmatmul.mubr.bf16.gmra.mrb[0].mxu0 %v978
  %v1050 = vpop.f32.mrb[0].mxu0
  %v1051 = vadd.f32 0.0, %v1050
  %v1052 = vpop.f32.mrb[0].mxu0
  %v1053 = vadd.f32 0.0, %v1052
  %v1054 = vpop.f32.mrb[0].mxu0
  %v1055 = vadd.f32 0.0, %v1054
  %v1056 = vpop.f32.mrb[0].mxu0
  %v1057 = vadd.f32 0.0, %v1056
  %1058 = vdwg.mxu0
  %v1060 = vunpack.c.l.b16 %v566
  %v1061 = vunpack.c.h.b16 %v566
  %v1062 = vpack.c.b16 %v1060, %v1060
  %v1063 = vpack.c.b16 %v1061, %v1061
  %v1065 = vsel %vm268, %v562, 0
  %v1068 = vsel %vm268, %v563, 0
  %v1071 = vsel %vm268, %v564, 0
  %v1074 = vsel %vm268, %v565, 0
  %v1077 = vsel %vm89, %v1062, 0
  %v1080 = vsel %vm89, %v1063, 0
  %1082 = vmatprep.subr.bf16.mxu0 %v1080
  %1083 = vmatpush1.bf16.msra.mxu0 %v1077
  %1084 = vmatprep.subr.bf16.mxu0 0
  %1085 = vmatpush1.bf16.msra.mxu0 0
  %1086 = vmatprep.subr.bf16.mxu0 0
  %1087 = vmatpush1.bf16.msra.mxu0 0
  %1088 = vmatprep.subr.bf16.mxu0 0
  %1089 = vmatpush1.bf16.msra.mxu0 0
  %1090 = vmatprep.subr.bf16.mxu0 0
  %1091 = vmatpush1.bf16.msra.mxu0 0
  %1092 = vmatprep.subr.bf16.mxu0 0
  %1093 = vmatpush1.bf16.msra.mxu0 0
  %1094 = vmatprep.subr.bf16.mxu0 0
  %1095 = vmatpush1.bf16.msra.mxu0 0
  %1096 = vmatprep.subr.bf16.mxu0 0
  %1097 = vmatpush1.bf16.msra.mxu0 0
  %1098 = vmatprep.subr.bf16.mxu0 0
  %1099 = vmatpush1.bf16.msra.mxu0 0
  %1100 = vmatprep.subr.bf16.mxu0 0
  %1101 = vmatpush1.bf16.msra.mxu0 0
  %1102 = vmatprep.subr.bf16.mxu0 0
  %1103 = vmatpush1.bf16.msra.mxu0 0
  %1104 = vmatprep.subr.bf16.mxu0 0
  %1105 = vmatpush1.bf16.msra.mxu0 0
  %1106 = vmatprep.subr.bf16.mxu0 0
  %1107 = vmatpush1.bf16.msra.mxu0 0
  %1108 = vmatprep.subr.bf16.mxu0 0
  %1109 = vmatpush1.bf16.msra.mxu0 0
  %1110 = vmatprep.subr.bf16.mxu0 0
  %1111 = vmatpush1.bf16.msra.mxu0 0
  %1112 = vmatprep.subr.bf16.mxu0 0
  %1113 = vmatpush1.bf16.msra.mxu0 0
  %1114 = vmatprep.mubr.bf16.mxu0 0
  %1115 = vmatmul.mubr.bf16.gmra.mrb[0].mxu0 %v1065
  %v1116 = vpop.f32.mrb[0].mxu0
  %v1117 = vadd.f32 %v1021, %v1116
  %v1118 = vpop.f32.mrb[0].mxu0
  %v1119 = vadd.f32 %v1023, %v1118
  %v1120 = vpop.f32.mrb[0].mxu0
  %v1121 = vadd.f32 %v1025, %v1120
  %v1122 = vpop.f32.mrb[0].mxu0
  %v1123 = vadd.f32 %v1027, %v1122
  %1124 = vmatprep.mubr.bf16.mxu0 0
  %1125 = vmatmul.mubr.bf16.gmra.mrb[0].mxu0 %v1068
  %v1126 = vpop.f32.mrb[0].mxu0
  %v1127 = vadd.f32 %v1031, %v1126
  %v1128 = vpop.f32.mrb[0].mxu0
  %v1129 = vadd.f32 %v1033, %v1128
  %v1130 = vpop.f32.mrb[0].mxu0
  %v1131 = vadd.f32 %v1035, %v1130
  %v1132 = vpop.f32.mrb[0].mxu0
  %v1133 = vadd.f32 %v1037, %v1132
  %1134 = vmatprep.mubr.bf16.mxu0 0
  %1135 = vmatmul.mubr.bf16.gmra.mrb[0].mxu0 %v1071
  %v1136 = vpop.f32.mrb[0].mxu0
  %v1137 = vadd.f32 %v1041, %v1136
  %v1138 = vpop.f32.mrb[0].mxu0
  %v1139 = vadd.f32 %v1043, %v1138
  %v1140 = vpop.f32.mrb[0].mxu0
  %v1141 = vadd.f32 %v1045, %v1140
  %v1142 = vpop.f32.mrb[0].mxu0
  %v1143 = vadd.f32 %v1047, %v1142
  %1144 = vmatprep.mubr.bf16.mxu0 0
  %1145 = vmatmul.mubr.bf16.gmra.mrb[0].mxu0 %v1074
  %v1146 = vpop.f32.mrb[0].mxu0
  %v1147 = vadd.f32 %v1051, %v1146
  %v1148 = vpop.f32.mrb[0].mxu0
  %v1149 = vadd.f32 %v1053, %v1148
  %v1150 = vpop.f32.mrb[0].mxu0
  %v1151 = vadd.f32 %v1055, %v1150
  %v1152 = vpop.f32.mrb[0].mxu0
  %v1153 = vadd.f32 %v1057, %v1152
  %1154 = vdwg.mxu0
  %s1155 = scalar_lea.vmem %s2, 32
  %v1156 = vld [vmem:[%s1155] sm:$0xf]
  %v1157 = vld [vmem:[%s1155 + $0x4] sm:$0xf]
  %v1158 = vld [vmem:[%s1155 + $0x8] sm:$0xf]
  %v1159 = vld [vmem:[%s1155 + $0xc] sm:$0xf]
  %s1160 = scalar_lea.vmem %s3, 2
  %v1161 = vld [vmem:[%s1160] sm:$0x1]
  %v1163 = vlaneseq
  %v1164 = vshrl.u32 %v1163, 7
  %v1165 = vsub.s32 0, %v1164
  %v1166 = vrot.slane %v1161, %v1165
  %v1172 = vunpack.c.l.b16 %v1156
  %v1173 = vunpack.c.l.b16 %v1157
  %v1174 = vunpack.c.l.b16 %v1158
  %v1175 = vunpack.c.l.b16 %v1159
  %v1176 = vpack.c.b16 %v1173, %v1172
  %v1177 = vpack.c.b16 %v1175, %v1174
  %1180 = vmatprep.subr.bf16.mxu0 0
  %1181 = vmatpush1.bf16.msra.mxu0 %v1176
  %1182 = vmatprep.subr.bf16.mxu0 0
  %1183 = vmatpush1.bf16.msra.mxu0 %v1177
  %1184 = vmatprep.subr.bf16.mxu0 0
  %1185 = vmatpush1.bf16.msra.mxu0 0
  %1186 = vmatprep.subr.bf16.mxu0 0
  %1187 = vmatpush1.bf16.msra.mxu0 0
  %1188 = vmatprep.subr.bf16.mxu0 0
  %1189 = vmatpush1.bf16.msra.mxu0 0
  %1190 = vmatprep.subr.bf16.mxu0 0
  %1191 = vmatpush1.bf16.msra.mxu0 0
  %1192 = vmatprep.subr.bf16.mxu0 0
  %1193 = vmatpush1.bf16.msra.mxu0 0
  %1194 = vmatprep.subr.bf16.mxu0 0
  %1195 = vmatpush1.bf16.msra.mxu0 0
  %1196 = vmatprep.subr.bf16.mxu0 0
  %1197 = vmatpush1.bf16.msra.mxu0 0
  %1198 = vmatprep.subr.bf16.mxu0 0
  %1199 = vmatpush1.bf16.msra.mxu0 0
  %1200 = vmatprep.subr.bf16.mxu0 0
  %1201 = vmatpush1.bf16.msra.mxu0 0
  %1202 = vmatprep.subr.bf16.mxu0 0
  %1203 = vmatpush1.bf16.msra.mxu0 0
  %1204 = vmatprep.subr.bf16.mxu0 0
  %1205 = vmatpush1.bf16.msra.mxu0 0
  %1206 = vmatprep.subr.bf16.mxu0 0
  %1207 = vmatpush1.bf16.msra.mxu0 0
  %1208 = vmatprep.subr.bf16.mxu0 0
  %1209 = vmatpush1.bf16.msra.mxu0 0
  %1210 = vmatprep.subr.bf16.mxu0 0
  %1211 = vmatpush1.bf16.msra.mxu0 0
  %1212 = vmatprep.mubr.bf16.mxu0 0
  %1213 = vmatmul.mubr.bf16.gmra.mrb[0].mxu0 %v187
  %v1214 = vpop.f32.mrb[0].mxu0
  %v1215 = vadd.f32 %v1166, %v1214
  %v1216 = vpop.f32.mrb[0].mxu0
  %v1217 = vpop.f32.mrb[0].mxu0
  %v1218 = vadd.f32 %v1166, %v1217
  %v1219 = vpop.f32.mrb[0].mxu0
  %1220 = vmatprep.mubr.bf16.mxu0 0
  %1221 = vmatmul.mubr.bf16.gmra.mrb[0].mxu0 %v190
  %v1222 = vpop.f32.mrb[0].mxu0
  %v1223 = vadd.f32 %v1166, %v1222
  %v1224 = vpop.f32.mrb[0].mxu0
  %v1225 = vpop.f32.mrb[0].mxu0
  %v1226 = vadd.f32 %v1166, %v1225
  %v1227 = vpop.f32.mrb[0].mxu0
  %1228 = vmatprep.mubr.bf16.mxu0 0
  %1229 = vmatmul.mubr.bf16.gmra.mrb[0].mxu0 %v193
  %v1230 = vpop.f32.mrb[0].mxu0
  %v1231 = vadd.f32 %v1166, %v1230
  %v1232 = vpop.f32.mrb[0].mxu0
  %v1233 = vpop.f32.mrb[0].mxu0
  %v1234 = vadd.f32 %v1166, %v1233
  %v1235 = vpop.f32.mrb[0].mxu0
  %1236 = vmatprep.mubr.bf16.mxu0 0
  %1237 = vmatmul.mubr.bf16.gmra.mrb[0].mxu0 %v196
  %v1238 = vpop.f32.mrb[0].mxu0
  %v1239 = vadd.f32 %v1166, %v1238
  %v1240 = vpop.f32.mrb[0].mxu0
  %v1241 = vpop.f32.mrb[0].mxu0
  %v1242 = vadd.f32 %v1166, %v1241
  %v1243 = vpop.f32.mrb[0].mxu0
  %1244 = vdwg.mxu0
  %v1245 = vpack.c.bf16 %v1218, %v1215
  %v1246 = vpack.c.bf16 %v1226, %v1223
  %v1247 = vpack.c.bf16 %v1234, %v1231
  %v1248 = vpack.c.bf16 %v1242, %v1239
  %s1249 = scalar_lea.vmem %s4, 8
  %v1250 = vld [vmem:[%s1249] sm:$0xf]
  %v1252 = vsel %vm268, %v1245, 0
  %v1255 = vsel %vm268, %v1246, 0
  %v1258 = vsel %vm268, %v1247, 0
  %v1261 = vsel %vm268, %v1248, 0
  %v1264 = vsel %vm89, %v1250, 0
  %1266 = vmatprep.subr.bf16.mxu0 0
  %1267 = vmatpush1.bf16.msra.mxu0 %v1264
  %1268 = vmatprep.subr.bf16.mxu0 0
  %1269 = vmatpush1.bf16.msra.mxu0 0
  %1270 = vmatprep.subr.bf16.mxu0 0
  %1271 = vmatpush1.bf16.msra.mxu0 0
  %1272 = vmatprep.subr.bf16.mxu0 0
  %1273 = vmatpush1.bf16.msra.mxu0 0
  %1274 = vmatprep.subr.bf16.mxu0 0
  %1275 = vmatpush1.bf16.msra.mxu0 0
  %1276 = vmatprep.subr.bf16.mxu0 0
  %1277 = vmatpush1.bf16.msra.mxu0 0
  %1278 = vmatprep.subr.bf16.mxu0 0
  %1279 = vmatpush1.bf16.msra.mxu0 0
  %1280 = vmatprep.subr.bf16.mxu0 0
  %1281 = vmatpush1.bf16.msra.mxu0 0
  %1282 = vmatprep.subr.bf16.mxu0 0
  %1283 = vmatpush1.bf16.msra.mxu0 0
  %1284 = vmatprep.subr.bf16.mxu0 0
  %1285 = vmatpush1.bf16.msra.mxu0 0
  %1286 = vmatprep.subr.bf16.mxu0 0
  %1287 = vmatpush1.bf16.msra.mxu0 0
  %1288 = vmatprep.subr.bf16.mxu0 0
  %1289 = vmatpush1.bf16.msra.mxu0 0
  %1290 = vmatprep.subr.bf16.mxu0 0
  %1291 = vmatpush1.bf16.msra.mxu0 0
  %1292 = vmatprep.subr.bf16.mxu0 0
  %1293 = vmatpush1.bf16.msra.mxu0 0
  %1294 = vmatprep.subr.bf16.mxu0 0
  %1295 = vmatpush1.bf16.msra.mxu0 0
  %1296 = vmatprep.subr.bf16.mxu0 0
  %1297 = vmatpush1.bf16.msra.mxu0 0
  %1298 = vmatprep.mubr.bf16.mxu0 0
  %1299 = vmatmul.mubr.bf16.gmra.mrb[0].mxu0 %v1252
  %v1300 = vpop.f32.mrb[0].mxu0
  %v1301 = vadd.f32 0.0, %v1300
  %v1302 = vpop.f32.mrb[0].mxu0
  %v1303 = vpop.f32.mrb[0].mxu0
  %v1304 = vadd.f32 0.0, %v1303
  %v1305 = vpop.f32.mrb[0].mxu0
  %1306 = vmatprep.mubr.bf16.mxu0 0
  %1307 = vmatmul.mubr.bf16.gmra.mrb[0].mxu0 %v1255
  %v1308 = vpop.f32.mrb[0].mxu0
  %v1309 = vadd.f32 0.0, %v1308
  %v1310 = vpop.f32.mrb[0].mxu0
  %v1311 = vpop.f32.mrb[0].mxu0
  %v1312 = vadd.f32 0.0, %v1311
  %v1313 = vpop.f32.mrb[0].mxu0
  %1314 = vmatprep.mubr.bf16.mxu0 0
  %1315 = vmatmul.mubr.bf16.gmra.mrb[0].mxu0 %v1258
  %v1316 = vpop.f32.mrb[0].mxu0
  %v1317 = vadd.f32 0.0, %v1316
  %v1318 = vpop.f32.mrb[0].mxu0
  %v1319 = vpop.f32.mrb[0].mxu0
  %v1320 = vadd.f32 0.0, %v1319
  %v1321 = vpop.f32.mrb[0].mxu0
  %1322 = vmatprep.mubr.bf16.mxu0 0
  %1323 = vmatmul.mubr.bf16.gmra.mrb[0].mxu0 %v1261
  %v1324 = vpop.f32.mrb[0].mxu0
  %v1325 = vadd.f32 0.0, %v1324
  %v1326 = vpop.f32.mrb[0].mxu0
  %v1327 = vpop.f32.mrb[0].mxu0
  %v1328 = vadd.f32 0.0, %v1327
  %v1329 = vpop.f32.mrb[0].mxu0
  %1330 = vdwg.mxu0
  %v1331 = vmul.f32 %v1301, 0.35355338
  %v1332 = vmul.f32 %v1304, 0.35355338
  %v1333 = vmul.f32 %v1309, 0.35355338
  %v1334 = vmul.f32 %v1312, 0.35355338
  %v1335 = vmul.f32 %v1317, 0.35355338
  %v1336 = vmul.f32 %v1320, 0.35355338
  %v1337 = vmul.f32 %v1325, 0.35355338
  %v1338 = vmul.f32 %v1328, 0.35355338
  %1339 = vmax.xlane.f32.xlu0 %v1331
  %v1340 = vpop.xlane.xlu0 %1339
  %1341 = vmax.xlane.f32.xlu0 %v1332
  %v1342 = vpop.xlane.xlu0 %1341
  %1343 = vmax.xlane.f32.xlu0 %v1333
  %v1344 = vpop.xlane.xlu0 %1343
  %1345 = vmax.xlane.f32.xlu0 %v1334
  %v1346 = vpop.xlane.xlu0 %1345
  %1347 = vmax.xlane.f32.xlu0 %v1335
  %v1348 = vpop.xlane.xlu0 %1347
  %1349 = vmax.xlane.f32.xlu0 %v1336
  %v1350 = vpop.xlane.xlu0 %1349
  %1351 = vmax.xlane.f32.xlu0 %v1337
  %v1352 = vpop.xlane.xlu0 %1351
  %1353 = vmax.xlane.f32.xlu0 %v1338
  %v1354 = vpop.xlane.xlu0 %1353
  %v1355 = vsub.f32 %v1331, %v1340
  %v1356 = vsub.f32 %v1332, %v1342
  %v1357 = vsub.f32 %v1333, %v1344
  %v1358 = vsub.f32 %v1334, %v1346
  %v1359 = vsub.f32 %v1335, %v1348
  %v1360 = vsub.f32 %v1336, %v1350
  %v1361 = vsub.f32 %v1337, %v1352
  %v1362 = vsub.f32 %v1338, %v1354
  %v1363 = vmul.f32 %v1355, 1.442695
  %v1364 = vpow.pop %v1363
  %v1365 = vmul.f32 %v1356, 1.442695
  %v1366 = vpow.pop %v1365
  %v1367 = vmul.f32 %v1357, 1.442695
  %v1368 = vpow.pop %v1367
  %v1369 = vmul.f32 %v1358, 1.442695
  %v1370 = vpow.pop %v1369
  %v1371 = vmul.f32 %v1359, 1.442695
  %v1372 = vpow.pop %v1371
  %v1373 = vmul.f32 %v1360, 1.442695
  %v1374 = vpow.pop %v1373
  %v1375 = vmul.f32 %v1361, 1.442695
  %v1376 = vpow.pop %v1375
  %v1377 = vmul.f32 %v1362, 1.442695
  %v1378 = vpow.pop %v1377
  %1379 = vadd.xlane.f32.xlu0 %v1364
  %v1380 = vpop.xlane.xlu0 %1379
  %1381 = vadd.xlane.f32.xlu0 %v1366
  %v1382 = vpop.xlane.xlu0 %1381
  %1383 = vadd.xlane.f32.xlu0 %v1368
  %v1384 = vpop.xlane.xlu0 %1383
  %1385 = vadd.xlane.f32.xlu0 %v1370
  %v1386 = vpop.xlane.xlu0 %1385
  %1387 = vadd.xlane.f32.xlu0 %v1372
  %v1388 = vpop.xlane.xlu0 %1387
  %1389 = vadd.xlane.f32.xlu0 %v1374
  %v1390 = vpop.xlane.xlu0 %1389
  %1391 = vadd.xlane.f32.xlu0 %v1376
  %v1392 = vpop.xlane.xlu0 %1391
  %1393 = vadd.xlane.f32.xlu0 %v1378
  %v1394 = vpop.xlane.xlu0 %1393
  %v1395 = vrcp.pop %v1380
  %v1396 = vrcp.pop %v1382
  %v1397 = vrcp.pop %v1384
  %v1398 = vrcp.pop %v1386
  %v1399 = vrcp.pop %v1388
  %v1400 = vrcp.pop %v1390
  %v1401 = vrcp.pop %v1392
  %v1402 = vrcp.pop %v1394
  %v1403 = vmul.f32 %v1364, %v1395
  %v1404 = vmul.f32 %v1366, %v1396
  %v1405 = vmul.f32 %v1368, %v1397
  %v1406 = vmul.f32 %v1370, %v1398
  %v1407 = vmul.f32 %v1372, %v1399
  %v1408 = vmul.f32 %v1374, %v1400
  %v1409 = vmul.f32 %v1376, %v1401
  %v1410 = vmul.f32 %v1378, %v1402
  %v1411 = vpack.c.bf16 %v1404, %v1403
  %v1412 = vpack.c.bf16 %v1406, %v1405
  %v1413 = vpack.c.bf16 %v1408, %v1407
  %v1414 = vpack.c.bf16 %v1410, %v1409
  %s1415 = scalar_lea.vmem %s5, 128
  %v1416 = vld [vmem:[%s1415] sm:$0xf]
  %v1417 = vld [vmem:[%s1415 + $0x4] sm:$0xf]
  %v1418 = vld [vmem:[%s1415 + $0x8] sm:$0xf]
  %v1419 = vld [vmem:[%s1415 + $0xc] sm:$0xf]
  %v1420 = vld [vmem:[%s1415 + $0x10] sm:$0xf]
  %v1421 = vld [vmem:[%s1415 + $0x14] sm:$0xf]
  %v1422 = vld [vmem:[%s1415 + $0x18] sm:$0xf]
  %v1423 = vld [vmem:[%s1415 + $0x1c] sm:$0xf]
  %v1424 = vld [vmem:[%s1415 + $0x20] sm:$0xf]
  %v1425 = vld [vmem:[%s1415 + $0x24] sm:$0xf]
  %v1426 = vld [vmem:[%s1415 + $0x28] sm:$0xf]
  %v1427 = vld [vmem:[%s1415 + $0x2c] sm:$0xf]
  %v1428 = vld [vmem:[%s1415 + $0x30] sm:$0xf]
  %v1429 = vld [vmem:[%s1415 + $0x34] sm:$0xf]
  %v1430 = vld [vmem:[%s1415 + $0x38] sm:$0xf]
  %v1431 = vld [vmem:[%s1415 + $0x3c] sm:$0xf]
  %v1448 = vunpack.c.l.b16 %v1416
  %v1449 = vunpack.c.l.b16 %v1417
  %v1450 = vunpack.c.l.b16 %v1418
  %v1451 = vunpack.c.l.b16 %v1419
  %v1452 = vunpack.c.l.b16 %v1420
  %v1453 = vunpack.c.l.b16 %v1421
  %v1454 = vunpack.c.l.b16 %v1422
  %v1455 = vunpack.c.l.b16 %v1423
  %v1456 = vunpack.c.l.b16 %v1424
  %v1457 = vunpack.c.l.b16 %v1425
  %v1458 = vunpack.c.l.b16 %v1426
  %v1459 = vunpack.c.l.b16 %v1427
  %v1460 = vunpack.c.l.b16 %v1428
  %v1461 = vunpack.c.l.b16 %v1429
  %v1462 = vunpack.c.l.b16 %v1430
  %v1463 = vunpack.c.l.b16 %v1431
  %v1464 = vpack.c.b16 %v1449, %v1448
  %v1465 = vpack.c.b16 %v1451, %v1450
  %v1466 = vpack.c.b16 %v1453, %v1452
  %v1467 = vpack.c.b16 %v1455, %v1454
  %v1468 = vpack.c.b16 %v1457, %v1456
  %v1469 = vpack.c.b16 %v1459, %v1458
  %v1470 = vpack.c.b16 %v1461, %v1460
  %v1471 = vpack.c.b16 %v1463, %v1462
  %1480 = vmatprep.subr.bf16.mxu0 0
  %1481 = vmatpush1.bf16.msra.mxu0 %v1464
  %1482 = vmatprep.subr.bf16.mxu0 0
  %1483 = vmatpush1.bf16.msra.mxu0 %v1465
  %1484 = vmatprep.subr.bf16.mxu0 0
  %1485 = vmatpush1.bf16.msra.mxu0 %v1466
  %1486 = vmatprep.subr.bf16.mxu0 0
  %1487 = vmatpush1.bf16.msra.mxu0 %v1467
  %1488 = vmatprep.subr.bf16.mxu0 0
  %1489 = vmatpush1.bf16.msra.mxu0 %v1468
  %1490 = vmatprep.subr.bf16.mxu0 0
  %1491 = vmatpush1.bf16.msra.mxu0 %v1469
  %1492 = vmatprep.subr.bf16.mxu0 0
  %1493 = vmatpush1.bf16.msra.mxu0 %v1470
  %1494 = vmatprep.subr.bf16.mxu0 0
  %1495 = vmatpush1.bf16.msra.mxu0 %v1471
  %1496 = vmatprep.subr.bf16.mxu0 0
  %1497 = vmatpush1.bf16.msra.mxu0 0
  %1498 = vmatprep.subr.bf16.mxu0 0
  %1499 = vmatpush1.bf16.msra.mxu0 0
  %1500 = vmatprep.subr.bf16.mxu0 0
  %1501 = vmatpush1.bf16.msra.mxu0 0
  %1502 = vmatprep.subr.bf16.mxu0 0
  %1503 = vmatpush1.bf16.msra.mxu0 0
  %1504 = vmatprep.subr.bf16.mxu0 0
  %1505 = vmatpush1.bf16.msra.mxu0 0
  %1506 = vmatprep.subr.bf16.mxu0 0
  %1507 = vmatpush1.bf16.msra.mxu0 0
  %1508 = vmatprep.subr.bf16.mxu0 0
  %1509 = vmatpush1.bf16.msra.mxu0 0
  %1510 = vmatprep.subr.bf16.mxu0 0
  %1511 = vmatpush1.bf16.msra.mxu0 0
  %1512 = vmatprep.mubr.bf16.mxu0 0
  %1513 = vmatmul.mubr.bf16.gmra.mrb[0].mxu0 %v1411
  %v1514 = vpop.f32.mrb[0].mxu0
  %v1515 = vadd.f32 0.0, %v1514
  %v1516 = vpop.f32.mrb[0].mxu0
  %v1517 = vpop.f32.mrb[0].mxu0
  %v1518 = vadd.f32 0.0, %v1517
  %v1519 = vpop.f32.mrb[0].mxu0
  %1520 = vmatprep.mubr.bf16.mxu0 0
  %1521 = vmatmul.mubr.bf16.gmra.mrb[0].mxu0 %v1412
  %v1522 = vpop.f32.mrb[0].mxu0
  %v1523 = vadd.f32 0.0, %v1522
  %v1524 = vpop.f32.mrb[0].mxu0
  %v1525 = vpop.f32.mrb[0].mxu0
  %v1526 = vadd.f32 0.0, %v1525
  %v1527 = vpop.f32.mrb[0].mxu0
  %1528 = vmatprep.mubr.bf16.mxu0 0
  %1529 = vmatmul.mubr.bf16.gmra.mrb[0].mxu0 %v1413
  %v1530 = vpop.f32.mrb[0].mxu0
  %v1531 = vadd.f32 0.0, %v1530
  %v1532 = vpop.f32.mrb[0].mxu0
  %v1533 = vpop.f32.mrb[0].mxu0
  %v1534 = vadd.f32 0.0, %v1533
  %v1535 = vpop.f32.mrb[0].mxu0
  %1536 = vmatprep.mubr.bf16.mxu0 0
  %1537 = vmatmul.mubr.bf16.gmra.mrb[0].mxu0 %v1414
  %v1538 = vpop.f32.mrb[0].mxu0
  %v1539 = vadd.f32 0.0, %v1538
  %v1540 = vpop.f32.mrb[0].mxu0
  %v1541 = vpop.f32.mrb[0].mxu0
  %v1542 = vadd.f32 0.0, %v1541
  %v1543 = vpop.f32.mrb[0].mxu0
  %1544 = vdwg.mxu0
  %v1545 = vpack.c.bf16 %v1518, %v1515
  %v1546 = vpack.c.bf16 %v1526, %v1523
  %v1547 = vpack.c.bf16 %v1534, %v1531
  %v1548 = vpack.c.bf16 %v1542, %v1539
  %s1549 = scalar_lea.vmem %s6, 16
  %v1550 = vld [vmem:[%s1549] sm:$0xff]
  %v1552 = vunpack.c.l.b16 %v1550
  %v1553 = vunpack.c.h.b16 %v1550
  %v1554 = vpack.c.b16 %v1552, %v1552
  %v1555 = vpack.c.b16 %v1553, %v1553
  %v1557 = vsel %vm268, %v1545, 0
  %v1560 = vsel %vm268, %v1546, 0
  %v1563 = vsel %vm268, %v1547, 0
  %v1566 = vsel %vm268, %v1548, 0
  %v1569 = vsel %vm89, %v1554, 0
  %v1572 = vsel %vm89, %v1555, 0
  %1574 = vmatprep.subr.bf16.mxu0 %v1572
  %1575 = vmatpush1.bf16.msra.mxu0 %v1569
  %1576 = vmatprep.subr.bf16.mxu0 0
  %1577 = vmatpush1.bf16.msra.mxu0 0
  %1578 = vmatprep.subr.bf16.mxu0 0
  %1579 = vmatpush1.bf16.msra.mxu0 0
  %1580 = vmatprep.subr.bf16.mxu0 0
  %1581 = vmatpush1.bf16.msra.mxu0 0
  %1582 = vmatprep.subr.bf16.mxu0 0
  %1583 = vmatpush1.bf16.msra.mxu0 0
  %1584 = vmatprep.subr.bf16.mxu0 0
  %1585 = vmatpush1.bf16.msra.mxu0 0
  %1586 = vmatprep.subr.bf16.mxu0 0
  %1587 = vmatpush1.bf16.msra.mxu0 0
  %1588 = vmatprep.subr.bf16.mxu0 0
  %1589 = vmatpush1.bf16.msra.mxu0 0
  %1590 = vmatprep.subr.bf16.mxu0 0
  %1591 = vmatpush1.bf16.msra.mxu0 0
  %1592 = vmatprep.subr.bf16.mxu0 0
  %1593 = vmatpush1.bf16.msra.mxu0 0
  %1594 = vmatprep.subr.bf16.mxu0 0
  %1595 = vmatpush1.bf16.msra.mxu0 0
  %1596 = vmatprep.subr.bf16.mxu0 0
  %1597 = vmatpush1.bf16.msra.mxu0 0
  %1598 = vmatprep.subr.bf16.mxu0 0
  %1599 = vmatpush1.bf16.msra.mxu0 0
  %1600 = vmatprep.subr.bf16.mxu0 0
  %1601 = vmatpush1.bf16.msra.mxu0 0
  %1602 = vmatprep.subr.bf16.mxu0 0
  %1603 = vmatpush1.bf16.msra.mxu0 0
  %1604 = vmatprep.subr.bf16.mxu0 0
  %1605 = vmatpush1.bf16.msra.mxu0 0
  %1606 = vmatprep.mubr.bf16.mxu0 0
  %1607 = vmatmul.mubr.bf16.gmra.mrb[0].mxu0 %v1557
  %v1608 = vpop.f32.mrb[0].mxu0
  %v1609 = vadd.f32 0.0, %v1608
  %v1610 = vpop.f32.mrb[0].mxu0
  %v1611 = vadd.f32 0.0, %v1610
  %v1612 = vpop.f32.mrb[0].mxu0
  %v1613 = vadd.f32 0.0, %v1612
  %v1614 = vpop.f32.mrb[0].mxu0
  %v1615 = vadd.f32 0.0, %v1614
  %1616 = vmatprep.mubr.bf16.mxu0 0
  %1617 = vmatmul.mubr.bf16.gmra.mrb[0].mxu0 %v1560
  %v1618 = vpop.f32.mrb[0].mxu0
  %v1619 = vadd.f32 0.0, %v1618
  %v1620 = vpop.f32.mrb[0].mxu0
  %v1621 = vadd.f32 0.0, %v1620
  %v1622 = vpop.f32.mrb[0].mxu0
  %v1623 = vadd.f32 0.0, %v1622
  %v1624 = vpop.f32.mrb[0].mxu0
  %v1625 = vadd.f32 0.0, %v1624
  %1626 = vmatprep.mubr.bf16.mxu0 0
  %1627 = vmatmul.mubr.bf16.gmra.mrb[0].mxu0 %v1563
  %v1628 = vpop.f32.mrb[0].mxu0
  %v1629 = vadd.f32 0.0, %v1628
  %v1630 = vpop.f32.mrb[0].mxu0
  %v1631 = vadd.f32 0.0, %v1630
  %v1632 = vpop.f32.mrb[0].mxu0
  %v1633 = vadd.f32 0.0, %v1632
  %v1634 = vpop.f32.mrb[0].mxu0
  %v1635 = vadd.f32 0.0, %v1634
  %1636 = vmatprep.mubr.bf16.mxu0 0
  %1637 = vmatmul.mubr.bf16.gmra.mrb[0].mxu0 %v1566
  %v1638 = vpop.f32.mrb[0].mxu0
  %v1639 = vadd.f32 0.0, %v1638
  %v1640 = vpop.f32.mrb[0].mxu0
  %v1641 = vadd.f32 0.0, %v1640
  %v1642 = vpop.f32.mrb[0].mxu0
  %v1643 = vadd.f32 0.0, %v1642
  %v1644 = vpop.f32.mrb[0].mxu0
  %v1645 = vadd.f32 0.0, %v1644
  %1646 = vdwg.mxu0
  %v1647 = vadd.f32 %v1117, %v1609
  %v1648 = vadd.f32 %v1119, %v1611
  %v1649 = vadd.f32 %v1121, %v1613
  %v1650 = vadd.f32 %v1123, %v1615
  %v1651 = vadd.f32 %v1127, %v1619
  %v1652 = vadd.f32 %v1129, %v1621
  %v1653 = vadd.f32 %v1131, %v1623
  %v1654 = vadd.f32 %v1133, %v1625
  %v1655 = vadd.f32 %v1137, %v1629
  %v1656 = vadd.f32 %v1139, %v1631
  %v1657 = vadd.f32 %v1141, %v1633
  %v1658 = vadd.f32 %v1143, %v1635
  %v1659 = vadd.f32 %v1147, %v1639
  %v1660 = vadd.f32 %v1149, %v1641
  %v1661 = vadd.f32 %v1151, %v1643
  %v1662 = vadd.f32 %v1153, %v1645
  %s1663 = scalar_lea.vmem %s2, 48
  %v1664 = vld [vmem:[%s1663] sm:$0xf]
  %v1665 = vld [vmem:[%s1663 + $0x4] sm:$0xf]
  %v1666 = vld [vmem:[%s1663 + $0x8] sm:$0xf]
  %v1667 = vld [vmem:[%s1663 + $0xc] sm:$0xf]
  %s1668 = scalar_lea.vmem %s3, 3
  %v1669 = vld [vmem:[%s1668] sm:$0x1]
  %v1671 = vlaneseq
  %v1672 = vshrl.u32 %v1671, 7
  %v1673 = vsub.s32 0, %v1672
  %v1674 = vrot.slane %v1669, %v1673
  %v1680 = vunpack.c.l.b16 %v1664
  %v1681 = vunpack.c.l.b16 %v1665
  %v1682 = vunpack.c.l.b16 %v1666
  %v1683 = vunpack.c.l.b16 %v1667
  %v1684 = vpack.c.b16 %v1681, %v1680
  %v1685 = vpack.c.b16 %v1683, %v1682
  %1688 = vmatprep.subr.bf16.mxu0 0
  %1689 = vmatpush1.bf16.msra.mxu0 %v1684
  %1690 = vmatprep.subr.bf16.mxu0 0
  %1691 = vmatpush1.bf16.msra.mxu0 %v1685
  %1692 = vmatprep.subr.bf16.mxu0 0
  %1693 = vmatpush1.bf16.msra.mxu0 0
  %1694 = vmatprep.subr.bf16.mxu0 0
  %1695 = vmatpush1.bf16.msra.mxu0 0
  %1696 = vmatprep.subr.bf16.mxu0 0
  %1697 = vmatpush1.bf16.msra.mxu0 0
  %1698 = vmatprep.subr.bf16.mxu0 0
  %1699 = vmatpush1.bf16.msra.mxu0 0
  %1700 = vmatprep.subr.bf16.mxu0 0
  %1701 = vmatpush1.bf16.msra.mxu0 0
  %1702 = vmatprep.subr.bf16.mxu0 0
  %1703 = vmatpush1.bf16.msra.mxu0 0
  %1704 = vmatprep.subr.bf16.mxu0 0
  %1705 = vmatpush1.bf16.msra.mxu0 0
  %1706 = vmatprep.subr.bf16.mxu0 0
  %1707 = vmatpush1.bf16.msra.mxu0 0
  %1708 = vmatprep.subr.bf16.mxu0 0
  %1709 = vmatpush1.bf16.msra.mxu0 0
  %1710 = vmatprep.subr.bf16.mxu0 0
  %1711 = vmatpush1.bf16.msra.mxu0 0
  %1712 = vmatprep.subr.bf16.mxu0 0
  %1713 = vmatpush1.bf16.msra.mxu0 0
  %1714 = vmatprep.subr.bf16.mxu0 0
  %1715 = vmatpush1.bf16.msra.mxu0 0
  %1716 = vmatprep.subr.bf16.mxu0 0
  %1717 = vmatpush1.bf16.msra.mxu0 0
  %1718 = vmatprep.subr.bf16.mxu0 0
  %1719 = vmatpush1.bf16.msra.mxu0 0
  %1720 = vmatprep.mubr.bf16.mxu0 0
  %1721 = vmatmul.mubr.bf16.gmra.mrb[0].mxu0 %v187
  %v1722 = vpop.f32.mrb[0].mxu0
  %v1723 = vadd.f32 %v1674, %v1722
  %v1724 = vpop.f32.mrb[0].mxu0
  %v1725 = vpop.f32.mrb[0].mxu0
  %v1726 = vadd.f32 %v1674, %v1725
  %v1727 = vpop.f32.mrb[0].mxu0
  %1728 = vmatprep.mubr.bf16.mxu0 0
  %1729 = vmatmul.mubr.bf16.gmra.mrb[0].mxu0 %v190
  %v1730 = vpop.f32.mrb[0].mxu0
  %v1731 = vadd.f32 %v1674, %v1730
  %v1732 = vpop.f32.mrb[0].mxu0
  %v1733 = vpop.f32.mrb[0].mxu0
  %v1734 = vadd.f32 %v1674, %v1733
  %v1735 = vpop.f32.mrb[0].mxu0
  %1736 = vmatprep.mubr.bf16.mxu0 0
  %1737 = vmatmul.mubr.bf16.gmra.mrb[0].mxu0 %v193
  %v1738 = vpop.f32.mrb[0].mxu0
  %v1739 = vadd.f32 %v1674, %v1738
  %v1740 = vpop.f32.mrb[0].mxu0
  %v1741 = vpop.f32.mrb[0].mxu0
  %v1742 = vadd.f32 %v1674, %v1741
  %v1743 = vpop.f32.mrb[0].mxu0
  %1744 = vmatprep.mubr.bf16.mxu0 0
  %1745 = vmatmul.mubr.bf16.gmra.mrb[0].mxu0 %v196
  %v1746 = vpop.f32.mrb[0].mxu0
  %v1747 = vadd.f32 %v1674, %v1746
  %v1748 = vpop.f32.mrb[0].mxu0
  %v1749 = vpop.f32.mrb[0].mxu0
  %v1750 = vadd.f32 %v1674, %v1749
  %v1751 = vpop.f32.mrb[0].mxu0
  %1752 = vdwg.mxu0
  %v1753 = vpack.c.bf16 %v1726, %v1723
  %v1754 = vpack.c.bf16 %v1734, %v1731
  %v1755 = vpack.c.bf16 %v1742, %v1739
  %v1756 = vpack.c.bf16 %v1750, %v1747
  %s1757 = scalar_lea.vmem %s4, 12
  %v1758 = vld [vmem:[%s1757] sm:$0xf]
  %v1760 = vsel %vm268, %v1753, 0
  %v1763 = vsel %vm268, %v1754, 0
  %v1766 = vsel %vm268, %v1755, 0
  %v1769 = vsel %vm268, %v1756, 0
  %v1772 = vsel %vm89, %v1758, 0
  %1774 = vmatprep.subr.bf16.mxu0 0
  %1775 = vmatpush1.bf16.msra.mxu0 %v1772
  %1776 = vmatprep.subr.bf16.mxu0 0
  %1777 = vmatpush1.bf16.msra.mxu0 0
  %1778 = vmatprep.subr.bf16.mxu0 0
  %1779 = vmatpush1.bf16.msra.mxu0 0
  %1780 = vmatprep.subr.bf16.mxu0 0
  %1781 = vmatpush1.bf16.msra.mxu0 0
  %1782 = vmatprep.subr.bf16.mxu0 0
  %1783 = vmatpush1.bf16.msra.mxu0 0
  %1784 = vmatprep.subr.bf16.mxu0 0
  %1785 = vmatpush1.bf16.msra.mxu0 0
  %1786 = vmatprep.subr.bf16.mxu0 0
  %1787 = vmatpush1.bf16.msra.mxu0 0
  %1788 = vmatprep.subr.bf16.mxu0 0
  %1789 = vmatpush1.bf16.msra.mxu0 0
  %1790 = vmatprep.subr.bf16.mxu0 0
  %1791 = vmatpush1.bf16.msra.mxu0 0
  %1792 = vmatprep.subr.bf16.mxu0 0
  %1793 = vmatpush1.bf16.msra.mxu0 0
  %1794 = vmatprep.subr.bf16.mxu0 0
  %1795 = vmatpush1.bf16.msra.mxu0 0
  %1796 = vmatprep.subr.bf16.mxu0 0
  %1797 = vmatpush1.bf16.msra.mxu0 0
  %1798 = vmatprep.subr.bf16.mxu0 0
  %1799 = vmatpush1.bf16.msra.mxu0 0
  %1800 = vmatprep.subr.bf16.mxu0 0
  %1801 = vmatpush1.bf16.msra.mxu0 0
  %1802 = vmatprep.subr.bf16.mxu0 0
  %1803 = vmatpush1.bf16.msra.mxu0 0
  %1804 = vmatprep.subr.bf16.mxu0 0
  %1805 = vmatpush1.bf16.msra.mxu0 0
  %1806 = vmatprep.mubr.bf16.mxu0 0
  %1807 = vmatmul.mubr.bf16.gmra.mrb[0].mxu0 %v1760
  %v1808 = vpop.f32.mrb[0].mxu0
  %v1809 = vadd.f32 0.0, %v1808
  %v1810 = vpop.f32.mrb[0].mxu0
  %v1811 = vpop.f32.mrb[0].mxu0
  %v1812 = vadd.f32 0.0, %v1811
  %v1813 = vpop.f32.mrb[0].mxu0
  %1814 = vmatprep.mubr.bf16.mxu0 0
  %1815 = vmatmul.mubr.bf16.gmra.mrb[0].mxu0 %v1763
  %v1816 = vpop.f32.mrb[0].mxu0
  %v1817 = vadd.f32 0.0, %v1816
  %v1818 = vpop.f32.mrb[0].mxu0
  %v1819 = vpop.f32.mrb[0].mxu0
  %v1820 = vadd.f32 0.0, %v1819
  %v1821 = vpop.f32.mrb[0].mxu0
  %1822 = vmatprep.mubr.bf16.mxu0 0
  %1823 = vmatmul.mubr.bf16.gmra.mrb[0].mxu0 %v1766
  %v1824 = vpop.f32.mrb[0].mxu0
  %v1825 = vadd.f32 0.0, %v1824
  %v1826 = vpop.f32.mrb[0].mxu0
  %v1827 = vpop.f32.mrb[0].mxu0
  %v1828 = vadd.f32 0.0, %v1827
  %v1829 = vpop.f32.mrb[0].mxu0
  %1830 = vmatprep.mubr.bf16.mxu0 0
  %1831 = vmatmul.mubr.bf16.gmra.mrb[0].mxu0 %v1769
  %v1832 = vpop.f32.mrb[0].mxu0
  %v1833 = vadd.f32 0.0, %v1832
  %v1834 = vpop.f32.mrb[0].mxu0
  %v1835 = vpop.f32.mrb[0].mxu0
  %v1836 = vadd.f32 0.0, %v1835
  %v1837 = vpop.f32.mrb[0].mxu0
  %1838 = vdwg.mxu0
  %v1839 = vmul.f32 %v1809, 0.35355338
  %v1840 = vmul.f32 %v1812, 0.35355338
  %v1841 = vmul.f32 %v1817, 0.35355338
  %v1842 = vmul.f32 %v1820, 0.35355338
  %v1843 = vmul.f32 %v1825, 0.35355338
  %v1844 = vmul.f32 %v1828, 0.35355338
  %v1845 = vmul.f32 %v1833, 0.35355338
  %v1846 = vmul.f32 %v1836, 0.35355338
  %1847 = vmax.xlane.f32.xlu0 %v1839
  %v1848 = vpop.xlane.xlu0 %1847
  %1849 = vmax.xlane.f32.xlu0 %v1840
  %v1850 = vpop.xlane.xlu0 %1849
  %1851 = vmax.xlane.f32.xlu0 %v1841
  %v1852 = vpop.xlane.xlu0 %1851
  %1853 = vmax.xlane.f32.xlu0 %v1842
  %v1854 = vpop.xlane.xlu0 %1853
  %1855 = vmax.xlane.f32.xlu0 %v1843
  %v1856 = vpop.xlane.xlu0 %1855
  %1857 = vmax.xlane.f32.xlu0 %v1844
  %v1858 = vpop.xlane.xlu0 %1857
  %1859 = vmax.xlane.f32.xlu0 %v1845
  %v1860 = vpop.xlane.xlu0 %1859
  %1861 = vmax.xlane.f32.xlu0 %v1846
  %v1862 = vpop.xlane.xlu0 %1861
  %v1863 = vsub.f32 %v1839, %v1848
  %v1864 = vsub.f32 %v1840, %v1850
  %v1865 = vsub.f32 %v1841, %v1852
  %v1866 = vsub.f32 %v1842, %v1854
  %v1867 = vsub.f32 %v1843, %v1856
  %v1868 = vsub.f32 %v1844, %v1858
  %v1869 = vsub.f32 %v1845, %v1860
  %v1870 = vsub.f32 %v1846, %v1862
  %v1871 = vmul.f32 %v1863, 1.442695
  %v1872 = vpow.pop %v1871
  %v1873 = vmul.f32 %v1864, 1.442695
  %v1874 = vpow.pop %v1873
  %v1875 = vmul.f32 %v1865, 1.442695
  %v1876 = vpow.pop %v1875
  %v1877 = vmul.f32 %v1866, 1.442695
  %v1878 = vpow.pop %v1877
  %v1879 = vmul.f32 %v1867, 1.442695
  %v1880 = vpow.pop %v1879
  %v1881 = vmul.f32 %v1868, 1.442695
  %v1882 = vpow.pop %v1881
  %v1883 = vmul.f32 %v1869, 1.442695
  %v1884 = vpow.pop %v1883
  %v1885 = vmul.f32 %v1870, 1.442695
  %v1886 = vpow.pop %v1885
  %1887 = vadd.xlane.f32.xlu0 %v1872
  %v1888 = vpop.xlane.xlu0 %1887
  %1889 = vadd.xlane.f32.xlu0 %v1874
  %v1890 = vpop.xlane.xlu0 %1889
  %1891 = vadd.xlane.f32.xlu0 %v1876
  %v1892 = vpop.xlane.xlu0 %1891
  %1893 = vadd.xlane.f32.xlu0 %v1878
  %v1894 = vpop.xlane.xlu0 %1893
  %1895 = vadd.xlane.f32.xlu0 %v1880
  %v1896 = vpop.xlane.xlu0 %1895
  %1897 = vadd.xlane.f32.xlu0 %v1882
  %v1898 = vpop.xlane.xlu0 %1897
  %1899 = vadd.xlane.f32.xlu0 %v1884
  %v1900 = vpop.xlane.xlu0 %1899
  %1901 = vadd.xlane.f32.xlu0 %v1886
  %v1902 = vpop.xlane.xlu0 %1901
  %v1903 = vrcp.pop %v1888
  %v1904 = vrcp.pop %v1890
  %v1905 = vrcp.pop %v1892
  %v1906 = vrcp.pop %v1894
  %v1907 = vrcp.pop %v1896
  %v1908 = vrcp.pop %v1898
  %v1909 = vrcp.pop %v1900
  %v1910 = vrcp.pop %v1902
  %v1911 = vmul.f32 %v1872, %v1903
  %v1912 = vmul.f32 %v1874, %v1904
  %v1913 = vmul.f32 %v1876, %v1905
  %v1914 = vmul.f32 %v1878, %v1906
  %v1915 = vmul.f32 %v1880, %v1907
  %v1916 = vmul.f32 %v1882, %v1908
  %v1917 = vmul.f32 %v1884, %v1909
  %v1918 = vmul.f32 %v1886, %v1910
  %v1919 = vpack.c.bf16 %v1912, %v1911
  %v1920 = vpack.c.bf16 %v1914, %v1913
  %v1921 = vpack.c.bf16 %v1916, %v1915
  %v1922 = vpack.c.bf16 %v1918, %v1917
  %s1923 = scalar_lea.vmem %s5, 192
  %v1924 = vld [vmem:[%s1923] sm:$0xf]
  %v1925 = vld [vmem:[%s1923 + $0x4] sm:$0xf]
  %v1926 = vld [vmem:[%s1923 + $0x8] sm:$0xf]
  %v1927 = vld [vmem:[%s1923 + $0xc] sm:$0xf]
  %v1928 = vld [vmem:[%s1923 + $0x10] sm:$0xf]
  %v1929 = vld [vmem:[%s1923 + $0x14] sm:$0xf]
  %v1930 = vld [vmem:[%s1923 + $0x18] sm:$0xf]
  %v1931 = vld [vmem:[%s1923 + $0x1c] sm:$0xf]
  %v1932 = vld [vmem:[%s1923 + $0x20] sm:$0xf]
  %v1933 = vld [vmem:[%s1923 + $0x24] sm:$0xf]
  %v1934 = vld [vmem:[%s1923 + $0x28] sm:$0xf]
  %v1935 = vld [vmem:[%s1923 + $0x2c] sm:$0xf]
  %v1936 = vld [vmem:[%s1923 + $0x30] sm:$0xf]
  %v1937 = vld [vmem:[%s1923 + $0x34] sm:$0xf]
  %v1938 = vld [vmem:[%s1923 + $0x38] sm:$0xf]
  %v1939 = vld [vmem:[%s1923 + $0x3c] sm:$0xf]
  %v1956 = vunpack.c.l.b16 %v1924
  %v1957 = vunpack.c.l.b16 %v1925
  %v1958 = vunpack.c.l.b16 %v1926
  %v1959 = vunpack.c.l.b16 %v1927
  %v1960 = vunpack.c.l.b16 %v1928
  %v1961 = vunpack.c.l.b16 %v1929
  %v1962 = vunpack.c.l.b16 %v1930
  %v1963 = vunpack.c.l.b16 %v1931
  %v1964 = vunpack.c.l.b16 %v1932
  %v1965 = vunpack.c.l.b16 %v1933
  %v1966 = vunpack.c.l.b16 %v1934
  %v1967 = vunpack.c.l.b16 %v1935
  %v1968 = vunpack.c.l.b16 %v1936
  %v1969 = vunpack.c.l.b16 %v1937
  %v1970 = vunpack.c.l.b16 %v1938
  %v1971 = vunpack.c.l.b16 %v1939
  %v1972 = vpack.c.b16 %v1957, %v1956
  %v1973 = vpack.c.b16 %v1959, %v1958
  %v1974 = vpack.c.b16 %v1961, %v1960
  %v1975 = vpack.c.b16 %v1963, %v1962
  %v1976 = vpack.c.b16 %v1965, %v1964
  %v1977 = vpack.c.b16 %v1967, %v1966
  %v1978 = vpack.c.b16 %v1969, %v1968
  %v1979 = vpack.c.b16 %v1971, %v1970
  %1988 = vmatprep.subr.bf16.mxu0 0
  %1989 = vmatpush1.bf16.msra.mxu0 %v1972
  %1990 = vmatprep.subr.bf16.mxu0 0
  %1991 = vmatpush1.bf16.msra.mxu0 %v1973
  %1992 = vmatprep.subr.bf16.mxu0 0
  %1993 = vmatpush1.bf16.msra.mxu0 %v1974
  %1994 = vmatprep.subr.bf16.mxu0 0
  %1995 = vmatpush1.bf16.msra.mxu0 %v1975
  %1996 = vmatprep.subr.bf16.mxu0 0
  %1997 = vmatpush1.bf16.msra.mxu0 %v1976
  %1998 = vmatprep.subr.bf16.mxu0 0
  %1999 = vmatpush1.bf16.msra.mxu0 %v1977
  %2000 = vmatprep.subr.bf16.mxu0 0
  %2001 = vmatpush1.bf16.msra.mxu0 %v1978
  %2002 = vmatprep.subr.bf16.mxu0 0
  %2003 = vmatpush1.bf16.msra.mxu0 %v1979
  %2004 = vmatprep.subr.bf16.mxu0 0
  %2005 = vmatpush1.bf16.msra.mxu0 0
  %2006 = vmatprep.subr.bf16.mxu0 0
  %2007 = vmatpush1.bf16.msra.mxu0 0
  %2008 = vmatprep.subr.bf16.mxu0 0
  %2009 = vmatpush1.bf16.msra.mxu0 0
  %2010 = vmatprep.subr.bf16.mxu0 0
  %2011 = vmatpush1.bf16.msra.mxu0 0
  %2012 = vmatprep.subr.bf16.mxu0 0
  %2013 = vmatpush1.bf16.msra.mxu0 0
  %2014 = vmatprep.subr.bf16.mxu0 0
  %2015 = vmatpush1.bf16.msra.mxu0 0
  %2016 = vmatprep.subr.bf16.mxu0 0
  %2017 = vmatpush1.bf16.msra.mxu0 0
  %2018 = vmatprep.subr.bf16.mxu0 0
  %2019 = vmatpush1.bf16.msra.mxu0 0
  %2020 = vmatprep.mubr.bf16.mxu0 0
  %2021 = vmatmul.mubr.bf16.gmra.mrb[0].mxu0 %v1919
  %v2022 = vpop.f32.mrb[0].mxu0
  %v2023 = vadd.f32 0.0, %v2022
  %v2024 = vpop.f32.mrb[0].mxu0
  %v2025 = vpop.f32.mrb[0].mxu0
  %v2026 = vadd.f32 0.0, %v2025
  %v2027 = vpop.f32.mrb[0].mxu0
  %2028 = vmatprep.mubr.bf16.mxu0 0
  %2029 = vmatmul.mubr.bf16.gmra.mrb[0].mxu0 %v1920
  %v2030 = vpop.f32.mrb[0].mxu0
  %v2031 = vadd.f32 0.0, %v2030
  %v2032 = vpop.f32.mrb[0].mxu0
  %v2033 = vpop.f32.mrb[0].mxu0
  %v2034 = vadd.f32 0.0, %v2033
  %v2035 = vpop.f32.mrb[0].mxu0
  %2036 = vmatprep.mubr.bf16.mxu0 0
  %2037 = vmatmul.mubr.bf16.gmra.mrb[0].mxu0 %v1921
  %v2038 = vpop.f32.mrb[0].mxu0
  %v2039 = vadd.f32 0.0, %v2038
  %v2040 = vpop.f32.mrb[0].mxu0
  %v2041 = vpop.f32.mrb[0].mxu0
  %v2042 = vadd.f32 0.0, %v2041
  %v2043 = vpop.f32.mrb[0].mxu0
  %2044 = vmatprep.mubr.bf16.mxu0 0
  %2045 = vmatmul.mubr.bf16.gmra.mrb[0].mxu0 %v1922
  %v2046 = vpop.f32.mrb[0].mxu0
  %v2047 = vadd.f32 0.0, %v2046
  %v2048 = vpop.f32.mrb[0].mxu0
  %v2049 = vpop.f32.mrb[0].mxu0
  %v2050 = vadd.f32 0.0, %v2049
  %v2051 = vpop.f32.mrb[0].mxu0
  %2052 = vdwg.mxu0
  %v2053 = vpack.c.bf16 %v2026, %v2023
  %v2054 = vpack.c.bf16 %v2034, %v2031
  %v2055 = vpack.c.bf16 %v2042, %v2039
  %v2056 = vpack.c.bf16 %v2050, %v2047
  %s2057 = scalar_lea.vmem %s6, 24
  %v2058 = vld [vmem:[%s2057] sm:$0xff]
  %v2060 = vunpack.c.l.b16 %v2058
  %v2061 = vunpack.c.h.b16 %v2058
  %v2062 = vpack.c.b16 %v2060, %v2060
  %v2063 = vpack.c.b16 %v2061, %v2061
  %v2065 = vsel %vm268, %v2053, 0
  %v2068 = vsel %vm268, %v2054, 0
  %v2071 = vsel %vm268, %v2055, 0
  %v2074 = vsel %vm268, %v2056, 0
  %v2077 = vsel %vm89, %v2062, 0
  %v2080 = vsel %vm89, %v2063, 0
  %2082 = vmatprep.subr.bf16.mxu0 %v2080
  %2083 = vmatpush1.bf16.msra.mxu0 %v2077
  %2084 = vmatprep.subr.bf16.mxu0 0
  %2085 = vmatpush1.bf16.msra.mxu0 0
  %2086 = vmatprep.subr.bf16.mxu0 0
  %2087 = vmatpush1.bf16.msra.mxu0 0
  %2088 = vmatprep.subr.bf16.mxu0 0
  %2089 = vmatpush1.bf16.msra.mxu0 0
  %2090 = vmatprep.subr.bf16.mxu0 0
  %2091 = vmatpush1.bf16.msra.mxu0 0
  %2092 = vmatprep.subr.bf16.mxu0 0
  %2093 = vmatpush1.bf16.msra.mxu0 0
  %2094 = vmatprep.subr.bf16.mxu0 0
  %2095 = vmatpush1.bf16.msra.mxu0 0
  %2096 = vmatprep.subr.bf16.mxu0 0
  %2097 = vmatpush1.bf16.msra.mxu0 0
  %2098 = vmatprep.subr.bf16.mxu0 0
  %2099 = vmatpush1.bf16.msra.mxu0 0
  %2100 = vmatprep.subr.bf16.mxu0 0
  %2101 = vmatpush1.bf16.msra.mxu0 0
  %2102 = vmatprep.subr.bf16.mxu0 0
  %2103 = vmatpush1.bf16.msra.mxu0 0
  %2104 = vmatprep.subr.bf16.mxu0 0
  %2105 = vmatpush1.bf16.msra.mxu0 0
  %2106 = vmatprep.subr.bf16.mxu0 0
  %2107 = vmatpush1.bf16.msra.mxu0 0
  %2108 = vmatprep.subr.bf16.mxu0 0
  %2109 = vmatpush1.bf16.msra.mxu0 0
  %2110 = vmatprep.subr.bf16.mxu0 0
  %2111 = vmatpush1.bf16.msra.mxu0 0
  %2112 = vmatprep.subr.bf16.mxu0 0
  %2113 = vmatpush1.bf16.msra.mxu0 0
  %2114 = vmatprep.mubr.bf16.mxu0 0
  %2115 = vmatmul.mubr.bf16.gmra.mrb[0].mxu0 %v2065
  %v2116 = vpop.f32.mrb[0].mxu0
  %v2117 = vadd.f32 0.0, %v2116
  %v2118 = vpop.f32.mrb[0].mxu0
  %v2119 = vadd.f32 0.0, %v2118
  %v2120 = vpop.f32.mrb[0].mxu0
  %v2121 = vadd.f32 0.0, %v2120
  %v2122 = vpop.f32.mrb[0].mxu0
  %v2123 = vadd.f32 0.0, %v2122
  %2124 = vmatprep.mubr.bf16.mxu0 0
  %2125 = vmatmul.mubr.bf16.gmra.mrb[0].mxu0 %v2068
  %v2126 = vpop.f32.mrb[0].mxu0
  %v2127 = vadd.f32 0.0, %v2126
  %v2128 = vpop.f32.mrb[0].mxu0
  %v2129 = vadd.f32 0.0, %v2128
  %v2130 = vpop.f32.mrb[0].mxu0
  %v2131 = vadd.f32 0.0, %v2130
  %v2132 = vpop.f32.mrb[0].mxu0
  %v2133 = vadd.f32 0.0, %v2132
  %2134 = vmatprep.mubr.bf16.mxu0 0
  %2135 = vmatmul.mubr.bf16.gmra.mrb[0].mxu0 %v2071
  %v2136 = vpop.f32.mrb[0].mxu0
  %v2137 = vadd.f32 0.0, %v2136
  %v2138 = vpop.f32.mrb[0].mxu0
  %v2139 = vadd.f32 0.0, %v2138
  %v2140 = vpop.f32.mrb[0].mxu0
  %v2141 = vadd.f32 0.0, %v2140
  %v2142 = vpop.f32.mrb[0].mxu0
  %v2143 = vadd.f32 0.0, %v2142
  %2144 = vmatprep.mubr.bf16.mxu0 0
  %2145 = vmatmul.mubr.bf16.gmra.mrb[0].mxu0 %v2074
  %v2146 = vpop.f32.mrb[0].mxu0
  %v2147 = vadd.f32 0.0, %v2146
  %v2148 = vpop.f32.mrb[0].mxu0
  %v2149 = vadd.f32 0.0, %v2148
  %v2150 = vpop.f32.mrb[0].mxu0
  %v2151 = vadd.f32 0.0, %v2150
  %v2152 = vpop.f32.mrb[0].mxu0
  %v2153 = vadd.f32 0.0, %v2152
  %2154 = vdwg.mxu0
  %v2155 = vadd.f32 %v1647, %v2117
  %v2156 = vadd.f32 %v1648, %v2119
  %v2157 = vadd.f32 %v1649, %v2121
  %v2158 = vadd.f32 %v1650, %v2123
  %v2159 = vadd.f32 %v1651, %v2127
  %v2160 = vadd.f32 %v1652, %v2129
  %v2161 = vadd.f32 %v1653, %v2131
  %v2162 = vadd.f32 %v1654, %v2133
  %v2163 = vadd.f32 %v1655, %v2137
  %v2164 = vadd.f32 %v1656, %v2139
  %v2165 = vadd.f32 %v1657, %v2141
  %v2166 = vadd.f32 %v1658, %v2143
  %v2167 = vadd.f32 %v1659, %v2147
  %v2168 = vadd.f32 %v1660, %v2149
  %v2169 = vadd.f32 %v1661, %v2151
  %v2170 = vadd.f32 %v1662, %v2153
  %v2171 = vld [vmem:[%s7] sm:$0x3]
  %v2173 = vlaneseq
  %v2174 = vshrl.u32 %v2173, 7
  %v2175 = vsub.s32 0, %v2174
  %v2176 = vrot.slane %v2171, %v2175
  %v2177 = vlaneseq
  %v2178 = vshrl.u32 %v2177, 7
  %v2179 = vsub.s32 1, %v2178
  %v2180 = vrot.slane %v2171, %v2179
  %v2183 = vadd.f32 %v2155, %v2176
  %v2184 = vadd.f32 %v2156, %v2180
  %v2185 = vadd.f32 %v2157, %v2176
  %v2186 = vadd.f32 %v2158, %v2180
  %v2187 = vadd.f32 %v2159, %v2176
  %v2188 = vadd.f32 %v2160, %v2180
  %v2189 = vadd.f32 %v2161, %v2176
  %v2190 = vadd.f32 %v2162, %v2180
  %v2191 = vadd.f32 %v2163, %v2176
  %v2192 = vadd.f32 %v2164, %v2180
  %v2193 = vadd.f32 %v2165, %v2176
  %v2194 = vadd.f32 %v2166, %v2180
  %v2195 = vadd.f32 %v2167, %v2176
  %v2196 = vadd.f32 %v2168, %v2180
  %v2197 = vadd.f32 %v2169, %v2176
  %v2198 = vadd.f32 %v2170, %v2180
  %v2199 = vpack.c.bf16 %v2183, %v2183
  %v2200 = vpack.c.bf16 %v2184, %v2184
  %v2201 = vld [vmem:[%s8] sm:$0xf]
  %v2202 = vld [vmem:[%s8 + $0x4] sm:$0xf]
  %v2203 = vld [vmem:[%s8 + $0x8] sm:$0xf]
  %v2204 = vld [vmem:[%s8 + $0xc] sm:$0xf]
  %v2205 = vld [vmem:[%s8 + $0x10] sm:$0xf]
  %v2206 = vld [vmem:[%s8 + $0x14] sm:$0xf]
  %v2207 = vld [vmem:[%s8 + $0x18] sm:$0xf]
  %v2208 = vld [vmem:[%s8 + $0x1c] sm:$0xf]
  %v2209 = vld [vmem:[%s8 + $0x20] sm:$0xf]
  %v2210 = vld [vmem:[%s8 + $0x24] sm:$0xf]
  %v2211 = vld [vmem:[%s8 + $0x28] sm:$0xf]
  %v2212 = vld [vmem:[%s8 + $0x2c] sm:$0xf]
  %v2213 = vld [vmem:[%s8 + $0x30] sm:$0xf]
  %v2214 = vld [vmem:[%s8 + $0x34] sm:$0xf]
  %v2215 = vld [vmem:[%s8 + $0x38] sm:$0xf]
  %v2216 = vld [vmem:[%s8 + $0x3c] sm:$0xf]
  %v2217 = vld [vmem:[%s8 + $0x40] sm:$0xf]
  %v2218 = vld [vmem:[%s8 + $0x44] sm:$0xf]
  %v2219 = vld [vmem:[%s8 + $0x48] sm:$0xf]
  %v2220 = vld [vmem:[%s8 + $0x4c] sm:$0xf]
  %v2221 = vld [vmem:[%s8 + $0x50] sm:$0xf]
  %v2222 = vld [vmem:[%s8 + $0x54] sm:$0xf]
  %v2223 = vld [vmem:[%s8 + $0x58] sm:$0xf]
  %v2224 = vld [vmem:[%s8 + $0x5c] sm:$0xf]
  %v2225 = vld [vmem:[%s8 + $0x60] sm:$0xf]
  %v2226 = vld [vmem:[%s8 + $0x64] sm:$0xf]
  %v2227 = vld [vmem:[%s8 + $0x68] sm:$0xf]
  %v2228 = vld [vmem:[%s8 + $0x6c] sm:$0xf]
  %v2229 = vld [vmem:[%s8 + $0x70] sm:$0xf]
  %v2230 = vld [vmem:[%s8 + $0x74] sm:$0xf]
  %v2231 = vld [vmem:[%s8 + $0x78] sm:$0xf]
  %v2232 = vld [vmem:[%s8 + $0x7c] sm:$0xf]
  %v2233 = vpack.c.bf16 %v2185, %v2185
  %v2234 = vpack.c.bf16 %v2186, %v2186
  %s2235 = scalar_lea.vmem %s8, 128
  %v2236 = vld [vmem:[%s2235] sm:$0xf]
  %v2237 = vld [vmem:[%s2235 + $0x4] sm:$0xf]
  %v2238 = vld [vmem:[%s2235 + $0x8] sm:$0xf]
  %v2239 = vld [vmem:[%s2235 + $0xc] sm:$0xf]
  %v2240 = vld [vmem:[%s2235 + $0x10] sm:$0xf]
  %v2241 = vld [vmem:[%s2235 + $0x14] sm:$0xf]
  %v2242 = vld [vmem:[%s2235 + $0x18] sm:$0xf]
  %v2243 = vld [vmem:[%s2235 + $0x1c] sm:$0xf]
  %v2244 = vld [vmem:[%s2235 + $0x20] sm:$0xf]
  %v2245 = vld [vmem:[%s2235 + $0x24] sm:$0xf]
  %v2246 = vld [vmem:[%s2235 + $0x28] sm:$0xf]
  %v2247 = vld [vmem:[%s2235 + $0x2c] sm:$0xf]
  %v2248 = vld [vmem:[%s2235 + $0x30] sm:$0xf]
  %v2249 = vld [vmem:[%s2235 + $0x34] sm:$0xf]
  %v2250 = vld [vmem:[%s2235 + $0x38] sm:$0xf]
  %v2251 = vld [vmem:[%s2235 + $0x3c] sm:$0xf]
  %v2252 = vld [vmem:[%s2235 + $0x40] sm:$0xf]
  %v2253 = vld [vmem:[%s2235 + $0x44] sm:$0xf]
  %v2254 = vld [vmem:[%s2235 + $0x48] sm:$0xf]
  %v2255 = vld [vmem:[%s2235 + $0x4c] sm:$0xf]
  %v2256 = vld [vmem:[%s2235 + $0x50] sm:$0xf]
  %v2257 = vld [vmem:[%s2235 + $0x54] sm:$0xf]
  %v2258 = vld [vmem:[%s2235 + $0x58] sm:$0xf]
  %v2259 = vld [vmem:[%s2235 + $0x5c] sm:$0xf]
  %v2260 = vld [vmem:[%s2235 + $0x60] sm:$0xf]
  %v2261 = vld [vmem:[%s2235 + $0x64] sm:$0xf]
  %v2262 = vld [vmem:[%s2235 + $0x68] sm:$0xf]
  %v2263 = vld [vmem:[%s2235 + $0x6c] sm:$0xf]
  %v2264 = vld [vmem:[%s2235 + $0x70] sm:$0xf]
  %v2265 = vld [vmem:[%s2235 + $0x74] sm:$0xf]
  %v2266 = vld [vmem:[%s2235 + $0x78] sm:$0xf]
  %v2267 = vld [vmem:[%s2235 + $0x7c] sm:$0xf]
  %v2300 = vunpack.c.l.b16 %v2236
  %v2301 = vunpack.c.l.b16 %v2237
  %v2302 = vunpack.c.l.b16 %v2238
  %v2303 = vunpack.c.l.b16 %v2239
  %v2304 = vunpack.c.l.b16 %v2240
  %v2305 = vunpack.c.l.b16 %v2241
  %v2306 = vunpack.c.l.b16 %v2242
  %v2307 = vunpack.c.l.b16 %v2243
  %v2308 = vunpack.c.l.b16 %v2244
  %v2309 = vunpack.c.l.b16 %v2245
  %v2310 = vunpack.c.l.b16 %v2246
  %v2311 = vunpack.c.l.b16 %v2247
  %v2312 = vunpack.c.l.b16 %v2248
  %v2313 = vunpack.c.l.b16 %v2249
  %v2314 = vunpack.c.l.b16 %v2250
  %v2315 = vunpack.c.l.b16 %v2251
  %v2316 = vunpack.c.l.b16 %v2252
  %v2317 = vunpack.c.l.b16 %v2253
  %v2318 = vunpack.c.l.b16 %v2254
  %v2319 = vunpack.c.l.b16 %v2255
  %v2320 = vunpack.c.l.b16 %v2256
  %v2321 = vunpack.c.l.b16 %v2257
  %v2322 = vunpack.c.l.b16 %v2258
  %v2323 = vunpack.c.l.b16 %v2259
  %v2324 = vunpack.c.l.b16 %v2260
  %v2325 = vunpack.c.l.b16 %v2261
  %v2326 = vunpack.c.l.b16 %v2262
  %v2327 = vunpack.c.l.b16 %v2263
  %v2328 = vunpack.c.l.b16 %v2264
  %v2329 = vunpack.c.l.b16 %v2265
  %v2330 = vunpack.c.l.b16 %v2266
  %v2331 = vunpack.c.l.b16 %v2267
  %v2332 = vpack.c.b16 %v2301, %v2300
  %v2333 = vpack.c.b16 %v2303, %v2302
  %v2334 = vpack.c.b16 %v2305, %v2304
  %v2335 = vpack.c.b16 %v2307, %v2306
  %v2336 = vpack.c.b16 %v2309, %v2308
  %v2337 = vpack.c.b16 %v2311, %v2310
  %v2338 = vpack.c.b16 %v2313, %v2312
  %v2339 = vpack.c.b16 %v2315, %v2314
  %v2340 = vpack.c.b16 %v2317, %v2316
  %v2341 = vpack.c.b16 %v2319, %v2318
  %v2342 = vpack.c.b16 %v2321, %v2320
  %v2343 = vpack.c.b16 %v2323, %v2322
  %v2344 = vpack.c.b16 %v2325, %v2324
  %v2345 = vpack.c.b16 %v2327, %v2326
  %v2346 = vpack.c.b16 %v2329, %v2328
  %v2347 = vpack.c.b16 %v2331, %v2330
  %2364 = vmatprep.subr.bf16.mxu0 0
  %2365 = vmatpush1.bf16.msra.mxu0 %v2332
  %2366 = vmatprep.subr.bf16.mxu0 0
  %2367 = vmatpush1.bf16.msra.mxu0 %v2333
  %2368 = vmatprep.subr.bf16.mxu0 0
  %2369 = vmatpush1.bf16.msra.mxu0 %v2334
  %2370 = vmatprep.subr.bf16.mxu0 0
  %2371 = vmatpush1.bf16.msra.mxu0 %v2335
  %2372 = vmatprep.subr.bf16.mxu0 0
  %2373 = vmatpush1.bf16.msra.mxu0 %v2336
  %2374 = vmatprep.subr.bf16.mxu0 0
  %2375 = vmatpush1.bf16.msra.mxu0 %v2337
  %2376 = vmatprep.subr.bf16.mxu0 0
  %2377 = vmatpush1.bf16.msra.mxu0 %v2338
  %2378 = vmatprep.subr.bf16.mxu0 0
  %2379 = vmatpush1.bf16.msra.mxu0 %v2339
  %2380 = vmatprep.subr.bf16.mxu0 0
  %2381 = vmatpush1.bf16.msra.mxu0 %v2340
  %2382 = vmatprep.subr.bf16.mxu0 0
  %2383 = vmatpush1.bf16.msra.mxu0 %v2341
  %2384 = vmatprep.subr.bf16.mxu0 0
  %2385 = vmatpush1.bf16.msra.mxu0 %v2342
  %2386 = vmatprep.subr.bf16.mxu0 0
  %2387 = vmatpush1.bf16.msra.mxu0 %v2343
  %2388 = vmatprep.subr.bf16.mxu0 0
  %2389 = vmatpush1.bf16.msra.mxu0 %v2344
  %2390 = vmatprep.subr.bf16.mxu0 0
  %2391 = vmatpush1.bf16.msra.mxu0 %v2345
  %2392 = vmatprep.subr.bf16.mxu0 0
  %2393 = vmatpush1.bf16.msra.mxu0 %v2346
  %2394 = vmatprep.subr.bf16.mxu0 0
  %2395 = vmatpush1.bf16.msra.mxu0 %v2347
  %2396 = vmatprep.mubr.bf16.mxu0 %v2234
  %2397 = vmatmul.mubr.bf16.gmra.mrb[0].mxu0 %v2233
  %v2398 = vpop.f32.mrb[0].mxu0
  %v2399 = vadd.f32 0.0, %v2398
  %v2400 = vpop.f32.mrb[0].mxu0
  %v2401 = vpop.f32.mrb[0].mxu0
  %v2402 = vpop.f32.mrb[0].mxu0
  %2403 = vdwg.mxu0
  %v2436 = vunpack.c.l.b16 %v2201
  %v2437 = vunpack.c.l.b16 %v2202
  %v2438 = vunpack.c.l.b16 %v2203
  %v2439 = vunpack.c.l.b16 %v2204
  %v2440 = vunpack.c.l.b16 %v2205
  %v2441 = vunpack.c.l.b16 %v2206
  %v2442 = vunpack.c.l.b16 %v2207
  %v2443 = vunpack.c.l.b16 %v2208
  %v2444 = vunpack.c.l.b16 %v2209
  %v2445 = vunpack.c.l.b16 %v2210
  %v2446 = vunpack.c.l.b16 %v2211
  %v2447 = vunpack.c.l.b16 %v2212
  %v2448 = vunpack.c.l.b16 %v2213
  %v2449 = vunpack.c.l.b16 %v2214
  %v2450 = vunpack.c.l.b16 %v2215
  %v2451 = vunpack.c.l.b16 %v2216
  %v2452 = vunpack.c.l.b16 %v2217
  %v2453 = vunpack.c.l.b16 %v2218
  %v2454 = vunpack.c.l.b16 %v2219
  %v2455 = vunpack.c.l.b16 %v2220
  %v2456 = vunpack.c.l.b16 %v2221
  %v2457 = vunpack.c.l.b16 %v2222
  %v2458 = vunpack.c.l.b16 %v2223
  %v2459 = vunpack.c.l.b16 %v2224
  %v2460 = vunpack.c.l.b16 %v2225
  %v2461 = vunpack.c.l.b16 %v2226
  %v2462 = vunpack.c.l.b16 %v2227
  %v2463 = vunpack.c.l.b16 %v2228
  %v2464 = vunpack.c.l.b16 %v2229
  %v2465 = vunpack.c.l.b16 %v2230
  %v2466 = vunpack.c.l.b16 %v2231
  %v2467 = vunpack.c.l.b16 %v2232
  %v2468 = vpack.c.b16 %v2437, %v2436
  %v2469 = vpack.c.b16 %v2439, %v2438
  %v2470 = vpack.c.b16 %v2441, %v2440
  %v2471 = vpack.c.b16 %v2443, %v2442
  %v2472 = vpack.c.b16 %v2445, %v2444
  %v2473 = vpack.c.b16 %v2447, %v2446
  %v2474 = vpack.c.b16 %v2449, %v2448
  %v2475 = vpack.c.b16 %v2451, %v2450
  %v2476 = vpack.c.b16 %v2453, %v2452
  %v2477 = vpack.c.b16 %v2455, %v2454
  %v2478 = vpack.c.b16 %v2457, %v2456
  %v2479 = vpack.c.b16 %v2459, %v2458
  %v2480 = vpack.c.b16 %v2461, %v2460
  %v2481 = vpack.c.b16 %v2463, %v2462
  %v2482 = vpack.c.b16 %v2465, %v2464
  %v2483 = vpack.c.b16 %v2467, %v2466
  %2500 = vmatprep.subr.bf16.mxu0 0
  %2501 = vmatpush1.bf16.msra.mxu0 %v2468
  %2502 = vmatprep.subr.bf16.mxu0 0
  %2503 = vmatpush1.bf16.msra.mxu0 %v2469
  %2504 = vmatprep.subr.bf16.mxu0 0
  %2505 = vmatpush1.bf16.msra.mxu0 %v2470
  %2506 = vmatprep.subr.bf16.mxu0 0
  %2507 = vmatpush1.bf16.msra.mxu0 %v2471
  %2508 = vmatprep.subr.bf16.mxu0 0
  %2509 = vmatpush1.bf16.msra.mxu0 %v2472
  %2510 = vmatprep.subr.bf16.mxu0 0
  %2511 = vmatpush1.bf16.msra.mxu0 %v2473
  %2512 = vmatprep.subr.bf16.mxu0 0
  %2513 = vmatpush1.bf16.msra.mxu0 %v2474
  %2514 = vmatprep.subr.bf16.mxu0 0
  %2515 = vmatpush1.bf16.msra.mxu0 %v2475
  %2516 = vmatprep.subr.bf16.mxu0 0
  %2517 = vmatpush1.bf16.msra.mxu0 %v2476
  %2518 = vmatprep.subr.bf16.mxu0 0
  %2519 = vmatpush1.bf16.msra.mxu0 %v2477
  %2520 = vmatprep.subr.bf16.mxu0 0
  %2521 = vmatpush1.bf16.msra.mxu0 %v2478
  %2522 = vmatprep.subr.bf16.mxu0 0
  %2523 = vmatpush1.bf16.msra.mxu0 %v2479
  %2524 = vmatprep.subr.bf16.mxu0 0
  %2525 = vmatpush1.bf16.msra.mxu0 %v2480
  %2526 = vmatprep.subr.bf16.mxu0 0
  %2527 = vmatpush1.bf16.msra.mxu0 %v2481
  %2528 = vmatprep.subr.bf16.mxu0 0
  %2529 = vmatpush1.bf16.msra.mxu0 %v2482
  %2530 = vmatprep.subr.bf16.mxu0 0
  %2531 = vmatpush1.bf16.msra.mxu0 %v2483
  %2532 = vmatprep.mubr.bf16.mxu0 %v2200
  %2533 = vmatmul.mubr.bf16.gmra.mrb[0].mxu0 %v2199
  %v2534 = vpop.f32.mrb[0].mxu0
  %v2535 = vadd.f32 %v2399, %v2534
  %v2536 = vpop.f32.mrb[0].mxu0
  %v2537 = vpop.f32.mrb[0].mxu0
  %v2538 = vpop.f32.mrb[0].mxu0
  %2539 = vdwg.mxu0
  %v2540 = vpack.c.bf16 %v2187, %v2187
  %v2541 = vpack.c.bf16 %v2188, %v2188
  %s2542 = scalar_lea.vmem %s8, 256
  %v2543 = vld [vmem:[%s2542] sm:$0xf]
  %v2544 = vld [vmem:[%s2542 + $0x4] sm:$0xf]
  %v2545 = vld [vmem:[%s2542 + $0x8] sm:$0xf]
  %v2546 = vld [vmem:[%s2542 + $0xc] sm:$0xf]
  %v2547 = vld [vmem:[%s2542 + $0x10] sm:$0xf]
  %v2548 = vld [vmem:[%s2542 + $0x14] sm:$0xf]
  %v2549 = vld [vmem:[%s2542 + $0x18] sm:$0xf]
  %v2550 = vld [vmem:[%s2542 + $0x1c] sm:$0xf]
  %v2551 = vld [vmem:[%s2542 + $0x20] sm:$0xf]
  %v2552 = vld [vmem:[%s2542 + $0x24] sm:$0xf]
  %v2553 = vld [vmem:[%s2542 + $0x28] sm:$0xf]
  %v2554 = vld [vmem:[%s2542 + $0x2c] sm:$0xf]
  %v2555 = vld [vmem:[%s2542 + $0x30] sm:$0xf]
  %v2556 = vld [vmem:[%s2542 + $0x34] sm:$0xf]
  %v2557 = vld [vmem:[%s2542 + $0x38] sm:$0xf]
  %v2558 = vld [vmem:[%s2542 + $0x3c] sm:$0xf]
  %v2559 = vld [vmem:[%s2542 + $0x40] sm:$0xf]
  %v2560 = vld [vmem:[%s2542 + $0x44] sm:$0xf]
  %v2561 = vld [vmem:[%s2542 + $0x48] sm:$0xf]
  %v2562 = vld [vmem:[%s2542 + $0x4c] sm:$0xf]
  %v2563 = vld [vmem:[%s2542 + $0x50] sm:$0xf]
  %v2564 = vld [vmem:[%s2542 + $0x54] sm:$0xf]
  %v2565 = vld [vmem:[%s2542 + $0x58] sm:$0xf]
  %v2566 = vld [vmem:[%s2542 + $0x5c] sm:$0xf]
  %v2567 = vld [vmem:[%s2542 + $0x60] sm:$0xf]
  %v2568 = vld [vmem:[%s2542 + $0x64] sm:$0xf]
  %v2569 = vld [vmem:[%s2542 + $0x68] sm:$0xf]
  %v2570 = vld [vmem:[%s2542 + $0x6c] sm:$0xf]
  %v2571 = vld [vmem:[%s2542 + $0x70] sm:$0xf]
  %v2572 = vld [vmem:[%s2542 + $0x74] sm:$0xf]
  %v2573 = vld [vmem:[%s2542 + $0x78] sm:$0xf]
  %v2574 = vld [vmem:[%s2542 + $0x7c] sm:$0xf]
  %v2607 = vunpack.c.l.b16 %v2543
  %v2608 = vunpack.c.l.b16 %v2544
  %v2609 = vunpack.c.l.b16 %v2545
  %v2610 = vunpack.c.l.b16 %v2546
  %v2611 = vunpack.c.l.b16 %v2547
  %v2612 = vunpack.c.l.b16 %v2548
  %v2613 = vunpack.c.l.b16 %v2549
  %v2614 = vunpack.c.l.b16 %v2550
  %v2615 = vunpack.c.l.b16 %v2551
  %v2616 = vunpack.c.l.b16 %v2552
  %v2617 = vunpack.c.l.b16 %v2553
  %v2618 = vunpack.c.l.b16 %v2554
  %v2619 = vunpack.c.l.b16 %v2555
  %v2620 = vunpack.c.l.b16 %v2556
  %v2621 = vunpack.c.l.b16 %v2557
  %v2622 = vunpack.c.l.b16 %v2558
  %v2623 = vunpack.c.l.b16 %v2559
  %v2624 = vunpack.c.l.b16 %v2560
  %v2625 = vunpack.c.l.b16 %v2561
  %v2626 = vunpack.c.l.b16 %v2562
  %v2627 = vunpack.c.l.b16 %v2563
  %v2628 = vunpack.c.l.b16 %v2564
  %v2629 = vunpack.c.l.b16 %v2565
  %v2630 = vunpack.c.l.b16 %v2566
  %v2631 = vunpack.c.l.b16 %v2567
  %v2632 = vunpack.c.l.b16 %v2568
  %v2633 = vunpack.c.l.b16 %v2569
  %v2634 = vunpack.c.l.b16 %v2570
  %v2635 = vunpack.c.l.b16 %v2571
  %v2636 = vunpack.c.l.b16 %v2572
  %v2637 = vunpack.c.l.b16 %v2573
  %v2638 = vunpack.c.l.b16 %v2574
  %v2639 = vpack.c.b16 %v2608, %v2607
  %v2640 = vpack.c.b16 %v2610, %v2609
  %v2641 = vpack.c.b16 %v2612, %v2611
  %v2642 = vpack.c.b16 %v2614, %v2613
  %v2643 = vpack.c.b16 %v2616, %v2615
  %v2644 = vpack.c.b16 %v2618, %v2617
  %v2645 = vpack.c.b16 %v2620, %v2619
  %v2646 = vpack.c.b16 %v2622, %v2621
  %v2647 = vpack.c.b16 %v2624, %v2623
  %v2648 = vpack.c.b16 %v2626, %v2625
  %v2649 = vpack.c.b16 %v2628, %v2627
  %v2650 = vpack.c.b16 %v2630, %v2629
  %v2651 = vpack.c.b16 %v2632, %v2631
  %v2652 = vpack.c.b16 %v2634, %v2633
  %v2653 = vpack.c.b16 %v2636, %v2635
  %v2654 = vpack.c.b16 %v2638, %v2637
  %2671 = vmatprep.subr.bf16.mxu0 0
  %2672 = vmatpush1.bf16.msra.mxu0 %v2639
  %2673 = vmatprep.subr.bf16.mxu0 0
  %2674 = vmatpush1.bf16.msra.mxu0 %v2640
  %2675 = vmatprep.subr.bf16.mxu0 0
  %2676 = vmatpush1.bf16.msra.mxu0 %v2641
  %2677 = vmatprep.subr.bf16.mxu0 0
  %2678 = vmatpush1.bf16.msra.mxu0 %v2642
  %2679 = vmatprep.subr.bf16.mxu0 0
  %2680 = vmatpush1.bf16.msra.mxu0 %v2643
  %2681 = vmatprep.subr.bf16.mxu0 0
  %2682 = vmatpush1.bf16.msra.mxu0 %v2644
  %2683 = vmatprep.subr.bf16.mxu0 0
  %2684 = vmatpush1.bf16.msra.mxu0 %v2645
  %2685 = vmatprep.subr.bf16.mxu0 0
  %2686 = vmatpush1.bf16.msra.mxu0 %v2646
  %2687 = vmatprep.subr.bf16.mxu0 0
  %2688 = vmatpush1.bf16.msra.mxu0 %v2647
  %2689 = vmatprep.subr.bf16.mxu0 0
  %2690 = vmatpush1.bf16.msra.mxu0 %v2648
  %2691 = vmatprep.subr.bf16.mxu0 0
  %2692 = vmatpush1.bf16.msra.mxu0 %v2649
  %2693 = vmatprep.subr.bf16.mxu0 0
  %2694 = vmatpush1.bf16.msra.mxu0 %v2650
  %2695 = vmatprep.subr.bf16.mxu0 0
  %2696 = vmatpush1.bf16.msra.mxu0 %v2651
  %2697 = vmatprep.subr.bf16.mxu0 0
  %2698 = vmatpush1.bf16.msra.mxu0 %v2652
  %2699 = vmatprep.subr.bf16.mxu0 0
  %2700 = vmatpush1.bf16.msra.mxu0 %v2653
  %2701 = vmatprep.subr.bf16.mxu0 0
  %2702 = vmatpush1.bf16.msra.mxu0 %v2654
  %2703 = vmatprep.mubr.bf16.mxu0 %v2541
  %2704 = vmatmul.mubr.bf16.gmra.mrb[0].mxu0 %v2540
  %v2705 = vpop.f32.mrb[0].mxu0
  %v2706 = vadd.f32 0.0, %v2705
  %v2707 = vpop.f32.mrb[0].mxu0
  %v2708 = vpop.f32.mrb[0].mxu0
  %v2709 = vpop.f32.mrb[0].mxu0
  %2710 = vdwg.mxu0
  %v2711 = vadd.f32 %v2535, %v2706
  %v2712 = vpack.c.bf16 %v2189, %v2189
  %v2713 = vpack.c.bf16 %v2190, %v2190
  %s2714 = scalar_lea.vmem %s8, 384
  %v2715 = vld [vmem:[%s2714] sm:$0xf]
  %v2716 = vld [vmem:[%s2714 + $0x4] sm:$0xf]
  %v2717 = vld [vmem:[%s2714 + $0x8] sm:$0xf]
  %v2718 = vld [vmem:[%s2714 + $0xc] sm:$0xf]
  %v2719 = vld [vmem:[%s2714 + $0x10] sm:$0xf]
  %v2720 = vld [vmem:[%s2714 + $0x14] sm:$0xf]
  %v2721 = vld [vmem:[%s2714 + $0x18] sm:$0xf]
  %v2722 = vld [vmem:[%s2714 + $0x1c] sm:$0xf]
  %v2723 = vld [vmem:[%s2714 + $0x20] sm:$0xf]
  %v2724 = vld [vmem:[%s2714 + $0x24] sm:$0xf]
  %v2725 = vld [vmem:[%s2714 + $0x28] sm:$0xf]
  %v2726 = vld [vmem:[%s2714 + $0x2c] sm:$0xf]
  %v2727 = vld [vmem:[%s2714 + $0x30] sm:$0xf]
  %v2728 = vld [vmem:[%s2714 + $0x34] sm:$0xf]
  %v2729 = vld [vmem:[%s2714 + $0x38] sm:$0xf]
  %v2730 = vld [vmem:[%s2714 + $0x3c] sm:$0xf]
  %v2731 = vld [vmem:[%s2714 + $0x40] sm:$0xf]
  %v2732 = vld [vmem:[%s2714 + $0x44] sm:$0xf]
  %v2733 = vld [vmem:[%s2714 + $0x48] sm:$0xf]
  %v2734 = vld [vmem:[%s2714 + $0x4c] sm:$0xf]
  %v2735 = vld [vmem:[%s2714 + $0x50] sm:$0xf]
  %v2736 = vld [vmem:[%s2714 + $0x54] sm:$0xf]
  %v2737 = vld [vmem:[%s2714 + $0x58] sm:$0xf]
  %v2738 = vld [vmem:[%s2714 + $0x5c] sm:$0xf]
  %v2739 = vld [vmem:[%s2714 + $0x60] sm:$0xf]
  %v2740 = vld [vmem:[%s2714 + $0x64] sm:$0xf]
  %v2741 = vld [vmem:[%s2714 + $0x68] sm:$0xf]
  %v2742 = vld [vmem:[%s2714 + $0x6c] sm:$0xf]
  %v2743 = vld [vmem:[%s2714 + $0x70] sm:$0xf]
  %v2744 = vld [vmem:[%s2714 + $0x74] sm:$0xf]
  %v2745 = vld [vmem:[%s2714 + $0x78] sm:$0xf]
  %v2746 = vld [vmem:[%s2714 + $0x7c] sm:$0xf]
  %v2779 = vunpack.c.l.b16 %v2715
  %v2780 = vunpack.c.l.b16 %v2716
  %v2781 = vunpack.c.l.b16 %v2717
  %v2782 = vunpack.c.l.b16 %v2718
  %v2783 = vunpack.c.l.b16 %v2719
  %v2784 = vunpack.c.l.b16 %v2720
  %v2785 = vunpack.c.l.b16 %v2721
  %v2786 = vunpack.c.l.b16 %v2722
  %v2787 = vunpack.c.l.b16 %v2723
  %v2788 = vunpack.c.l.b16 %v2724
  %v2789 = vunpack.c.l.b16 %v2725
  %v2790 = vunpack.c.l.b16 %v2726
  %v2791 = vunpack.c.l.b16 %v2727
  %v2792 = vunpack.c.l.b16 %v2728
  %v2793 = vunpack.c.l.b16 %v2729
  %v2794 = vunpack.c.l.b16 %v2730
  %v2795 = vunpack.c.l.b16 %v2731
  %v2796 = vunpack.c.l.b16 %v2732
  %v2797 = vunpack.c.l.b16 %v2733
  %v2798 = vunpack.c.l.b16 %v2734
  %v2799 = vunpack.c.l.b16 %v2735
  %v2800 = vunpack.c.l.b16 %v2736
  %v2801 = vunpack.c.l.b16 %v2737
  %v2802 = vunpack.c.l.b16 %v2738
  %v2803 = vunpack.c.l.b16 %v2739
  %v2804 = vunpack.c.l.b16 %v2740
  %v2805 = vunpack.c.l.b16 %v2741
  %v2806 = vunpack.c.l.b16 %v2742
  %v2807 = vunpack.c.l.b16 %v2743
  %v2808 = vunpack.c.l.b16 %v2744
  %v2809 = vunpack.c.l.b16 %v2745
  %v2810 = vunpack.c.l.b16 %v2746
  %v2811 = vpack.c.b16 %v2780, %v2779
  %v2812 = vpack.c.b16 %v2782, %v2781
  %v2813 = vpack.c.b16 %v2784, %v2783
  %v2814 = vpack.c.b16 %v2786, %v2785
  %v2815 = vpack.c.b16 %v2788, %v2787
  %v2816 = vpack.c.b16 %v2790, %v2789
  %v2817 = vpack.c.b16 %v2792, %v2791
  %v2818 = vpack.c.b16 %v2794, %v2793
  %v2819 = vpack.c.b16 %v2796, %v2795
  %v2820 = vpack.c.b16 %v2798, %v2797
  %v2821 = vpack.c.b16 %v2800, %v2799
  %v2822 = vpack.c.b16 %v2802, %v2801
  %v2823 = vpack.c.b16 %v2804, %v2803
  %v2824 = vpack.c.b16 %v2806, %v2805
  %v2825 = vpack.c.b16 %v2808, %v2807
  %v2826 = vpack.c.b16 %v2810, %v2809
  %2843 = vmatprep.subr.bf16.mxu0 0
  %2844 = vmatpush1.bf16.msra.mxu0 %v2811
  %2845 = vmatprep.subr.bf16.mxu0 0
  %2846 = vmatpush1.bf16.msra.mxu0 %v2812
  %2847 = vmatprep.subr.bf16.mxu0 0
  %2848 = vmatpush1.bf16.msra.mxu0 %v2813
  %2849 = vmatprep.subr.bf16.mxu0 0
  %2850 = vmatpush1.bf16.msra.mxu0 %v2814
  %2851 = vmatprep.subr.bf16.mxu0 0
  %2852 = vmatpush1.bf16.msra.mxu0 %v2815
  %2853 = vmatprep.subr.bf16.mxu0 0
  %2854 = vmatpush1.bf16.msra.mxu0 %v2816
  %2855 = vmatprep.subr.bf16.mxu0 0
  %2856 = vmatpush1.bf16.msra.mxu0 %v2817
  %2857 = vmatprep.subr.bf16.mxu0 0
  %2858 = vmatpush1.bf16.msra.mxu0 %v2818
  %2859 = vmatprep.subr.bf16.mxu0 0
  %2860 = vmatpush1.bf16.msra.mxu0 %v2819
  %2861 = vmatprep.subr.bf16.mxu0 0
  %2862 = vmatpush1.bf16.msra.mxu0 %v2820
  %2863 = vmatprep.subr.bf16.mxu0 0
  %2864 = vmatpush1.bf16.msra.mxu0 %v2821
  %2865 = vmatprep.subr.bf16.mxu0 0
  %2866 = vmatpush1.bf16.msra.mxu0 %v2822
  %2867 = vmatprep.subr.bf16.mxu0 0
  %2868 = vmatpush1.bf16.msra.mxu0 %v2823
  %2869 = vmatprep.subr.bf16.mxu0 0
  %2870 = vmatpush1.bf16.msra.mxu0 %v2824
  %2871 = vmatprep.subr.bf16.mxu0 0
  %2872 = vmatpush1.bf16.msra.mxu0 %v2825
  %2873 = vmatprep.subr.bf16.mxu0 0
  %2874 = vmatpush1.bf16.msra.mxu0 %v2826
  %2875 = vmatprep.mubr.bf16.mxu0 %v2713
  %2876 = vmatmul.mubr.bf16.gmra.mrb[0].mxu0 %v2712
  %v2877 = vpop.f32.mrb[0].mxu0
  %v2878 = vadd.f32 0.0, %v2877
  %v2879 = vpop.f32.mrb[0].mxu0
  %v2880 = vpop.f32.mrb[0].mxu0
  %v2881 = vpop.f32.mrb[0].mxu0
  %2882 = vdwg.mxu0
  %v2883 = vadd.f32 %v2711, %v2878
  %v2884 = vpack.c.bf16 %v2191, %v2191
  %v2885 = vpack.c.bf16 %v2192, %v2192
  %s2886 = scalar_lea.vmem %s8, 512
  %v2887 = vld [vmem:[%s2886] sm:$0xf]
  %v2888 = vld [vmem:[%s2886 + $0x4] sm:$0xf]
  %v2889 = vld [vmem:[%s2886 + $0x8] sm:$0xf]
  %v2890 = vld [vmem:[%s2886 + $0xc] sm:$0xf]
  %v2891 = vld [vmem:[%s2886 + $0x10] sm:$0xf]
  %v2892 = vld [vmem:[%s2886 + $0x14] sm:$0xf]
  %v2893 = vld [vmem:[%s2886 + $0x18] sm:$0xf]
  %v2894 = vld [vmem:[%s2886 + $0x1c] sm:$0xf]
  %v2895 = vld [vmem:[%s2886 + $0x20] sm:$0xf]
  %v2896 = vld [vmem:[%s2886 + $0x24] sm:$0xf]
  %v2897 = vld [vmem:[%s2886 + $0x28] sm:$0xf]
  %v2898 = vld [vmem:[%s2886 + $0x2c] sm:$0xf]
  %v2899 = vld [vmem:[%s2886 + $0x30] sm:$0xf]
  %v2900 = vld [vmem:[%s2886 + $0x34] sm:$0xf]
  %v2901 = vld [vmem:[%s2886 + $0x38] sm:$0xf]
  %v2902 = vld [vmem:[%s2886 + $0x3c] sm:$0xf]
  %v2903 = vld [vmem:[%s2886 + $0x40] sm:$0xf]
  %v2904 = vld [vmem:[%s2886 + $0x44] sm:$0xf]
  %v2905 = vld [vmem:[%s2886 + $0x48] sm:$0xf]
  %v2906 = vld [vmem:[%s2886 + $0x4c] sm:$0xf]
  %v2907 = vld [vmem:[%s2886 + $0x50] sm:$0xf]
  %v2908 = vld [vmem:[%s2886 + $0x54] sm:$0xf]
  %v2909 = vld [vmem:[%s2886 + $0x58] sm:$0xf]
  %v2910 = vld [vmem:[%s2886 + $0x5c] sm:$0xf]
  %v2911 = vld [vmem:[%s2886 + $0x60] sm:$0xf]
  %v2912 = vld [vmem:[%s2886 + $0x64] sm:$0xf]
  %v2913 = vld [vmem:[%s2886 + $0x68] sm:$0xf]
  %v2914 = vld [vmem:[%s2886 + $0x6c] sm:$0xf]
  %v2915 = vld [vmem:[%s2886 + $0x70] sm:$0xf]
  %v2916 = vld [vmem:[%s2886 + $0x74] sm:$0xf]
  %v2917 = vld [vmem:[%s2886 + $0x78] sm:$0xf]
  %v2918 = vld [vmem:[%s2886 + $0x7c] sm:$0xf]
  %v2951 = vunpack.c.l.b16 %v2887
  %v2952 = vunpack.c.l.b16 %v2888
  %v2953 = vunpack.c.l.b16 %v2889
  %v2954 = vunpack.c.l.b16 %v2890
  %v2955 = vunpack.c.l.b16 %v2891
  %v2956 = vunpack.c.l.b16 %v2892
  %v2957 = vunpack.c.l.b16 %v2893
  %v2958 = vunpack.c.l.b16 %v2894
  %v2959 = vunpack.c.l.b16 %v2895
  %v2960 = vunpack.c.l.b16 %v2896
  %v2961 = vunpack.c.l.b16 %v2897
  %v2962 = vunpack.c.l.b16 %v2898
  %v2963 = vunpack.c.l.b16 %v2899
  %v2964 = vunpack.c.l.b16 %v2900
  %v2965 = vunpack.c.l.b16 %v2901
  %v2966 = vunpack.c.l.b16 %v2902
  %v2967 = vunpack.c.l.b16 %v2903
  %v2968 = vunpack.c.l.b16 %v2904
  %v2969 = vunpack.c.l.b16 %v2905
  %v2970 = vunpack.c.l.b16 %v2906
  %v2971 = vunpack.c.l.b16 %v2907
  %v2972 = vunpack.c.l.b16 %v2908
  %v2973 = vunpack.c.l.b16 %v2909
  %v2974 = vunpack.c.l.b16 %v2910
  %v2975 = vunpack.c.l.b16 %v2911
  %v2976 = vunpack.c.l.b16 %v2912
  %v2977 = vunpack.c.l.b16 %v2913
  %v2978 = vunpack.c.l.b16 %v2914
  %v2979 = vunpack.c.l.b16 %v2915
  %v2980 = vunpack.c.l.b16 %v2916
  %v2981 = vunpack.c.l.b16 %v2917
  %v2982 = vunpack.c.l.b16 %v2918
  %v2983 = vpack.c.b16 %v2952, %v2951
  %v2984 = vpack.c.b16 %v2954, %v2953
  %v2985 = vpack.c.b16 %v2956, %v2955
  %v2986 = vpack.c.b16 %v2958, %v2957
  %v2987 = vpack.c.b16 %v2960, %v2959
  %v2988 = vpack.c.b16 %v2962, %v2961
  %v2989 = vpack.c.b16 %v2964, %v2963
  %v2990 = vpack.c.b16 %v2966, %v2965
  %v2991 = vpack.c.b16 %v2968, %v2967
  %v2992 = vpack.c.b16 %v2970, %v2969
  %v2993 = vpack.c.b16 %v2972, %v2971
  %v2994 = vpack.c.b16 %v2974, %v2973
  %v2995 = vpack.c.b16 %v2976, %v2975
  %v2996 = vpack.c.b16 %v2978, %v2977
  %v2997 = vpack.c.b16 %v2980, %v2979
  %v2998 = vpack.c.b16 %v2982, %v2981
  %3015 = vmatprep.subr.bf16.mxu0 0
  %3016 = vmatpush1.bf16.msra.mxu0 %v2983
  %3017 = vmatprep.subr.bf16.mxu0 0
  %3018 = vmatpush1.bf16.msra.mxu0 %v2984
  %3019 = vmatprep.subr.bf16.mxu0 0
  %3020 = vmatpush1.bf16.msra.mxu0 %v2985
  %3021 = vmatprep.subr.bf16.mxu0 0
  %3022 = vmatpush1.bf16.msra.mxu0 %v2986
  %3023 = vmatprep.subr.bf16.mxu0 0
  %3024 = vmatpush1.bf16.msra.mxu0 %v2987
  %3025 = vmatprep.subr.bf16.mxu0 0
  %3026 = vmatpush1.bf16.msra.mxu0 %v2988
  %3027 = vmatprep.subr.bf16.mxu0 0
  %3028 = vmatpush1.bf16.msra.mxu0 %v2989
  %3029 = vmatprep.subr.bf16.mxu0 0
  %3030 = vmatpush1.bf16.msra.mxu0 %v2990
  %3031 = vmatprep.subr.bf16.mxu0 0
  %3032 = vmatpush1.bf16.msra.mxu0 %v2991
  %3033 = vmatprep.subr.bf16.mxu0 0
  %3034 = vmatpush1.bf16.msra.mxu0 %v2992
  %3035 = vmatprep.subr.bf16.mxu0 0
  %3036 = vmatpush1.bf16.msra.mxu0 %v2993
  %3037 = vmatprep.subr.bf16.mxu0 0
  %3038 = vmatpush1.bf16.msra.mxu0 %v2994
  %3039 = vmatprep.subr.bf16.mxu0 0
  %3040 = vmatpush1.bf16.msra.mxu0 %v2995
  %3041 = vmatprep.subr.bf16.mxu0 0
  %3042 = vmatpush1.bf16.msra.mxu0 %v2996
  %3043 = vmatprep.subr.bf16.mxu0 0
  %3044 = vmatpush1.bf16.msra.mxu0 %v2997
  %3045 = vmatprep.subr.bf16.mxu0 0
  %3046 = vmatpush1.bf16.msra.mxu0 %v2998
  %3047 = vmatprep.mubr.bf16.mxu0 %v2885
  %3048 = vmatmul.mubr.bf16.gmra.mrb[0].mxu0 %v2884
  %v3049 = vpop.f32.mrb[0].mxu0
  %v3050 = vadd.f32 0.0, %v3049
  %v3051 = vpop.f32.mrb[0].mxu0
  %v3052 = vpop.f32.mrb[0].mxu0
  %v3053 = vpop.f32.mrb[0].mxu0
  %3054 = vdwg.mxu0
  %v3055 = vadd.f32 %v2883, %v3050
  %v3056 = vpack.c.bf16 %v2193, %v2193
  %v3057 = vpack.c.bf16 %v2194, %v2194
  %s3058 = scalar_lea.vmem %s8, 640
  %v3059 = vld [vmem:[%s3058] sm:$0xf]
  %v3060 = vld [vmem:[%s3058 + $0x4] sm:$0xf]
  %v3061 = vld [vmem:[%s3058 + $0x8] sm:$0xf]
  %v3062 = vld [vmem:[%s3058 + $0xc] sm:$0xf]
  %v3063 = vld [vmem:[%s3058 + $0x10] sm:$0xf]
  %v3064 = vld [vmem:[%s3058 + $0x14] sm:$0xf]
  %v3065 = vld [vmem:[%s3058 + $0x18] sm:$0xf]
  %v3066 = vld [vmem:[%s3058 + $0x1c] sm:$0xf]
  %v3067 = vld [vmem:[%s3058 + $0x20] sm:$0xf]
  %v3068 = vld [vmem:[%s3058 + $0x24] sm:$0xf]
  %v3069 = vld [vmem:[%s3058 + $0x28] sm:$0xf]
  %v3070 = vld [vmem:[%s3058 + $0x2c] sm:$0xf]
  %v3071 = vld [vmem:[%s3058 + $0x30] sm:$0xf]
  %v3072 = vld [vmem:[%s3058 + $0x34] sm:$0xf]
  %v3073 = vld [vmem:[%s3058 + $0x38] sm:$0xf]
  %v3074 = vld [vmem:[%s3058 + $0x3c] sm:$0xf]
  %v3075 = vld [vmem:[%s3058 + $0x40] sm:$0xf]
  %v3076 = vld [vmem:[%s3058 + $0x44] sm:$0xf]
  %v3077 = vld [vmem:[%s3058 + $0x48] sm:$0xf]
  %v3078 = vld [vmem:[%s3058 + $0x4c] sm:$0xf]
  %v3079 = vld [vmem:[%s3058 + $0x50] sm:$0xf]
  %v3080 = vld [vmem:[%s3058 + $0x54] sm:$0xf]
  %v3081 = vld [vmem:[%s3058 + $0x58] sm:$0xf]
  %v3082 = vld [vmem:[%s3058 + $0x5c] sm:$0xf]
  %v3083 = vld [vmem:[%s3058 + $0x60] sm:$0xf]
  %v3084 = vld [vmem:[%s3058 + $0x64] sm:$0xf]
  %v3085 = vld [vmem:[%s3058 + $0x68] sm:$0xf]
  %v3086 = vld [vmem:[%s3058 + $0x6c] sm:$0xf]
  %v3087 = vld [vmem:[%s3058 + $0x70] sm:$0xf]
  %v3088 = vld [vmem:[%s3058 + $0x74] sm:$0xf]
  %v3089 = vld [vmem:[%s3058 + $0x78] sm:$0xf]
  %v3090 = vld [vmem:[%s3058 + $0x7c] sm:$0xf]
  %v3123 = vunpack.c.l.b16 %v3059
  %v3124 = vunpack.c.l.b16 %v3060
  %v3125 = vunpack.c.l.b16 %v3061
  %v3126 = vunpack.c.l.b16 %v3062
  %v3127 = vunpack.c.l.b16 %v3063
  %v3128 = vunpack.c.l.b16 %v3064
  %v3129 = vunpack.c.l.b16 %v3065
  %v3130 = vunpack.c.l.b16 %v3066
  %v3131 = vunpack.c.l.b16 %v3067
  %v3132 = vunpack.c.l.b16 %v3068
  %v3133 = vunpack.c.l.b16 %v3069
  %v3134 = vunpack.c.l.b16 %v3070
  %v3135 = vunpack.c.l.b16 %v3071
  %v3136 = vunpack.c.l.b16 %v3072
  %v3137 = vunpack.c.l.b16 %v3073
  %v3138 = vunpack.c.l.b16 %v3074
  %v3139 = vunpack.c.l.b16 %v3075
  %v3140 = vunpack.c.l.b16 %v3076
  %v3141 = vunpack.c.l.b16 %v3077
  %v3142 = vunpack.c.l.b16 %v3078
  %v3143 = vunpack.c.l.b16 %v3079
  %v3144 = vunpack.c.l.b16 %v3080
  %v3145 = vunpack.c.l.b16 %v3081
  %v3146 = vunpack.c.l.b16 %v3082
  %v3147 = vunpack.c.l.b16 %v3083
  %v3148 = vunpack.c.l.b16 %v3084
  %v3149 = vunpack.c.l.b16 %v3085
  %v3150 = vunpack.c.l.b16 %v3086
  %v3151 = vunpack.c.l.b16 %v3087
  %v3152 = vunpack.c.l.b16 %v3088
  %v3153 = vunpack.c.l.b16 %v3089
  %v3154 = vunpack.c.l.b16 %v3090
  %v3155 = vpack.c.b16 %v3124, %v3123
  %v3156 = vpack.c.b16 %v3126, %v3125
  %v3157 = vpack.c.b16 %v3128, %v3127
  %v3158 = vpack.c.b16 %v3130, %v3129
  %v3159 = vpack.c.b16 %v3132, %v3131
  %v3160 = vpack.c.b16 %v3134, %v3133
  %v3161 = vpack.c.b16 %v3136, %v3135
  %v3162 = vpack.c.b16 %v3138, %v3137
  %v3163 = vpack.c.b16 %v3140, %v3139
  %v3164 = vpack.c.b16 %v3142, %v3141
  %v3165 = vpack.c.b16 %v3144, %v3143
  %v3166 = vpack.c.b16 %v3146, %v3145
  %v3167 = vpack.c.b16 %v3148, %v3147
  %v3168 = vpack.c.b16 %v3150, %v3149
  %v3169 = vpack.c.b16 %v3152, %v3151
  %v3170 = vpack.c.b16 %v3154, %v3153
  %3187 = vmatprep.subr.bf16.mxu0 0
  %3188 = vmatpush1.bf16.msra.mxu0 %v3155
  %3189 = vmatprep.subr.bf16.mxu0 0
  %3190 = vmatpush1.bf16.msra.mxu0 %v3156
  %3191 = vmatprep.subr.bf16.mxu0 0
  %3192 = vmatpush1.bf16.msra.mxu0 %v3157
  %3193 = vmatprep.subr.bf16.mxu0 0
  %3194 = vmatpush1.bf16.msra.mxu0 %v3158
  %3195 = vmatprep.subr.bf16.mxu0 0
  %3196 = vmatpush1.bf16.msra.mxu0 %v3159
  %3197 = vmatprep.subr.bf16.mxu0 0
  %3198 = vmatpush1.bf16.msra.mxu0 %v3160
  %3199 = vmatprep.subr.bf16.mxu0 0
  %3200 = vmatpush1.bf16.msra.mxu0 %v3161
  %3201 = vmatprep.subr.bf16.mxu0 0
  %3202 = vmatpush1.bf16.msra.mxu0 %v3162
  %3203 = vmatprep.subr.bf16.mxu0 0
  %3204 = vmatpush1.bf16.msra.mxu0 %v3163
  %3205 = vmatprep.subr.bf16.mxu0 0
  %3206 = vmatpush1.bf16.msra.mxu0 %v3164
  %3207 = vmatprep.subr.bf16.mxu0 0
  %3208 = vmatpush1.bf16.msra.mxu0 %v3165
  %3209 = vmatprep.subr.bf16.mxu0 0
  %3210 = vmatpush1.bf16.msra.mxu0 %v3166
  %3211 = vmatprep.subr.bf16.mxu0 0
  %3212 = vmatpush1.bf16.msra.mxu0 %v3167
  %3213 = vmatprep.subr.bf16.mxu0 0
  %3214 = vmatpush1.bf16.msra.mxu0 %v3168
  %3215 = vmatprep.subr.bf16.mxu0 0
  %3216 = vmatpush1.bf16.msra.mxu0 %v3169
  %3217 = vmatprep.subr.bf16.mxu0 0
  %3218 = vmatpush1.bf16.msra.mxu0 %v3170
  %3219 = vmatprep.mubr.bf16.mxu0 %v3057
  %3220 = vmatmul.mubr.bf16.gmra.mrb[0].mxu0 %v3056
  %v3221 = vpop.f32.mrb[0].mxu0
  %v3222 = vadd.f32 0.0, %v3221
  %v3223 = vpop.f32.mrb[0].mxu0
  %v3224 = vpop.f32.mrb[0].mxu0
  %v3225 = vpop.f32.mrb[0].mxu0
  %3226 = vdwg.mxu0
  %v3227 = vadd.f32 %v3055, %v3222
  %v3228 = vpack.c.bf16 %v2195, %v2195
  %v3229 = vpack.c.bf16 %v2196, %v2196
  %s3230 = scalar_lea.vmem %s8, 768
  %v3231 = vld [vmem:[%s3230] sm:$0xf]
  %v3232 = vld [vmem:[%s3230 + $0x4] sm:$0xf]
  %v3233 = vld [vmem:[%s3230 + $0x8] sm:$0xf]
  %v3234 = vld [vmem:[%s3230 + $0xc] sm:$0xf]
  %v3235 = vld [vmem:[%s3230 + $0x10] sm:$0xf]
  %v3236 = vld [vmem:[%s3230 + $0x14] sm:$0xf]
  %v3237 = vld [vmem:[%s3230 + $0x18] sm:$0xf]
  %v3238 = vld [vmem:[%s3230 + $0x1c] sm:$0xf]
  %v3239 = vld [vmem:[%s3230 + $0x20] sm:$0xf]
  %v3240 = vld [vmem:[%s3230 + $0x24] sm:$0xf]
  %v3241 = vld [vmem:[%s3230 + $0x28] sm:$0xf]
  %v3242 = vld [vmem:[%s3230 + $0x2c] sm:$0xf]
  %v3243 = vld [vmem:[%s3230 + $0x30] sm:$0xf]
  %v3244 = vld [vmem:[%s3230 + $0x34] sm:$0xf]
  %v3245 = vld [vmem:[%s3230 + $0x38] sm:$0xf]
  %v3246 = vld [vmem:[%s3230 + $0x3c] sm:$0xf]
  %v3247 = vld [vmem:[%s3230 + $0x40] sm:$0xf]
  %v3248 = vld [vmem:[%s3230 + $0x44] sm:$0xf]
  %v3249 = vld [vmem:[%s3230 + $0x48] sm:$0xf]
  %v3250 = vld [vmem:[%s3230 + $0x4c] sm:$0xf]
  %v3251 = vld [vmem:[%s3230 + $0x50] sm:$0xf]
  %v3252 = vld [vmem:[%s3230 + $0x54] sm:$0xf]
  %v3253 = vld [vmem:[%s3230 + $0x58] sm:$0xf]
  %v3254 = vld [vmem:[%s3230 + $0x5c] sm:$0xf]
  %v3255 = vld [vmem:[%s3230 + $0x60] sm:$0xf]
  %v3256 = vld [vmem:[%s3230 + $0x64] sm:$0xf]
  %v3257 = vld [vmem:[%s3230 + $0x68] sm:$0xf]
  %v3258 = vld [vmem:[%s3230 + $0x6c] sm:$0xf]
  %v3259 = vld [vmem:[%s3230 + $0x70] sm:$0xf]
  %v3260 = vld [vmem:[%s3230 + $0x74] sm:$0xf]
  %v3261 = vld [vmem:[%s3230 + $0x78] sm:$0xf]
  %v3262 = vld [vmem:[%s3230 + $0x7c] sm:$0xf]
  %v3295 = vunpack.c.l.b16 %v3231
  %v3296 = vunpack.c.l.b16 %v3232
  %v3297 = vunpack.c.l.b16 %v3233
  %v3298 = vunpack.c.l.b16 %v3234
  %v3299 = vunpack.c.l.b16 %v3235
  %v3300 = vunpack.c.l.b16 %v3236
  %v3301 = vunpack.c.l.b16 %v3237
  %v3302 = vunpack.c.l.b16 %v3238
  %v3303 = vunpack.c.l.b16 %v3239
  %v3304 = vunpack.c.l.b16 %v3240
  %v3305 = vunpack.c.l.b16 %v3241
  %v3306 = vunpack.c.l.b16 %v3242
  %v3307 = vunpack.c.l.b16 %v3243
  %v3308 = vunpack.c.l.b16 %v3244
  %v3309 = vunpack.c.l.b16 %v3245
  %v3310 = vunpack.c.l.b16 %v3246
  %v3311 = vunpack.c.l.b16 %v3247
  %v3312 = vunpack.c.l.b16 %v3248
  %v3313 = vunpack.c.l.b16 %v3249
  %v3314 = vunpack.c.l.b16 %v3250
  %v3315 = vunpack.c.l.b16 %v3251
  %v3316 = vunpack.c.l.b16 %v3252
  %v3317 = vunpack.c.l.b16 %v3253
  %v3318 = vunpack.c.l.b16 %v3254
  %v3319 = vunpack.c.l.b16 %v3255
  %v3320 = vunpack.c.l.b16 %v3256
  %v3321 = vunpack.c.l.b16 %v3257
  %v3322 = vunpack.c.l.b16 %v3258
  %v3323 = vunpack.c.l.b16 %v3259
  %v3324 = vunpack.c.l.b16 %v3260
  %v3325 = vunpack.c.l.b16 %v3261
  %v3326 = vunpack.c.l.b16 %v3262
  %v3327 = vpack.c.b16 %v3296, %v3295
  %v3328 = vpack.c.b16 %v3298, %v3297
  %v3329 = vpack.c.b16 %v3300, %v3299
  %v3330 = vpack.c.b16 %v3302, %v3301
  %v3331 = vpack.c.b16 %v3304, %v3303
  %v3332 = vpack.c.b16 %v3306, %v3305
  %v3333 = vpack.c.b16 %v3308, %v3307
  %v3334 = vpack.c.b16 %v3310, %v3309
  %v3335 = vpack.c.b16 %v3312, %v3311
  %v3336 = vpack.c.b16 %v3314, %v3313
  %v3337 = vpack.c.b16 %v3316, %v3315
  %v3338 = vpack.c.b16 %v3318, %v3317
  %v3339 = vpack.c.b16 %v3320, %v3319
  %v3340 = vpack.c.b16 %v3322, %v3321
  %v3341 = vpack.c.b16 %v3324, %v3323
  %v3342 = vpack.c.b16 %v3326, %v3325
  %3359 = vmatprep.subr.bf16.mxu0 0
  %3360 = vmatpush1.bf16.msra.mxu0 %v3327
  %3361 = vmatprep.subr.bf16.mxu0 0
  %3362 = vmatpush1.bf16.msra.mxu0 %v3328
  %3363 = vmatprep.subr.bf16.mxu0 0
  %3364 = vmatpush1.bf16.msra.mxu0 %v3329
  %3365 = vmatprep.subr.bf16.mxu0 0
  %3366 = vmatpush1.bf16.msra.mxu0 %v3330
  %3367 = vmatprep.subr.bf16.mxu0 0
  %3368 = vmatpush1.bf16.msra.mxu0 %v3331
  %3369 = vmatprep.subr.bf16.mxu0 0
  %3370 = vmatpush1.bf16.msra.mxu0 %v3332
  %3371 = vmatprep.subr.bf16.mxu0 0
  %3372 = vmatpush1.bf16.msra.mxu0 %v3333
  %3373 = vmatprep.subr.bf16.mxu0 0
  %3374 = vmatpush1.bf16.msra.mxu0 %v3334
  %3375 = vmatprep.subr.bf16.mxu0 0
  %3376 = vmatpush1.bf16.msra.mxu0 %v3335
  %3377 = vmatprep.subr.bf16.mxu0 0
  %3378 = vmatpush1.bf16.msra.mxu0 %v3336
  %3379 = vmatprep.subr.bf16.mxu0 0
  %3380 = vmatpush1.bf16.msra.mxu0 %v3337
  %3381 = vmatprep.subr.bf16.mxu0 0
  %3382 = vmatpush1.bf16.msra.mxu0 %v3338
  %3383 = vmatprep.subr.bf16.mxu0 0
  %3384 = vmatpush1.bf16.msra.mxu0 %v3339
  %3385 = vmatprep.subr.bf16.mxu0 0
  %3386 = vmatpush1.bf16.msra.mxu0 %v3340
  %3387 = vmatprep.subr.bf16.mxu0 0
  %3388 = vmatpush1.bf16.msra.mxu0 %v3341
  %3389 = vmatprep.subr.bf16.mxu0 0
  %3390 = vmatpush1.bf16.msra.mxu0 %v3342
  %3391 = vmatprep.mubr.bf16.mxu0 %v3229
  %3392 = vmatmul.mubr.bf16.gmra.mrb[0].mxu0 %v3228
  %v3393 = vpop.f32.mrb[0].mxu0
  %v3394 = vadd.f32 0.0, %v3393
  %v3395 = vpop.f32.mrb[0].mxu0
  %v3396 = vpop.f32.mrb[0].mxu0
  %v3397 = vpop.f32.mrb[0].mxu0
  %3398 = vdwg.mxu0
  %v3399 = vadd.f32 %v3227, %v3394
  %v3400 = vpack.c.bf16 %v2197, %v2197
  %v3401 = vpack.c.bf16 %v2198, %v2198
  %s3402 = scalar_lea.vmem %s8, 896
  %v3403 = vld [vmem:[%s3402] sm:$0xf]
  %v3404 = vld [vmem:[%s3402 + $0x4] sm:$0xf]
  %v3405 = vld [vmem:[%s3402 + $0x8] sm:$0xf]
  %v3406 = vld [vmem:[%s3402 + $0xc] sm:$0xf]
  %v3407 = vld [vmem:[%s3402 + $0x10] sm:$0xf]
  %v3408 = vld [vmem:[%s3402 + $0x14] sm:$0xf]
  %v3409 = vld [vmem:[%s3402 + $0x18] sm:$0xf]
  %v3410 = vld [vmem:[%s3402 + $0x1c] sm:$0xf]
  %v3411 = vld [vmem:[%s3402 + $0x20] sm:$0xf]
  %v3412 = vld [vmem:[%s3402 + $0x24] sm:$0xf]
  %v3413 = vld [vmem:[%s3402 + $0x28] sm:$0xf]
  %v3414 = vld [vmem:[%s3402 + $0x2c] sm:$0xf]
  %v3415 = vld [vmem:[%s3402 + $0x30] sm:$0xf]
  %v3416 = vld [vmem:[%s3402 + $0x34] sm:$0xf]
  %v3417 = vld [vmem:[%s3402 + $0x38] sm:$0xf]
  %v3418 = vld [vmem:[%s3402 + $0x3c] sm:$0xf]
  %v3419 = vld [vmem:[%s3402 + $0x40] sm:$0xf]
  %v3420 = vld [vmem:[%s3402 + $0x44] sm:$0xf]
  %v3421 = vld [vmem:[%s3402 + $0x48] sm:$0xf]
  %v3422 = vld [vmem:[%s3402 + $0x4c] sm:$0xf]
  %v3423 = vld [vmem:[%s3402 + $0x50] sm:$0xf]
  %v3424 = vld [vmem:[%s3402 + $0x54] sm:$0xf]
  %v3425 = vld [vmem:[%s3402 + $0x58] sm:$0xf]
  %v3426 = vld [vmem:[%s3402 + $0x5c] sm:$0xf]
  %v3427 = vld [vmem:[%s3402 + $0x60] sm:$0xf]
  %v3428 = vld [vmem:[%s3402 + $0x64] sm:$0xf]
  %v3429 = vld [vmem:[%s3402 + $0x68] sm:$0xf]
  %v3430 = vld [vmem:[%s3402 + $0x6c] sm:$0xf]
  %v3431 = vld [vmem:[%s3402 + $0x70] sm:$0xf]
  %v3432 = vld [vmem:[%s3402 + $0x74] sm:$0xf]
  %v3433 = vld [vmem:[%s3402 + $0x78] sm:$0xf]
  %v3434 = vld [vmem:[%s3402 + $0x7c] sm:$0xf]
  %v3467 = vunpack.c.l.b16 %v3403
  %v3468 = vunpack.c.l.b16 %v3404
  %v3469 = vunpack.c.l.b16 %v3405
  %v3470 = vunpack.c.l.b16 %v3406
  %v3471 = vunpack.c.l.b16 %v3407
  %v3472 = vunpack.c.l.b16 %v3408
  %v3473 = vunpack.c.l.b16 %v3409
  %v3474 = vunpack.c.l.b16 %v3410
  %v3475 = vunpack.c.l.b16 %v3411
  %v3476 = vunpack.c.l.b16 %v3412
  %v3477 = vunpack.c.l.b16 %v3413
  %v3478 = vunpack.c.l.b16 %v3414
  %v3479 = vunpack.c.l.b16 %v3415
  %v3480 = vunpack.c.l.b16 %v3416
  %v3481 = vunpack.c.l.b16 %v3417
  %v3482 = vunpack.c.l.b16 %v3418
  %v3483 = vunpack.c.l.b16 %v3419
  %v3484 = vunpack.c.l.b16 %v3420
  %v3485 = vunpack.c.l.b16 %v3421
  %v3486 = vunpack.c.l.b16 %v3422
  %v3487 = vunpack.c.l.b16 %v3423
  %v3488 = vunpack.c.l.b16 %v3424
  %v3489 = vunpack.c.l.b16 %v3425
  %v3490 = vunpack.c.l.b16 %v3426
  %v3491 = vunpack.c.l.b16 %v3427
  %v3492 = vunpack.c.l.b16 %v3428
  %v3493 = vunpack.c.l.b16 %v3429
  %v3494 = vunpack.c.l.b16 %v3430
  %v3495 = vunpack.c.l.b16 %v3431
  %v3496 = vunpack.c.l.b16 %v3432
  %v3497 = vunpack.c.l.b16 %v3433
  %v3498 = vunpack.c.l.b16 %v3434
  %v3499 = vpack.c.b16 %v3468, %v3467
  %v3500 = vpack.c.b16 %v3470, %v3469
  %v3501 = vpack.c.b16 %v3472, %v3471
  %v3502 = vpack.c.b16 %v3474, %v3473
  %v3503 = vpack.c.b16 %v3476, %v3475
  %v3504 = vpack.c.b16 %v3478, %v3477
  %v3505 = vpack.c.b16 %v3480, %v3479
  %v3506 = vpack.c.b16 %v3482, %v3481
  %v3507 = vpack.c.b16 %v3484, %v3483
  %v3508 = vpack.c.b16 %v3486, %v3485
  %v3509 = vpack.c.b16 %v3488, %v3487
  %v3510 = vpack.c.b16 %v3490, %v3489
  %v3511 = vpack.c.b16 %v3492, %v3491
  %v3512 = vpack.c.b16 %v3494, %v3493
  %v3513 = vpack.c.b16 %v3496, %v3495
  %v3514 = vpack.c.b16 %v3498, %v3497
  %3531 = vmatprep.subr.bf16.mxu0 0
  %3532 = vmatpush1.bf16.msra.mxu0 %v3499
  %3533 = vmatprep.subr.bf16.mxu0 0
  %3534 = vmatpush1.bf16.msra.mxu0 %v3500
  %3535 = vmatprep.subr.bf16.mxu0 0
  %3536 = vmatpush1.bf16.msra.mxu0 %v3501
  %3537 = vmatprep.subr.bf16.mxu0 0
  %3538 = vmatpush1.bf16.msra.mxu0 %v3502
  %3539 = vmatprep.subr.bf16.mxu0 0
  %3540 = vmatpush1.bf16.msra.mxu0 %v3503
  %3541 = vmatprep.subr.bf16.mxu0 0
  %3542 = vmatpush1.bf16.msra.mxu0 %v3504
  %3543 = vmatprep.subr.bf16.mxu0 0
  %3544 = vmatpush1.bf16.msra.mxu0 %v3505
  %3545 = vmatprep.subr.bf16.mxu0 0
  %3546 = vmatpush1.bf16.msra.mxu0 %v3506
  %3547 = vmatprep.subr.bf16.mxu0 0
  %3548 = vmatpush1.bf16.msra.mxu0 %v3507
  %3549 = vmatprep.subr.bf16.mxu0 0
  %3550 = vmatpush1.bf16.msra.mxu0 %v3508
  %3551 = vmatprep.subr.bf16.mxu0 0
  %3552 = vmatpush1.bf16.msra.mxu0 %v3509
  %3553 = vmatprep.subr.bf16.mxu0 0
  %3554 = vmatpush1.bf16.msra.mxu0 %v3510
  %3555 = vmatprep.subr.bf16.mxu0 0
  %3556 = vmatpush1.bf16.msra.mxu0 %v3511
  %3557 = vmatprep.subr.bf16.mxu0 0
  %3558 = vmatpush1.bf16.msra.mxu0 %v3512
  %3559 = vmatprep.subr.bf16.mxu0 0
  %3560 = vmatpush1.bf16.msra.mxu0 %v3513
  %3561 = vmatprep.subr.bf16.mxu0 0
  %3562 = vmatpush1.bf16.msra.mxu0 %v3514
  %3563 = vmatprep.mubr.bf16.mxu0 %v3401
  %3564 = vmatmul.mubr.bf16.gmra.mrb[0].mxu0 %v3400
  %v3565 = vpop.f32.mrb[0].mxu0
  %v3566 = vadd.f32 0.0, %v3565
  %v3567 = vpop.f32.mrb[0].mxu0
  %v3568 = vpop.f32.mrb[0].mxu0
  %v3569 = vpop.f32.mrb[0].mxu0
  %3570 = vdwg.mxu0
  %v3571 = vadd.f32 %v3399, %v3566
  %v3572 = vld [vmem:[%s9] sm:$0x1]
  %v3574 = vlaneseq
  %v3575 = vshrl.u32 %v3574, 7
  %v3576 = vsub.s32 0, %v3575
  %v3577 = vrot.slane %v3572, %v3576
  %v3579 = vadd.f32 %v3571, %v3577
  %3580 = vst.msk [vmem:[%s10] sm:$0xff] %vm268, %v3579
  // Predicated region
  $region42: #{forward.1} parent=0 // pred_check
    _
  $region43: #{forward.1} parent=0 // pred_check_branch
    %3582 = sbr.rel (0) target = $region45
  $region44: #{forward.1} parent=0 // pred_region
    _
  $region45: #{forward.1} parent=0 // pred_fallthru
    _
  // Predicated region
  $region46: #{forward.1} parent=0 // pred_check
    _
  $region47: #{forward.1} parent=0 // pred_check_branch
    %3584 = sbr.rel (0) target = $region49
  $region48: #{forward.1} parent=0 // pred_region
    _
  $region49: #{forward.1} parent=0 // pred_fallthru
    _

</llo_original>
